<compile_context>
chip_gen: v5e
topology: v5e:2x2
jax: 0.10.0
libtpu: 0.0.40
codegen_flags: <defaults>
</compile_context>

<pallas_src>
import functools

import jax
import jax.numpy as jnp
from jax import lax
from jax.experimental import pallas as pl
from jax.experimental.pallas import tpu as pltpu


NEG_INF = float(jnp.finfo(jnp.float32).min)


# ----------------------------- tiling helpers -----------------------------
def _sublane_align(dtype):
    # bf16 packs two rows per sublane; prefer multiples of 16 on second-minor dims.
    return 16 if jnp.dtype(dtype).itemsize == 2 else 8


def _pick_tile(dim, target, align):
    """Largest tile <= target that divides `dim` and is a multiple of `align`;
    falls back to the full dimension (full-extent blocks are always legal)."""
    if dim <= target:
        return dim
    t = (target // align) * align
    while t >= align:
        if dim % t == 0:
            return t
        t -= align
    return dim


# ----------------------------- tiled projection matmul (bf16 -> f32 acc) -----------------------------
def _matmul_kernel(x_ref, w_ref, o_ref, acc_ref):
    @pl.when(pl.program_id(2) == 0)
    def _():
        acc_ref[...] = jnp.zeros(acc_ref.shape, acc_ref.dtype)

    acc_ref[...] += jnp.dot(x_ref[...], w_ref[...],
                            preferred_element_type=jnp.float32)

    @pl.when(pl.program_id(2) == pl.num_programs(2) - 1)
    def _():
        o_ref[...] = acc_ref[...].astype(o_ref.dtype)


def linear_no_bias(x2d, w_t, *, tm=512, tn=512, tk=512):
    """y = x2d @ w_t  (nn.Linear, bias=False, weight pre-transposed to (in, out))."""
    M, K = x2d.shape
    K2, N = w_t.shape
    assert K == K2
    tm = _pick_tile(M, tm, _sublane_align(x2d.dtype))
    tn = _pick_tile(N, tn, 128)
    tk = _pick_tile(K, tk, 128)
    grid = (M // tm, N // tn, K // tk)
    itemsize = x2d.dtype.itemsize
    return pl.pallas_call(
        _matmul_kernel,
        out_shape=jax.ShapeDtypeStruct((M, N), x2d.dtype),
        grid=grid,
        in_specs=[
            pl.BlockSpec((tm, tk), lambda i, j, k: (i, k)),
            pl.BlockSpec((tk, tn), lambda i, j, k: (k, j)),
        ],
        out_specs=pl.BlockSpec((tm, tn), lambda i, j, k: (i, j)),
        scratch_shapes=[pltpu.VMEM((tm, tn), jnp.float32)],
        compiler_params=pltpu.CompilerParams(
            dimension_semantics=("parallel", "parallel", "arbitrary")),
        cost_estimate=pl.CostEstimate(
            flops=2 * M * N * K, transcendentals=0,
            bytes_accessed=(M * K * (N // tn) + K * N + M * N) * itemsize),
    )(x2d, w_t)


# ----------------------------- RoPE pre-pass (applied ONCE to Q and K columns) -----------------------------
def _rope_kernel(x_ref, cos_ref, sin_ref, o_ref, *, nh, scaling):
    # x_ref: (tm, hd) = one head-column of Q (grid j < nh) or K (nh <= j < 2*nh).
    # rotate_half(x)*sin == roll(x, hd//2)*sin_signed (sin_signed has its first half negated).
    x = x_ref[...].astype(jnp.float32)
    roped = x * cos_ref[...] + pltpu.roll(x, x.shape[-1] // 2, axis=1) * sin_ref[...]
    # fold 1/sqrt(head_dim) into Q here so the attention kernel does no scaling at all
    scale = jnp.where(pl.program_id(1) < nh, jnp.float32(scaling), jnp.float32(1.0))
    o_ref[...] = (roped * scale).astype(o_ref.dtype)


def apply_rope_qk(qkv, cos, sin_signed, *, nh, hd, scaling, block_rows=512):
    """qkv: (M, 3*nh*hd) fused projection output; cos/sin_signed: (M, hd) f32 tables.
    Returns (M, 2*nh*hd) with Q (scaled) and K roped; V stays in `qkv`."""
    M = qkv.shape[0]
    tm = _pick_tile(M, block_rows, _sublane_align(qkv.dtype))
    grid = (M // tm, 2 * nh)
    return pl.pallas_call(
        functools.partial(_rope_kernel, nh=nh, scaling=scaling),
        out_shape=jax.ShapeDtypeStruct((M, 2 * nh * hd), qkv.dtype),
        grid=grid,
        in_specs=[
            pl.BlockSpec((tm, hd), lambda i, j: (i, j)),   # head column j of q|k
            pl.BlockSpec((tm, hd), lambda i, j: (i, 0)),   # cos
            pl.BlockSpec((tm, hd), lambda i, j: (i, 0)),   # signed sin
        ],
        out_specs=pl.BlockSpec((tm, hd), lambda i, j: (i, j)),
        compiler_params=pltpu.CompilerParams(
            dimension_semantics=("parallel", "parallel")),
    )(qkv, cos, sin_signed)


# ----------------------------- flash attention (online softmax, no in-loop rope) -----------------------------
def _online_softmax_update(s, v, m_scr, l_scr, acc_scr, *, use_bf16_exp):
    m_prev = m_scr[...]
    m_new = jnp.maximum(m_prev, jnp.max(s, axis=-1, keepdims=True))
    alpha = jnp.exp(m_prev - m_new)
    if use_bf16_exp:
        # bf16 exp runs on the EUP's bf16 path (v6e/v7x); p feeds the MXU in bf16 anyway.
        p = jnp.exp((s - m_new).astype(jnp.bfloat16))
    else:
        p = jnp.exp(s - m_new).astype(v.dtype)
    l_scr[...] = alpha * l_scr[...] + jnp.sum(p, axis=-1, keepdims=True,
                                              dtype=jnp.float32)
    acc_scr[...] = alpha * acc_scr[...] + jnp.dot(p, v,
                                                  preferred_element_type=jnp.float32)
    m_scr[...] = m_new


def _flash_causal_kernel(qi_tab_ref, ki_tab_ref, last_tab_ref,
                         q_ref, k_ref, v_ref, o_ref,
                         m_scr, l_scr, acc_scr, *, bq, bk, use_bf16_exp):
    t = pl.program_id(2)
    ki = ki_tab_ref[t]

    @pl.when(ki == 0)
    def _():
        m_scr[...] = jnp.full(m_scr.shape, -jnp.inf, jnp.float32)
        l_scr[...] = jnp.zeros(l_scr.shape, jnp.float32)
        acc_scr[...] = jnp.zeros(acc_scr.shape, jnp.float32)

    s = lax.dot_general(q_ref[...], k_ref[...], (((1,), (1,)), ((), ())),
                        preferred_element_type=jnp.float32)
    # causal mask synthesised from iota (only matters on diagonal-straddling tiles;
    # strictly-below-diagonal tiles are unaffected by the select)
    row0 = qi_tab_ref[t] * bq
    col0 = ki * bk
    rows = row0 + lax.broadcasted_iota(jnp.int32, (bq, bk), 0)
    cols = col0 + lax.broadcasted_iota(jnp.int32, (bq, bk), 1)
    s = jnp.where(rows >= cols, s, NEG_INF)

    _online_softmax_update(s, v_ref[...], m_scr, l_scr, acc_scr,
                           use_bf16_exp=use_bf16_exp)

    @pl.when(last_tab_ref[t] == 1)
    def _():
        o_ref[...] = (acc_scr[...] *
                      pl.reciprocal(l_scr[...], approx=True)).astype(o_ref.dtype)


def _flash_masked_kernel(q_ref, k_ref, v_ref, mask_ref, o_ref,
                         m_scr, l_scr, acc_scr, *, use_bf16_exp):
    ki = pl.program_id(3)

    @pl.when(ki == 0)
    def _():
        m_scr[...] = jnp.full(m_scr.shape, -jnp.inf, jnp.float32)
        l_scr[...] = jnp.zeros(l_scr.shape, jnp.float32)
        acc_scr[...] = jnp.zeros(acc_scr.shape, jnp.float32)

    s = lax.dot_general(q_ref[...], k_ref[...], (((1,), (1,)), ((), ())),
                        preferred_element_type=jnp.float32)
    s = s + mask_ref[...].astype(jnp.float32)

    _online_softmax_update(s, v_ref[...], m_scr, l_scr, acc_scr,
                           use_bf16_exp=use_bf16_exp)

    @pl.when(ki == pl.num_programs(3) - 1)
    def _():
        o_ref[...] = (acc_scr[...] *
                      pl.reciprocal(l_scr[...], approx=True)).astype(o_ref.dtype)


def _causal_tile_tables(n_q, n_k, bq, bk):
    """Enumerate only the live (lower-triangular) (qi, ki) tile pairs, ki ascending per qi."""
    qi_l, ki_l, last_l = [], [], []
    for qi in range(n_q):
        kmax = min(n_k - 1, ((qi + 1) * bq - 1) // bk)
        for ki in range(kmax + 1):
            qi_l.append(qi)
            ki_l.append(ki)
            last_l.append(1 if ki == kmax else 0)
    return (jnp.asarray(qi_l, jnp.int32), jnp.asarray(ki_l, jnp.int32),
            jnp.asarray(last_l, jnp.int32))


def flash_attention_causal(qk_roped, qkv, *, B, S, nh, hd, block_q, block_k,
                           use_bf16_exp):
    H = nh * hd
    assert hd % 128 == 0, "head_dim must be a multiple of 128 for lane-dense head slicing"
    # TODO(synk): head_dim not a multiple of 128 would need a padded per-head layout;
    # every Idefics config uses head_dim = 128.
    bq = _pick_tile(S, block_q, _sublane_align(qk_roped.dtype))
    bk = _pick_tile(S, block_k, 128)
    n_q, n_k = S // bq, S // bk
    qi_tab, ki_tab, last_tab = _causal_tile_tables(n_q, n_k, bq, bk)
    T = int(qi_tab.shape[0])

    q_map = lambda b, h, t, qt, kt, lt: (b * n_q + qt[t], h)
    k_map = lambda b, h, t, qt, kt, lt: (b * n_k + kt[t], nh + h)
    v_map = lambda b, h, t, qt, kt, lt: (b * n_k + kt[t], 2 * nh + h)

    itemsize = qk_roped.dtype.itemsize
    bytes_accessed = (B * nh * (n_q * bq + 2 * T * bk) * hd + B * S * H) * itemsize
    return pl.pallas_call(
        functools.partial(_flash_causal_kernel, bq=bq, bk=bk,
                          use_bf16_exp=use_bf16_exp),
        out_shape=jax.ShapeDtypeStruct((B * S, H), qk_roped.dtype),
        grid_spec=pltpu.PrefetchScalarGridSpec(
            num_scalar_prefetch=3,
            grid=(B, nh, T),
            in_specs=[pl.BlockSpec((bq, hd), q_map),
                      pl.BlockSpec((bk, hd), k_map),
                      pl.BlockSpec((bk, hd), v_map)],
            out_specs=pl.BlockSpec((bq, hd), q_map),
            scratch_shapes=[pltpu.VMEM((bq, 1), jnp.float32),    # running max
                            pltpu.VMEM((bq, 1), jnp.float32),    # running denominator
                            pltpu.VMEM((bq, hd), jnp.float32)]), # running numerator
        compiler_params=pltpu.CompilerParams(
            dimension_semantics=("parallel", "parallel", "arbitrary")),
        cost_estimate=pl.CostEstimate(
            flops=4 * B * nh * T * bq * bk * hd,
            transcendentals=B * nh * T * bq * bk,
            bytes_accessed=bytes_accessed),
    )(qi_tab, ki_tab, last_tab, qk_roped, qk_roped, qkv)


def flash_attention_masked(qk_roped, qkv, attention_mask, *, B, S, nh, hd,
                           block_q, block_k, use_bf16_exp):
    H = nh * hd
    assert hd % 128 == 0
    bq = _pick_tile(S, block_q, _sublane_align(qk_roped.dtype))
    bk = _pick_tile(S, block_k, 128)
    n_q, n_k = S // bq, S // bk
    grid = (B, nh, n_q, n_k)

    # compress the additive mask to bf16 (clamped into bf16's finite range) -> half the DMA.
    # TODO(synk): padding-only masks could be replaced by scalar-prefetched per-row lengths
    # (iota compare in-kernel) and a per-tile skip predicate, removing the mask stream entirely.
    bf_min = float(jnp.finfo(jnp.bfloat16).min)
    bf_max = float(jnp.finfo(jnp.bfloat16).max)
    mask = jnp.clip(attention_mask.reshape(B, S, S), bf_min, bf_max).astype(jnp.bfloat16)

    q_map = lambda b, h, qi, ki: (b * n_q + qi, h)
    k_map = lambda b, h, qi, ki: (b * n_k + ki, nh + h)
    v_map = lambda b, h, qi, ki: (b * n_k + ki, 2 * nh + h)
    m_map = lambda b, h, qi, ki: (b, qi, ki)

    itemsize = qk_roped.dtype.itemsize
    bytes_accessed = ((B * nh * (n_q * bq + 2 * n_q * n_k * bk) * hd + B * S * H) * itemsize
                      + B * nh * S * S * 2)
    return pl.pallas_call(
        functools.partial(_flash_masked_kernel, use_bf16_exp=use_bf16_exp),
        out_shape=jax.ShapeDtypeStruct((B * S, H), qk_roped.dtype),
        grid=grid,
        in_specs=[pl.BlockSpec((bq, hd), q_map),
                  pl.BlockSpec((bk, hd), k_map),
                  pl.BlockSpec((bk, hd), v_map),
                  pl.BlockSpec((None, bq, bk), m_map)],
        out_specs=pl.BlockSpec((bq, hd), q_map),
        scratch_shapes=[pltpu.VMEM((bq, 1), jnp.float32),
                        pltpu.VMEM((bq, 1), jnp.float32),
                        pltpu.VMEM((bq, hd), jnp.float32)],
        compiler_params=pltpu.CompilerParams(
            dimension_semantics=("parallel", "parallel", "parallel", "arbitrary")),
        cost_estimate=pl.CostEstimate(
            flops=4 * B * nh * S * S * hd,
            transcendentals=B * nh * S * S,
            bytes_accessed=bytes_accessed),
    )(qk_roped, qk_roped, qkv, mask)


# ----------------------------- module wrapper -----------------------------
class IdeficsAttentionPallas:
    def __init__(self, hidden_size, num_heads, max_position_embeddings=2048,
                 base=10000.0, key=None, dtype=jnp.bfloat16,
                 block_q=512, block_k=256, proj_tiles=(512, 512, 512),
                 use_bf16_exp=True):
        assert hidden_size % num_heads == 0
        self.hidden_size = hidden_size
        self.num_heads = num_heads
        self.head_dim = hidden_size // num_heads
        self.scaling = self.head_dim ** (-0.5)
        self.dtype = dtype
        self.block_q = block_q          # 512 on v6e/v7x, 128-256 on v5e
        self.block_k = block_k
        self.proj_tiles = proj_tiles    # (tm, tn, tk) targets for the projection matmuls
        # bf16 exp only makes sense when the MXU inputs are bf16 (set False on v5e)
        self.use_bf16_exp = bool(use_bf16_exp) and jnp.dtype(dtype) == jnp.dtype(jnp.bfloat16)

        key = jax.random.PRNGKey(0) if key is None else key
        kq, kk, kv, ko = jax.random.split(key, 4)
        init = lambda k, s: (0.02 * jax.random.normal(k, s, dtype=jnp.float32)).astype(dtype)
        # nn.Linear weights are (out_features, in_features)
        self.wq = init(kq, (hidden_size, hidden_size))
        self.wk = init(kk, (hidden_size, hidden_size))
        self.wv = init(kv, (hidden_size, hidden_size))
        self.wo = init(ko, (hidden_size, hidden_size))
        # fused, pre-transposed weights for the kernels (y = x @ W^T)
        self.w_qkv_t = jnp.concatenate([self.wq.T, self.wk.T, self.wv.T], axis=1)  # (H, 3H)
        self.wo_t = self.wo.T                                                       # (H, H)

        # IdeficsEmbedding (rotary) cos/sin cache, kept in f32 (tiny, gathered on host side)
        hd = self.head_dim
        inv_freq = 1.0 / (base ** (jnp.arange(0, hd, 2, dtype=jnp.float32) / hd))
        t = jnp.arange(max_position_embeddings, dtype=jnp.float32)
        freqs = jnp.einsum("i,j->ij", t, inv_freq)
        emb = jnp.concatenate([freqs, freqs], axis=-1)
        self.cos_cached = jnp.cos(emb)
        self.sin_cached = jnp.sin(emb)
        # sign vector folding rotate_half's negation into sin:
        #   rotate_half(x) * sin == roll(x, hd//2) * (sign * sin)
        self.rot_sign = jnp.concatenate([-jnp.ones((hd // 2,), jnp.float32),
                                         jnp.ones((hd // 2,), jnp.float32)])

    def __call__(self, hidden_states, attention_mask, position_ids):
        B, S, H = hidden_states.shape
        nh, hd = self.num_heads, self.head_dim
        tm, tn, tk = self.proj_tiles

        # fused Q/K/V projection (one tiled bf16 Pallas matmul, activations read once)
        x2d = hidden_states.astype(self.dtype).reshape(B * S, H)
        qkv = linear_no_bias(x2d, self.w_qkv_t, tm=tm, tn=tn, tk=tk)       # (B*S, 3H)

        # rotary tables gathered by position_ids (glue), sin sign-folded for roll-based rotary
        cos = self.cos_cached[position_ids].reshape(B * S, hd)
        sin = (self.sin_cached[position_ids] * self.rot_sign).reshape(B * S, hd)

        # RoPE applied ONCE to the Q and K head columns (scaling folded into Q)
        qk_roped = apply_rope_qk(qkv, cos, sin, nh=nh, hd=hd, scaling=self.scaling)

        # flash attention: heads sliced through the BlockSpec index_map (no HBM transposes)
        if attention_mask is None:
            attn2d = flash_attention_causal(
                qk_roped, qkv, B=B, S=S, nh=nh, hd=hd,
                block_q=self.block_q, block_k=self.block_k,
                use_bf16_exp=self.use_bf16_exp)
        else:
            attn2d = flash_attention_masked(
                qk_roped, qkv, attention_mask, B=B, S=S, nh=nh, hd=hd,
                block_q=self.block_q, block_k=self.block_k,
                use_bf16_exp=self.use_bf16_exp)

        # output projection; attn2d is already (B*S, nh*hd) in head-major column layout
        out = linear_no_bias(attn2d, self.wo_t, tm=tm, tn=tn, tk=tk).reshape(B, S, H)
        # TODO(synk): attn_weights are not materialized (flash kv-tiled softmax drops the
        # (B, nh, S, S) probability tensor); None is returned in their place.
        # TODO(synk): cross-attention, KV-cache and qk_layer_norms paths are not implemented.
        return out, None


# ----------------------------- pure-JAX reference for verification -----------------------------
def reference_forward(mod, hidden_states, attention_mask, position_ids):
    f32 = jnp.float32
    B, S, H = hidden_states.shape
    nh, hd = mod.num_heads, mod.head_dim
    x = hidden_states.astype(mod.dtype).astype(f32)
    wq, wk, wv, wo = (w.astype(f32) for w in (mod.wq, mod.wk, mod.wv, mod.wo))
    q = (x @ wq.T).reshape(B, S, nh, hd).transpose(0, 2, 1, 3)
    k = (x @ wk.T).reshape(B, S, nh, hd).transpose(0, 2, 1, 3)
    v = (x @ wv.T).reshape(B, S, nh, hd).transpose(0, 2, 1, 3)
    cos = mod.cos_cached[position_ids][:, None]  # (B,1,S,hd)
    sin = mod.sin_cached[position_ids][:, None]

    def rotate_half(t):
        h2 = t.shape[-1] // 2
        return jnp.concatenate([-t[..., h2:], t[..., :h2]], axis=-1)

    q = q * cos + rotate_half(q) * sin
    k = k * cos + rotate_half(k) * sin
    scores = jnp.einsum("bhqd,bhkd->bhqk", q, k) * mod.scaling
    if attention_mask is None:
        neg = jnp.finfo(f32).min
        causal = jnp.where(jnp.arange(S)[:, None] >= jnp.arange(S)[None, :], 0.0, neg)
        scores = scores + causal
    else:
        scores = scores + attention_mask.astype(f32)
    probs = jax.nn.softmax(scores, axis=-1)
    out = jnp.einsum("bhqk,bhkd->bhqd", probs, v)
    out = out.transpose(0, 2, 1, 3).reshape(B, S, H)
    return out @ wo.T, probs


if __name__ == "__main__":
    # Small but representative: head_dim = 128 (the real Idefics head size), seq 256 so the
    # flash kernel runs multiple q/kv tiles (and exercises the live-tile enumeration),
    # two heads, batch 2.
    B, S, H, NH = 2, 256, 256, 2

    key = jax.random.PRNGKey(0)
    k_x, k_w = jax.random.split(key)
    hidden_states = jax.random.normal(k_x, (B, S, H), dtype=jnp.float32)
    position_ids = jnp.broadcast_to(jnp.arange(S, dtype=jnp.int32), (B, S))

    # standard additive causal mask (B, 1, S, S), as the surrounding Idefics model builds it
    neg = jnp.finfo(jnp.float32).min
    causal = jnp.where(jnp.arange(S)[:, None] >= jnp.arange(S)[None, :], 0.0, neg)
    attention_mask = jnp.broadcast_to(causal.astype(jnp.float32), (B, 1, S, S))

    module = IdeficsAttentionPallas(hidden_size=H, num_heads=NH, key=k_w,
                                    dtype=jnp.bfloat16,
                                    block_q=128, block_k=128,
                                    proj_tiles=(512, 512, 512))

    # explicit additive-mask path (mirrors the module's eager attention)
    out_masked, _ = module(hidden_states, attention_mask, position_ids)
    out_masked = jax.block_until_ready(out_masked)

    # causal path (mask=None): live-tile enumeration, no mask DMA
    out_causal, _ = module(hidden_states, None, position_ids)
    out_causal = jax.block_until_ready(out_causal)

    ref_out, _ = reference_forward(module, hidden_states, attention_mask, position_ids)

    assert out_masked.shape == (B, S, H)
    assert out_causal.shape == (B, S, H)
    err_m = float(jnp.max(jnp.abs(out_masked.astype(jnp.float32) - ref_out)))
    err_c = float(jnp.max(jnp.abs(out_causal.astype(jnp.float32) - ref_out)))
    assert jnp.allclose(out_masked.astype(jnp.float32), ref_out, atol=2.5e-2, rtol=2.5e-2), err_m
    assert jnp.allclose(out_causal.astype(jnp.float32), ref_out, atol=2.5e-2, rtol=2.5e-2), err_c

    print("KERNEL_OK")
</pallas_src>

<mosaic_0001>
module attributes {stable_mosaic.version = 11 : i64} {
  func.func @_matmul_kernel(%arg0: i32, %arg1: i32, %arg2: i32, %arg3: memref<512x256xbf16, #tpu.memory_space<vmem>>, %arg4: memref<256x384xbf16, #tpu.memory_space<vmem>>, %arg5: memref<512x384xbf16, #tpu.memory_space<vmem>>, %arg6: memref<512x384xf32, #tpu.memory_space<vmem>>) attributes {dimension_semantics = [#tpu.dimension_semantics<parallel>, #tpu.dimension_semantics<parallel>, #tpu.dimension_semantics<arbitrary>], iteration_bounds = array<i64: 1, 2, 1>, scalar_prefetch = 0 : i64, scratch_operands = 1 : i64, tpu.core_type = #tpu.core_type<tc>, window_params = [{transform_indices = @transform_0, window_bounds = array<i64: 512, 256>}, {transform_indices = @transform_1, window_bounds = array<i64: 256, 384>}, {transform_indices = @transform_2, window_bounds = array<i64: 512, 384>}]} {
    %c0_i32 = arith.constant 0 : i32
    %0 = arith.cmpi eq, %arg2, %c0_i32 : i32
    %1 = arith.extui %0 : i1 to i32
    %c0_i32_0 = arith.constant 0 : i32
    %2 = arith.cmpi ne, %1, %c0_i32_0 : i32
    scf.if %2 {
      %cst_10 = arith.constant 0.000000e+00 : f32
      %12 = vector.broadcast %cst_10 : f32 to vector<512x384xf32>
      %c0_11 = arith.constant 0 : index
      %c0_12 = arith.constant 0 : index
      %13 = vector.load %arg6[%c0_11, %c0_12] : memref<512x384xf32, #tpu.memory_space<vmem>>, vector<512x384xf32>
      tpu.vector_store %arg6[%c0_11, %c0_12], %12 {strides = array<i32>} : memref<512x384xf32, #tpu.memory_space<vmem>>, vector<512x384xf32>,
    } else {
    }
    %c0 = arith.constant 0 : index
    %c0_1 = arith.constant 0 : index
    %3 = vector.load %arg6[%c0, %c0_1] : memref<512x384xf32, #tpu.memory_space<vmem>>, vector<512x384xf32>
    %c0_2 = arith.constant 0 : index
    %c0_3 = arith.constant 0 : index
    %4 = vector.load %arg3[%c0_2, %c0_3] : memref<512x256xbf16, #tpu.memory_space<vmem>>, vector<512x256xbf16>
    %c0_4 = arith.constant 0 : index
    %c0_5 = arith.constant 0 : index
    %5 = vector.load %arg4[%c0_4, %c0_5] : memref<256x384xbf16, #tpu.memory_space<vmem>>, vector<256x384xbf16>
    %cst = arith.constant dense<0.000000e+00> : vector<512x384xf32>
    %6 = tpu.matmul %4, %5, %cst {dimension_numbers = #tpu.dot_dimension_numbers<[1], [0], [0], [1], [0, 0, 1, 1], [], []>} : vector<512x256xbf16>, vector<256x384xbf16>, vector<512x384xf32> -> vector<512x384xf32>
    %7 = arith.addf %3, %6 : vector<512x384xf32>
    %c0_6 = arith.constant 0 : index
    %c0_7 = arith.constant 0 : index
    %8 = vector.load %arg6[%c0_6, %c0_7] : memref<512x384xf32, #tpu.memory_space<vmem>>, vector<512x384xf32>
    tpu.vector_store %arg6[%c0_6, %c0_7], %7 {strides = array<i32>} : memref<512x384xf32, #tpu.memory_space<vmem>>, vector<512x384xf32>,
    %c0_i32_8 = arith.constant 0 : i32
    %9 = arith.cmpi eq, %arg2, %c0_i32_8 : i32
    %10 = arith.extui %9 : i1 to i32
    %c0_i32_9 = arith.constant 0 : i32
    %11 = arith.cmpi ne, %10, %c0_i32_9 : i32
    scf.if %11 {
      %c0_10 = arith.constant 0 : index
      %c0_11 = arith.constant 0 : index
      %12 = vector.load %arg6[%c0_10, %c0_11] : memref<512x384xf32, #tpu.memory_space<vmem>>, vector<512x384xf32>
      %13 = arith.truncf %12 : vector<512x384xf32> to vector<512x384xbf16>
      %c0_12 = arith.constant 0 : index
      %c0_13 = arith.constant 0 : index
      %14 = vector.load %arg5[%c0_12, %c0_13] : memref<512x384xbf16, #tpu.memory_space<vmem>>, vector<512x384xbf16>
      tpu.vector_store %arg5[%c0_12, %c0_13], %13 {strides = array<i32>} : memref<512x384xbf16, #tpu.memory_space<vmem>>, vector<512x384xbf16>,
    } else {
    }
    return
  }
  func.func @transform_0(%arg0: i32, %arg1: i32, %arg2: i32) -> (i32, i32) {
    %c0_i32 = arith.constant 0 : i32
    return %arg0, %arg2 : i32, i32
  }
  func.func @transform_1(%arg0: i32, %arg1: i32, %arg2: i32) -> (i32, i32) {
    %c0_i32 = arith.constant 0 : i32
    return %arg2, %arg1 : i32, i32
  }
  func.func @transform_2(%arg0: i32, %arg1: i32, %arg2: i32) -> (i32, i32) {
    %c0_i32 = arith.constant 0 : i32
    return %arg0, %arg1 : i32, i32
  }
}

</mosaic_0001>

<llo_original>
// kernel: tpu_custom_call.1
$region0: #{tpu_custom_call.1}
  #allocation0 [shape = 'u32[]', space=smem, size = 0x4, offset = 0x4, fixed_abs, tag = 'smem constant byte address 0x4 - core index']
  #allocation1 [shape = 'u32[72,128]{1,0:T(1,128)}', space=vmem, size = 0x9000, scoped, tag = 'internal scratch']
  #allocation2 [shape = 'f32[512,384]{1,0:T(8,128)}', space=vmem, size = 0xc0000, scoped, tag = 'scratch operand']
  %s0 = inlined_call_operand.hbm [shape: bf16[512,256], index: 0, kind: input, shape index: {}]
  %s1 = inlined_call_operand.hbm [shape: bf16[256,768], index: 1, kind: input, shape index: {}]
  %s2 = inlined_call_operand.hbm [shape: bf16[512,768], index: 2, kind: output, shape index: {}]
  %s3 = sld [smem:[#allocation0]]
  $region57: #{tpu_custom_call.1} parent=0
    _
  %s5 = ssub.s32 1, %s3
  %s6 = scalar_select 0, %s5, %s3
  $region1: #{tpu_custom_call.1} parent=0
    #allocation3 [shape = 'u8[262144]{0}', space=vmem, size = 0x40000, scoped, tag = 'input window, operand 0, single buffered']
    #allocation4 [shape = 's32[2]{0}', space=sflag, size = 0x8, scoped, tag = 'scoped memory for tpu_custom_call.1']
    #allocation5 [shape = 's32[2]{0}', space=sflag, size = 0x8, scoped, tag = 'scoped memory for tpu_custom_call.1']
    #allocation6 [shape = 'u8[393216]{0}', space=vmem, size = 0x60000, scoped, tag = 'input window, operand 1']
    #allocation7 [shape = 's32[2]{0}', space=sflag, size = 0x8, scoped, tag = 'scoped memory for tpu_custom_call.1']
    #allocation8 [shape = 'u8[786432]{0}', space=vmem, size = 0xc0000, scoped, tag = 'output window, operand 0']
    %7 = vsyncpa [#allocation4], 0
    %8 = vsyncpa [#allocation7], 0
    %s9 = scalar_lea.sflag [#allocation7], 1
    %10 = vsyncpa %s9, 0
    %11 = vsyncpa [#allocation5], 0
    %s12 = scalar_lea.sflag [#allocation5], 1
    %13 = vsyncpa %s12, 0
    loop: start=0, step=1, limit=4
    $region2: #{tpu_custom_call.1} parent=1 // loop_pre_header
      _
    $region3: #{tpu_custom_call.1} parent=1 // loop_header
      %s15 = sphi 0, %s19
      %p16 = scmp.ge.s32.totalorder %s15, 4
      %s22 = sphi 0, %s41
      %s23 = sphi 0, %s37
      %s24 = sphi 0, %s33
      %s25 = sphi 0, %s22
      %s26 = sphi 0, %s23
      %s27 = sphi 0, %s24
      %s28 = sphi 0, %s25
      %s29 = sphi 0, %s26
      %s30 = sphi 0, %s27
      %s46 = sphi 0, %s48
      %s49 = sphi 0, %s46
      %s50 = sphi 0, %s49
      %s66 = sphi 0, %s50
      %s74 = sphi 0, %s76
      %s77 = sphi 0, %s74
      %s78 = sphi 0, %s77
      %s94 = sphi 0, %s78
      %s102 = sphi 0, %s104
      %s105 = sphi 0, %s102
      %s106 = sphi 0, %s105
      %s122 = sphi 0, %s106
    $region4: #{tpu_custom_call.1} parent=1 // loop_header_branch
      %18 = sbr.rel (%p16) target = $region8
    $region5: #{tpu_custom_call.1} parent=1 // loop_body
      %s20 = ssub.s32 %s15, 1
      %s21 = ssub.s32 %s15, 2
      %s31 = sadd.s32 1, %s24
      %p32 = scmp.ge.s32.totalorder %s31, 1
      %s33 = scalar_select %p32, 0, %s31
      %s34 = sadd.s32 1, %s23
      %s35 = scalar_select %p32, %s34, %s23
      %p36 = scmp.ge.s32.totalorder %s35, 2
      %s37 = scalar_select %p36, 0, %s35
      %s38 = sadd.s32 1, %s22
      %s39 = scalar_select %p36, %s38, %s22
      %p40 = scmp.ge.s32.totalorder %s39, 1
      %s41 = scalar_select %p40, 0, %s39
      %s42 = ssub.s32 %s22, %s41
      %s43 = ssub.s32 %s24, %s33
      %s44 = sor.u32 %s42, %s43
      %p45 = scmp.eq.s32.totalorder %s44, 0
      %s47 = sadd.s32 %s46, 1
      %s48 = scalar_select %p45, %s46, %s47
      %p51 = pneg %p45
      %p52 = scmp.eq.s32.totalorder %s15, 1
      %p53 = por %p51, %p52
      %p54 = scmp.ne.s32.totalorder %s46, %s49
      %p55 = scmp.eq.s32.totalorder %s15, 0
      %p56 = por %p54, %p55
      %p57 = scmp.ne.s32.totalorder %s46, %s49
      %p58 = scmp.eq.s32.totalorder %s20, 1
      %p59 = por %p57, %p58
      %p60 = scmp.ne.s32.totalorder %s49, %s50
      %p61 = scmp.eq.s32.totalorder %s20, 0
      %p62 = por %p60, %p61
      %p63 = scmp.ne.s32.totalorder %s49, %s50
      %p64 = scmp.eq.s32.totalorder %s21, 1
      %p65 = por %p63, %p64
      %p67 = scmp.ne.s32.totalorder %s50, %s66
      %p68 = scmp.eq.s32.totalorder %s21, 0
      %p69 = por %p67, %p68
      %s70 = ssub.s32 %s24, %s33
      %s71 = ssub.s32 %s23, %s37
      %s72 = sor.u32 %s70, %s71
      %p73 = scmp.eq.s32.totalorder %s72, 0
      %s75 = sadd.s32 %s74, 1
      %s76 = scalar_select %p73, %s74, %s75
      %p79 = pneg %p73
      %p80 = scmp.eq.s32.totalorder %s15, 1
      %p81 = por %p79, %p80
      %p82 = scmp.ne.s32.totalorder %s74, %s77
      %p83 = scmp.eq.s32.totalorder %s15, 0
      %p84 = por %p82, %p83
      %p85 = scmp.ne.s32.totalorder %s74, %s77
      %p86 = scmp.eq.s32.totalorder %s20, 1
      %p87 = por %p85, %p86
      %p88 = scmp.ne.s32.totalorder %s77, %s78
      %p89 = scmp.eq.s32.totalorder %s20, 0
      %p90 = por %p88, %p89
      %p91 = scmp.ne.s32.totalorder %s77, %s78
      %p92 = scmp.eq.s32.totalorder %s21, 1
      %p93 = por %p91, %p92
      %p95 = scmp.ne.s32.totalorder %s78, %s94
      %p96 = scmp.eq.s32.totalorder %s21, 0
      %p97 = por %p95, %p96
      %s98 = ssub.s32 %s22, %s41
      %s99 = ssub.s32 %s23, %s37
      %s100 = sor.u32 %s98, %s99
      %p101 = scmp.eq.s32.totalorder %s100, 0
      %s103 = sadd.s32 %s102, 1
      %s104 = scalar_select %p101, %s102, %s103
      %p107 = pneg %p101
      %p108 = scmp.eq.s32.totalorder %s15, 1
      %p109 = por %p107, %p108
      %p110 = scmp.ne.s32.totalorder %s102, %s105
      %p111 = scmp.eq.s32.totalorder %s15, 0
      %p112 = por %p110, %p111
      %p113 = scmp.ne.s32.totalorder %s102, %s105
      %p114 = scmp.eq.s32.totalorder %s20, 1
      %p115 = por %p113, %p114
      %p116 = scmp.ne.s32.totalorder %s105, %s106
      %p117 = scmp.eq.s32.totalorder %s20, 0
      %p118 = por %p116, %p117
      %p119 = scmp.ne.s32.totalorder %s105, %s106
      %p120 = scmp.eq.s32.totalorder %s21, 1
      %p121 = por %p119, %p120
      %p123 = scmp.ne.s32.totalorder %s106, %s122
      %p124 = scmp.eq.s32.totalorder %s21, 0
      %p125 = por %p123, %p124
      %p126 = scmp.le.s32.totalorder 1, %s15
      %p127 = scmp.lt.s32.totalorder %s15, 3
      %p128 = pnand %p126, %p127
      %p129 = pneg %p128
      // Predicated region
      $region9: #{tpu_custom_call.1} parent=5 // pred_check
        _
      $region10: #{tpu_custom_call.1} parent=5 // pred_check_branch
        %131 = sbr.rel (%p128) target = $region12
      $region11: #{tpu_custom_call.1} parent=5 // pred_region
        %s132 = ssub.s32 %s15, 1
        // Predicated region
        $region13: #{tpu_custom_call.1} parent=11 // pred_check
          %p133 = pneg %p62
        $region14: #{tpu_custom_call.1} parent=11 // pred_check_branch
          %135 = sbr.rel (%p133) target = $region16
        $region15: #{tpu_custom_call.1} parent=11 // pred_region
          %s136 = smul.u32 64, %s25
          %s137 = smul.u32 2, %s27
          %139 = vsyncadd [#allocation4], 0
          %s140 = smul.addr %s136, 2
          %s141 = sadd.s32 %s137, %s140
          %s142 = smul.addr %s141, 4
          %s143 = scalar_lea.hbm %s0, %s142
          %s144 = sshll.u32 %s143, 4
          %s145 = int_to_ptr.hbm [resolvable:$true] %s144
          %s146 = sshll.u32 [#allocation3], 4
          %s147 = int_to_ptr.vmem [resolvable:$true] %s146
          %152 = dma.hbm_to_vmem [thread:$0]  %s145, 8192, %s147, [#allocation4], 128, 128, 8
        $region16: #{tpu_custom_call.1} parent=11 // pred_fallthru
          _
      $region12: #{tpu_custom_call.1} parent=5 // pred_fallthru
        _
      %p153 = scmp.lt.s32.totalorder %s15, 2
      // Predicated region
      $region17: #{tpu_custom_call.1} parent=5 // pred_check
        %p154 = pneg %p153
      $region18: #{tpu_custom_call.1} parent=5 // pred_check_branch
        %156 = sbr.rel (%p154) target = $region20
      $region19: #{tpu_custom_call.1} parent=5 // pred_region
        // Predicated region
        $region21: #{tpu_custom_call.1} parent=19 // pred_check
          %p157 = pneg %p84
        $region22: #{tpu_custom_call.1} parent=19 // pred_check_branch
          %159 = sbr.rel (%p157) target = $region24
        $region23: #{tpu_custom_call.1} parent=19 // pred_region
          %s160 = sand.u32 %s74, 1
          %s161 = scalar_lea.sflag [#allocation7], %s160
          %s162 = sand.u32 %s74, 1
          %s163 = smul.addr %s162, 384
          %s164 = scalar_lea.vmem [#allocation6], %s163
          %s165 = smul.u32 32, %s24
          %s166 = smul.u32 3, %s23
          %168 = vsyncadd %s161, 0
          %s169 = smul.addr %s165, 6
          %s170 = sadd.s32 %s166, %s169
          %s171 = smul.addr %s170, 4
          %s172 = scalar_lea.hbm %s1, %s171
          %s173 = sshll.u32 %s172, 4
          %s174 = int_to_ptr.hbm [resolvable:$true] %s173
          %s175 = sshll.u32 %s164, 4
          %s176 = int_to_ptr.vmem [resolvable:$true] %s175
          %181 = dma.hbm_to_vmem [thread:$0]  %s174, 6144, %s176, %s161, 384, 192, 12
        $region24: #{tpu_custom_call.1} parent=19 // pred_fallthru
          _
      $region20: #{tpu_custom_call.1} parent=5 // pred_fallthru
        _
      %p182 = scmp.le.s32.totalorder 1, %s15
      %p183 = scmp.lt.s32.totalorder %s15, 3
      %p184 = pnand %p182, %p183
      %p185 = pneg %p184
      // Predicated region
      $region25: #{tpu_custom_call.1} parent=5 // pred_check
        _
      $region26: #{tpu_custom_call.1} parent=5 // pred_check_branch
        %187 = sbr.rel (%p184) target = $region28
      $region27: #{tpu_custom_call.1} parent=5 // pred_region
        %s188 = ssub.s32 %s15, 1
        // Predicated region
        $region29: #{tpu_custom_call.1} parent=27 // pred_check
          %p189 = pneg %p62
        $region30: #{tpu_custom_call.1} parent=27 // pred_check_branch
          %191 = sbr.rel (%p189) target = $region32
        $region31: #{tpu_custom_call.1} parent=27 // pred_region
          %193 = dma.done [#allocation4], 8192
        $region32: #{tpu_custom_call.1} parent=27 // pred_fallthru
          _
        %s194 = sand.u32 %s77, 1
        %s195 = scalar_lea.sflag [#allocation7], %s194
        %s196 = sand.u32 %s77, 1
        %s197 = smul.addr %s196, 384
        %s198 = scalar_lea.vmem [#allocation6], %s197
        // Predicated region
        $region33: #{tpu_custom_call.1} parent=27 // pred_check
          %p199 = pneg %p90
        $region34: #{tpu_custom_call.1} parent=27 // pred_check_branch
          %201 = sbr.rel (%p199) target = $region36
        $region35: #{tpu_custom_call.1} parent=27 // pred_region
          %203 = dma.done %s195, 6144
        $region36: #{tpu_custom_call.1} parent=27 // pred_fallthru
          _
        %p204 = pneg %p62
        %p205 = pneg %p59
        %s206 = sand.u32 %s77, 1
        %s207 = scalar_lea.sflag [#allocation7], %s206
        %s208 = sand.u32 %s77, 1
        %s209 = smul.addr %s208, 384
        %s210 = scalar_lea.vmem [#allocation6], %s209
        %p211 = pneg %p90
        %p212 = pneg %p87
        %p213 = pneg %p118
        %p214 = pneg %p115
        %s215 = sand.u32 %s105, 1
        %s216 = scalar_lea.sflag [#allocation5], %s215
        %s217 = sand.u32 %s105, 1
        %s218 = smul.addr %s217, 768
        %s219 = scalar_lea.vmem [#allocation8], %s218
        %s220 = smul.u32 64, %s25
        %s221 = smul.u32 2, %s27
        %s222 = smul.u32 32, %s27
        %s223 = smul.u32 3, %s26
        %s224 = smul.u32 64, %s25
        %s225 = smul.u32 3, %s26
        %p226 = scmp.eq.s32.totalorder %s27, 0
        // Predicated region
        $region37: #{tpu_custom_call.1} parent=27 // pred_check
          %p227 = pneg %p226
        $region38: #{tpu_custom_call.1} parent=27 // pred_check_branch
          %229 = sbr.rel (%p227) target = $region40
        $region39: #{tpu_custom_call.1} parent=27 // pred_region
          %230 = vst [vmem:[#allocation2] sm:$0xff] 0.0
          %231 = vst [vmem:[#allocation2 + $0x8] sm:$0xff] 0.0
          %232 = vst [vmem:[#allocation2 + $0x10] sm:$0xff] 0.0
          %233 = vst [vmem:[#allocation2 + $0x18] sm:$0xff] 0.0
          %234 = vst [vmem:[#allocation2 + $0x20] sm:$0xff] 0.0
          %235 = vst [vmem:[#allocation2 + $0x28] sm:$0xff] 0.0
          %236 = vst [vmem:[#allocation2 + $0x30] sm:$0xff] 0.0
          %237 = vst [vmem:[#allocation2 + $0x38] sm:$0xff] 0.0
          %238 = vst [vmem:[#allocation2 + $0x40] sm:$0xff] 0.0
          %239 = vst [vmem:[#allocation2 + $0x48] sm:$0xff] 0.0
          %240 = vst [vmem:[#allocation2 + $0x50] sm:$0xff] 0.0
          %241 = vst [vmem:[#allocation2 + $0x58] sm:$0xff] 0.0
          %242 = vst [vmem:[#allocation2 + $0x60] sm:$0xff] 0.0
          %243 = vst [vmem:[#allocation2 + $0x68] sm:$0xff] 0.0
          %244 = vst [vmem:[#allocation2 + $0x70] sm:$0xff] 0.0
          %245 = vst [vmem:[#allocation2 + $0x78] sm:$0xff] 0.0
          %246 = vst [vmem:[#allocation2 + $0x80] sm:$0xff] 0.0
          %247 = vst [vmem:[#allocation2 + $0x88] sm:$0xff] 0.0
          %248 = vst [vmem:[#allocation2 + $0x90] sm:$0xff] 0.0
          %249 = vst [vmem:[#allocation2 + $0x98] sm:$0xff] 0.0
          %250 = vst [vmem:[#allocation2 + $0xa0] sm:$0xff] 0.0
          %251 = vst [vmem:[#allocation2 + $0xa8] sm:$0xff] 0.0
          %252 = vst [vmem:[#allocation2 + $0xb0] sm:$0xff] 0.0
          %253 = vst [vmem:[#allocation2 + $0xb8] sm:$0xff] 0.0
          %254 = vst [vmem:[#allocation2 + $0xc0] sm:$0xff] 0.0
          %255 = vst [vmem:[#allocation2 + $0xc8] sm:$0xff] 0.0
          %256 = vst [vmem:[#allocation2 + $0xd0] sm:$0xff] 0.0
          %257 = vst [vmem:[#allocation2 + $0xd8] sm:$0xff] 0.0
          %258 = vst [vmem:[#allocation2 + $0xe0] sm:$0xff] 0.0
          %259 = vst [vmem:[#allocation2 + $0xe8] sm:$0xff] 0.0
          %260 = vst [vmem:[#allocation2 + $0xf0] sm:$0xff] 0.0
          %261 = vst [vmem:[#allocation2 + $0xf8] sm:$0xff] 0.0
          %262 = vst [vmem:[#allocation2 + $0x100] sm:$0xff] 0.0
          %263 = vst [vmem:[#allocation2 + $0x108] sm:$0xff] 0.0
          %264 = vst [vmem:[#allocation2 + $0x110] sm:$0xff] 0.0
          %265 = vst [vmem:[#allocation2 + $0x118] sm:$0xff] 0.0
          %266 = vst [vmem:[#allocation2 + $0x120] sm:$0xff] 0.0
          %267 = vst [vmem:[#allocation2 + $0x128] sm:$0xff] 0.0
          %268 = vst [vmem:[#allocation2 + $0x130] sm:$0xff] 0.0
          %269 = vst [vmem:[#allocation2 + $0x138] sm:$0xff] 0.0
          %270 = vst [vmem:[#allocation2 + $0x140] sm:$0xff] 0.0
          %271 = vst [vmem:[#allocation2 + $0x148] sm:$0xff] 0.0
          %272 = vst [vmem:[#allocation2 + $0x150] sm:$0xff] 0.0
          %273 = vst [vmem:[#allocation2 + $0x158] sm:$0xff] 0.0
          %274 = vst [vmem:[#allocation2 + $0x160] sm:$0xff] 0.0
          %275 = vst [vmem:[#allocation2 + $0x168] sm:$0xff] 0.0
          %276 = vst [vmem:[#allocation2 + $0x170] sm:$0xff] 0.0
          %277 = vst [vmem:[#allocation2 + $0x178] sm:$0xff] 0.0
          %278 = vst [vmem:[#allocation2 + $0x180] sm:$0xff] 0.0
          %279 = vst [vmem:[#allocation2 + $0x188] sm:$0xff] 0.0
          %280 = vst [vmem:[#allocation2 + $0x190] sm:$0xff] 0.0
          %281 = vst [vmem:[#allocation2 + $0x198] sm:$0xff] 0.0
          %282 = vst [vmem:[#allocation2 + $0x1a0] sm:$0xff] 0.0
          %283 = vst [vmem:[#allocation2 + $0x1a8] sm:$0xff] 0.0
          %284 = vst [vmem:[#allocation2 + $0x1b0] sm:$0xff] 0.0
          %285 = vst [vmem:[#allocation2 + $0x1b8] sm:$0xff] 0.0
          %286 = vst [vmem:[#allocation2 + $0x1c0] sm:$0xff] 0.0
          %287 = vst [vmem:[#allocation2 + $0x1c8] sm:$0xff] 0.0
          %288 = vst [vmem:[#allocation2 + $0x1d0] sm:$0xff] 0.0
          %289 = vst [vmem:[#allocation2 + $0x1d8] sm:$0xff] 0.0
          %290 = vst [vmem:[#allocation2 + $0x1e0] sm:$0xff] 0.0
          %291 = vst [vmem:[#allocation2 + $0x1e8] sm:$0xff] 0.0
          %292 = vst [vmem:[#allocation2 + $0x1f0] sm:$0xff] 0.0
          %293 = vst [vmem:[#allocation2 + $0x1f8] sm:$0xff] 0.0
          %294 = vst [vmem:[#allocation2 + $0x200] sm:$0xff] 0.0
          %295 = vst [vmem:[#allocation2 + $0x208] sm:$0xff] 0.0
          %296 = vst [vmem:[#allocation2 + $0x210] sm:$0xff] 0.0
          %297 = vst [vmem:[#allocation2 + $0x218] sm:$0xff] 0.0
          %298 = vst [vmem:[#allocation2 + $0x220] sm:$0xff] 0.0
          %299 = vst [vmem:[#allocation2 + $0x228] sm:$0xff] 0.0
          %300 = vst [vmem:[#allocation2 + $0x230] sm:$0xff] 0.0
          %301 = vst [vmem:[#allocation2 + $0x238] sm:$0xff] 0.0
          %302 = vst [vmem:[#allocation2 + $0x240] sm:$0xff] 0.0
          %303 = vst [vmem:[#allocation2 + $0x248] sm:$0xff] 0.0
          %304 = vst [vmem:[#allocation2 + $0x250] sm:$0xff] 0.0
          %305 = vst [vmem:[#allocation2 + $0x258] sm:$0xff] 0.0
          %306 = vst [vmem:[#allocation2 + $0x260] sm:$0xff] 0.0
          %307 = vst [vmem:[#allocation2 + $0x268] sm:$0xff] 0.0
          %308 = vst [vmem:[#allocation2 + $0x270] sm:$0xff] 0.0
          %309 = vst [vmem:[#allocation2 + $0x278] sm:$0xff] 0.0
          %310 = vst [vmem:[#allocation2 + $0x280] sm:$0xff] 0.0
          %311 = vst [vmem:[#allocation2 + $0x288] sm:$0xff] 0.0
          %312 = vst [vmem:[#allocation2 + $0x290] sm:$0xff] 0.0
          %313 = vst [vmem:[#allocation2 + $0x298] sm:$0xff] 0.0
          %314 = vst [vmem:[#allocation2 + $0x2a0] sm:$0xff] 0.0
          %315 = vst [vmem:[#allocation2 + $0x2a8] sm:$0xff] 0.0
          %316 = vst [vmem:[#allocation2 + $0x2b0] sm:$0xff] 0.0
          %317 = vst [vmem:[#allocation2 + $0x2b8] sm:$0xff] 0.0
          %318 = vst [vmem:[#allocation2 + $0x2c0] sm:$0xff] 0.0
          %319 = vst [vmem:[#allocation2 + $0x2c8] sm:$0xff] 0.0
          %320 = vst [vmem:[#allocation2 + $0x2d0] sm:$0xff] 0.0
          %321 = vst [vmem:[#allocation2 + $0x2d8] sm:$0xff] 0.0
          %322 = vst [vmem:[#allocation2 + $0x2e0] sm:$0xff] 0.0
          %323 = vst [vmem:[#allocation2 + $0x2e8] sm:$0xff] 0.0
          %324 = vst [vmem:[#allocation2 + $0x2f0] sm:$0xff] 0.0
          %325 = vst [vmem:[#allocation2 + $0x2f8] sm:$0xff] 0.0
          %326 = vst [vmem:[#allocation2 + $0x300] sm:$0xff] 0.0
          %327 = vst [vmem:[#allocation2 + $0x308] sm:$0xff] 0.0
          %328 = vst [vmem:[#allocation2 + $0x310] sm:$0xff] 0.0
          %329 = vst [vmem:[#allocation2 + $0x318] sm:$0xff] 0.0
          %330 = vst [vmem:[#allocation2 + $0x320] sm:$0xff] 0.0
          %331 = vst [vmem:[#allocation2 + $0x328] sm:$0xff] 0.0
          %332 = vst [vmem:[#allocation2 + $0x330] sm:$0xff] 0.0
          %333 = vst [vmem:[#allocation2 + $0x338] sm:$0xff] 0.0
          %334 = vst [vmem:[#allocation2 + $0x340] sm:$0xff] 0.0
          %335 = vst [vmem:[#allocation2 + $0x348] sm:$0xff] 0.0
          %336 = vst [vmem:[#allocation2 + $0x350] sm:$0xff] 0.0
          %337 = vst [vmem:[#allocation2 + $0x358] sm:$0xff] 0.0
          %338 = vst [vmem:[#allocation2 + $0x360] sm:$0xff] 0.0
          %339 = vst [vmem:[#allocation2 + $0x368] sm:$0xff] 0.0
          %340 = vst [vmem:[#allocation2 + $0x370] sm:$0xff] 0.0
          %341 = vst [vmem:[#allocation2 + $0x378] sm:$0xff] 0.0
          %342 = vst [vmem:[#allocation2 + $0x380] sm:$0xff] 0.0
          %343 = vst [vmem:[#allocation2 + $0x388] sm:$0xff] 0.0
          %344 = vst [vmem:[#allocation2 + $0x390] sm:$0xff] 0.0
          %345 = vst [vmem:[#allocation2 + $0x398] sm:$0xff] 0.0
          %346 = vst [vmem:[#allocation2 + $0x3a0] sm:$0xff] 0.0
          %347 = vst [vmem:[#allocation2 + $0x3a8] sm:$0xff] 0.0
          %348 = vst [vmem:[#allocation2 + $0x3b0] sm:$0xff] 0.0
          %349 = vst [vmem:[#allocation2 + $0x3b8] sm:$0xff] 0.0
          %350 = vst [vmem:[#allocation2 + $0x3c0] sm:$0xff] 0.0
          %351 = vst [vmem:[#allocation2 + $0x3c8] sm:$0xff] 0.0
          %352 = vst [vmem:[#allocation2 + $0x3d0] sm:$0xff] 0.0
          %353 = vst [vmem:[#allocation2 + $0x3d8] sm:$0xff] 0.0
          %354 = vst [vmem:[#allocation2 + $0x3e0] sm:$0xff] 0.0
          %355 = vst [vmem:[#allocation2 + $0x3e8] sm:$0xff] 0.0
          %356 = vst [vmem:[#allocation2 + $0x3f0] sm:$0xff] 0.0
          %357 = vst [vmem:[#allocation2 + $0x3f8] sm:$0xff] 0.0
          %358 = vst [vmem:[#allocation2 + $0x400] sm:$0xff] 0.0
          %359 = vst [vmem:[#allocation2 + $0x408] sm:$0xff] 0.0
          %360 = vst [vmem:[#allocation2 + $0x410] sm:$0xff] 0.0
          %361 = vst [vmem:[#allocation2 + $0x418] sm:$0xff] 0.0
          %362 = vst [vmem:[#allocation2 + $0x420] sm:$0xff] 0.0
          %363 = vst [vmem:[#allocation2 + $0x428] sm:$0xff] 0.0
          %364 = vst [vmem:[#allocation2 + $0x430] sm:$0xff] 0.0
          %365 = vst [vmem:[#allocation2 + $0x438] sm:$0xff] 0.0
          %366 = vst [vmem:[#allocation2 + $0x440] sm:$0xff] 0.0
          %367 = vst [vmem:[#allocation2 + $0x448] sm:$0xff] 0.0
          %368 = vst [vmem:[#allocation2 + $0x450] sm:$0xff] 0.0
          %369 = vst [vmem:[#allocation2 + $0x458] sm:$0xff] 0.0
          %370 = vst [vmem:[#allocation2 + $0x460] sm:$0xff] 0.0
          %371 = vst [vmem:[#allocation2 + $0x468] sm:$0xff] 0.0
          %372 = vst [vmem:[#allocation2 + $0x470] sm:$0xff] 0.0
          %373 = vst [vmem:[#allocation2 + $0x478] sm:$0xff] 0.0
          %374 = vst [vmem:[#allocation2 + $0x480] sm:$0xff] 0.0
          %375 = vst [vmem:[#allocation2 + $0x488] sm:$0xff] 0.0
          %376 = vst [vmem:[#allocation2 + $0x490] sm:$0xff] 0.0
          %377 = vst [vmem:[#allocation2 + $0x498] sm:$0xff] 0.0
          %378 = vst [vmem:[#allocation2 + $0x4a0] sm:$0xff] 0.0
          %379 = vst [vmem:[#allocation2 + $0x4a8] sm:$0xff] 0.0
          %380 = vst [vmem:[#allocation2 + $0x4b0] sm:$0xff] 0.0
          %381 = vst [vmem:[#allocation2 + $0x4b8] sm:$0xff] 0.0
          %382 = vst [vmem:[#allocation2 + $0x4c0] sm:$0xff] 0.0
          %383 = vst [vmem:[#allocation2 + $0x4c8] sm:$0xff] 0.0
          %384 = vst [vmem:[#allocation2 + $0x4d0] sm:$0xff] 0.0
          %385 = vst [vmem:[#allocation2 + $0x4d8] sm:$0xff] 0.0
          %386 = vst [vmem:[#allocation2 + $0x4e0] sm:$0xff] 0.0
          %387 = vst [vmem:[#allocation2 + $0x4e8] sm:$0xff] 0.0
          %388 = vst [vmem:[#allocation2 + $0x4f0] sm:$0xff] 0.0
          %389 = vst [vmem:[#allocation2 + $0x4f8] sm:$0xff] 0.0
          %390 = vst [vmem:[#allocation2 + $0x500] sm:$0xff] 0.0
          %391 = vst [vmem:[#allocation2 + $0x508] sm:$0xff] 0.0
          %392 = vst [vmem:[#allocation2 + $0x510] sm:$0xff] 0.0
          %393 = vst [vmem:[#allocation2 + $0x518] sm:$0xff] 0.0
          %394 = vst [vmem:[#allocation2 + $0x520] sm:$0xff] 0.0
          %395 = vst [vmem:[#allocation2 + $0x528] sm:$0xff] 0.0
          %396 = vst [vmem:[#allocation2 + $0x530] sm:$0xff] 0.0
          %397 = vst [vmem:[#allocation2 + $0x538] sm:$0xff] 0.0
          %398 = vst [vmem:[#allocation2 + $0x540] sm:$0xff] 0.0
          %399 = vst [vmem:[#allocation2 + $0x548] sm:$0xff] 0.0
          %400 = vst [vmem:[#allocation2 + $0x550] sm:$0xff] 0.0
          %401 = vst [vmem:[#allocation2 + $0x558] sm:$0xff] 0.0
          %402 = vst [vmem:[#allocation2 + $0x560] sm:$0xff] 0.0
          %403 = vst [vmem:[#allocation2 + $0x568] sm:$0xff] 0.0
          %404 = vst [vmem:[#allocation2 + $0x570] sm:$0xff] 0.0
          %405 = vst [vmem:[#allocation2 + $0x578] sm:$0xff] 0.0
          %406 = vst [vmem:[#allocation2 + $0x580] sm:$0xff] 0.0
          %407 = vst [vmem:[#allocation2 + $0x588] sm:$0xff] 0.0
          %408 = vst [vmem:[#allocation2 + $0x590] sm:$0xff] 0.0
          %409 = vst [vmem:[#allocation2 + $0x598] sm:$0xff] 0.0
          %410 = vst [vmem:[#allocation2 + $0x5a0] sm:$0xff] 0.0
          %411 = vst [vmem:[#allocation2 + $0x5a8] sm:$0xff] 0.0
          %412 = vst [vmem:[#allocation2 + $0x5b0] sm:$0xff] 0.0
          %413 = vst [vmem:[#allocation2 + $0x5b8] sm:$0xff] 0.0
          %414 = vst [vmem:[#allocation2 + $0x5c0] sm:$0xff] 0.0
          %415 = vst [vmem:[#allocation2 + $0x5c8] sm:$0xff] 0.0
          %416 = vst [vmem:[#allocation2 + $0x5d0] sm:$0xff] 0.0
          %417 = vst [vmem:[#allocation2 + $0x5d8] sm:$0xff] 0.0
          %418 = vst [vmem:[#allocation2 + $0x5e0] sm:$0xff] 0.0
          %419 = vst [vmem:[#allocation2 + $0x5e8] sm:$0xff] 0.0
          %420 = vst [vmem:[#allocation2 + $0x5f0] sm:$0xff] 0.0
          %421 = vst [vmem:[#allocation2 + $0x5f8] sm:$0xff] 0.0
        $region40: #{tpu_custom_call.1} parent=27 // pred_fallthru
          _
        %v422 = vld [vmem:[#allocation2] sm:$0xff]
        %v423 = vld [vmem:[#allocation2 + $0x8] sm:$0xff]
        %v424 = vld [vmem:[#allocation2 + $0x10] sm:$0xff]
        %v425 = vld [vmem:[#allocation2 + $0x18] sm:$0xff]
        %v426 = vld [vmem:[#allocation2 + $0x20] sm:$0xff]
        %v427 = vld [vmem:[#allocation2 + $0x28] sm:$0xff]
        %v428 = vld [vmem:[#allocation2 + $0x30] sm:$0xff]
        %v429 = vld [vmem:[#allocation2 + $0x38] sm:$0xff]
        %v430 = vld [vmem:[#allocation2 + $0x40] sm:$0xff]
        %v431 = vld [vmem:[#allocation2 + $0x48] sm:$0xff]
        %v432 = vld [vmem:[#allocation2 + $0x50] sm:$0xff]
        %v433 = vld [vmem:[#allocation2 + $0x58] sm:$0xff]
        %v434 = vld [vmem:[#allocation2 + $0x60] sm:$0xff]
        %v435 = vld [vmem:[#allocation2 + $0x68] sm:$0xff]
        %v436 = vld [vmem:[#allocation2 + $0x70] sm:$0xff]
        %v437 = vld [vmem:[#allocation2 + $0x78] sm:$0xff]
        %v438 = vld [vmem:[#allocation2 + $0x80] sm:$0xff]
        %v439 = vld [vmem:[#allocation2 + $0x88] sm:$0xff]
        %v440 = vld [vmem:[#allocation2 + $0x90] sm:$0xff]
        %v441 = vld [vmem:[#allocation2 + $0x98] sm:$0xff]
        %v442 = vld [vmem:[#allocation2 + $0xa0] sm:$0xff]
        %v443 = vld [vmem:[#allocation2 + $0xa8] sm:$0xff]
        %v444 = vld [vmem:[#allocation2 + $0xb0] sm:$0xff]
        %v445 = vld [vmem:[#allocation2 + $0xb8] sm:$0xff]
        %v446 = vld [vmem:[#allocation2 + $0xc0] sm:$0xff]
        %v447 = vld [vmem:[#allocation2 + $0xc8] sm:$0xff]
        %v448 = vld [vmem:[#allocation2 + $0xd0] sm:$0xff]
        %v449 = vld [vmem:[#allocation2 + $0xd8] sm:$0xff]
        %v450 = vld [vmem:[#allocation2 + $0xe0] sm:$0xff]
        %v451 = vld [vmem:[#allocation2 + $0xe8] sm:$0xff]
        %v452 = vld [vmem:[#allocation2 + $0xf0] sm:$0xff]
        %v453 = vld [vmem:[#allocation2 + $0xf8] sm:$0xff]
        %v454 = vld [vmem:[#allocation2 + $0x100] sm:$0xff]
        %v455 = vld [vmem:[#allocation2 + $0x108] sm:$0xff]
        %v456 = vld [vmem:[#allocation2 + $0x110] sm:$0xff]
        %v457 = vld [vmem:[#allocation2 + $0x118] sm:$0xff]
        %v458 = vld [vmem:[#allocation2 + $0x120] sm:$0xff]
        %v459 = vld [vmem:[#allocation2 + $0x128] sm:$0xff]
        %v460 = vld [vmem:[#allocation2 + $0x130] sm:$0xff]
        %v461 = vld [vmem:[#allocation2 + $0x138] sm:$0xff]
        %v462 = vld [vmem:[#allocation2 + $0x140] sm:$0xff]
        %v463 = vld [vmem:[#allocation2 + $0x148] sm:$0xff]
        %v464 = vld [vmem:[#allocation2 + $0x150] sm:$0xff]
        %v465 = vld [vmem:[#allocation2 + $0x158] sm:$0xff]
        %v466 = vld [vmem:[#allocation2 + $0x160] sm:$0xff]
        %v467 = vld [vmem:[#allocation2 + $0x168] sm:$0xff]
        %v468 = vld [vmem:[#allocation2 + $0x170] sm:$0xff]
        %v469 = vld [vmem:[#allocation2 + $0x178] sm:$0xff]
        %v470 = vld [vmem:[#allocation2 + $0x180] sm:$0xff]
        %v471 = vld [vmem:[#allocation2 + $0x188] sm:$0xff]
        %v472 = vld [vmem:[#allocation2 + $0x190] sm:$0xff]
        %v473 = vld [vmem:[#allocation2 + $0x198] sm:$0xff]
        %v474 = vld [vmem:[#allocation2 + $0x1a0] sm:$0xff]
        %v475 = vld [vmem:[#allocation2 + $0x1a8] sm:$0xff]
        %v476 = vld [vmem:[#allocation2 + $0x1b0] sm:$0xff]
        %v477 = vld [vmem:[#allocation2 + $0x1b8] sm:$0xff]
        %v478 = vld [vmem:[#allocation2 + $0x1c0] sm:$0xff]
        %v479 = vld [vmem:[#allocation2 + $0x1c8] sm:$0xff]
        %v480 = vld [vmem:[#allocation2 + $0x1d0] sm:$0xff]
        %v481 = vld [vmem:[#allocation2 + $0x1d8] sm:$0xff]
        %v482 = vld [vmem:[#allocation2 + $0x1e0] sm:$0xff]
        %v483 = vld [vmem:[#allocation2 + $0x1e8] sm:$0xff]
        %v484 = vld [vmem:[#allocation2 + $0x1f0] sm:$0xff]
        %v485 = vld [vmem:[#allocation2 + $0x1f8] sm:$0xff]
        %v486 = vld [vmem:[#allocation2 + $0x200] sm:$0xff]
        %v487 = vld [vmem:[#allocation2 + $0x208] sm:$0xff]
        %v488 = vld [vmem:[#allocation2 + $0x210] sm:$0xff]
        %v489 = vld [vmem:[#allocation2 + $0x218] sm:$0xff]
        %v490 = vld [vmem:[#allocation2 + $0x220] sm:$0xff]
        %v491 = vld [vmem:[#allocation2 + $0x228] sm:$0xff]
        %v492 = vld [vmem:[#allocation2 + $0x230] sm:$0xff]
        %v493 = vld [vmem:[#allocation2 + $0x238] sm:$0xff]
        %v494 = vld [vmem:[#allocation2 + $0x240] sm:$0xff]
        %v495 = vld [vmem:[#allocation2 + $0x248] sm:$0xff]
        %v496 = vld [vmem:[#allocation2 + $0x250] sm:$0xff]
        %v497 = vld [vmem:[#allocation2 + $0x258] sm:$0xff]
        %v498 = vld [vmem:[#allocation2 + $0x260] sm:$0xff]
        %v499 = vld [vmem:[#allocation2 + $0x268] sm:$0xff]
        %v500 = vld [vmem:[#allocation2 + $0x270] sm:$0xff]
        %v501 = vld [vmem:[#allocation2 + $0x278] sm:$0xff]
        %v502 = vld [vmem:[#allocation2 + $0x280] sm:$0xff]
        %v503 = vld [vmem:[#allocation2 + $0x288] sm:$0xff]
        %v504 = vld [vmem:[#allocation2 + $0x290] sm:$0xff]
        %v505 = vld [vmem:[#allocation2 + $0x298] sm:$0xff]
        %v506 = vld [vmem:[#allocation2 + $0x2a0] sm:$0xff]
        %v507 = vld [vmem:[#allocation2 + $0x2a8] sm:$0xff]
        %v508 = vld [vmem:[#allocation2 + $0x2b0] sm:$0xff]
        %v509 = vld [vmem:[#allocation2 + $0x2b8] sm:$0xff]
        %v510 = vld [vmem:[#allocation2 + $0x2c0] sm:$0xff]
        %v511 = vld [vmem:[#allocation2 + $0x2c8] sm:$0xff]
        %v512 = vld [vmem:[#allocation2 + $0x2d0] sm:$0xff]
        %v513 = vld [vmem:[#allocation2 + $0x2d8] sm:$0xff]
        %v514 = vld [vmem:[#allocation2 + $0x2e0] sm:$0xff]
        %v515 = vld [vmem:[#allocation2 + $0x2e8] sm:$0xff]
        %v516 = vld [vmem:[#allocation2 + $0x2f0] sm:$0xff]
        %v517 = vld [vmem:[#allocation2 + $0x2f8] sm:$0xff]
        %v518 = vld [vmem:[#allocation2 + $0x300] sm:$0xff]
        %v519 = vld [vmem:[#allocation2 + $0x308] sm:$0xff]
        %v520 = vld [vmem:[#allocation2 + $0x310] sm:$0xff]
        %v521 = vld [vmem:[#allocation2 + $0x318] sm:$0xff]
        %v522 = vld [vmem:[#allocation2 + $0x320] sm:$0xff]
        %v523 = vld [vmem:[#allocation2 + $0x328] sm:$0xff]
        %v524 = vld [vmem:[#allocation2 + $0x330] sm:$0xff]
        %v525 = vld [vmem:[#allocation2 + $0x338] sm:$0xff]
        %v526 = vld [vmem:[#allocation2 + $0x340] sm:$0xff]
        %v527 = vld [vmem:[#allocation2 + $0x348] sm:$0xff]
        %v528 = vld [vmem:[#allocation2 + $0x350] sm:$0xff]
        %v529 = vld [vmem:[#allocation2 + $0x358] sm:$0xff]
        %v530 = vld [vmem:[#allocation2 + $0x360] sm:$0xff]
        %v531 = vld [vmem:[#allocation2 + $0x368] sm:$0xff]
        %v532 = vld [vmem:[#allocation2 + $0x370] sm:$0xff]
        %v533 = vld [vmem:[#allocation2 + $0x378] sm:$0xff]
        %v534 = vld [vmem:[#allocation2 + $0x380] sm:$0xff]
        %v535 = vld [vmem:[#allocation2 + $0x388] sm:$0xff]
        %v536 = vld [vmem:[#allocation2 + $0x390] sm:$0xff]
        %v537 = vld [vmem:[#allocation2 + $0x398] sm:$0xff]
        %v538 = vld [vmem:[#allocation2 + $0x3a0] sm:$0xff]
        %v539 = vld [vmem:[#allocation2 + $0x3a8] sm:$0xff]
        %v540 = vld [vmem:[#allocation2 + $0x3b0] sm:$0xff]
        %v541 = vld [vmem:[#allocation2 + $0x3b8] sm:$0xff]
        %v542 = vld [vmem:[#allocation2 + $0x3c0] sm:$0xff]
        %v543 = vld [vmem:[#allocation2 + $0x3c8] sm:$0xff]
        %v544 = vld [vmem:[#allocation2 + $0x3d0] sm:$0xff]
        %v545 = vld [vmem:[#allocation2 + $0x3d8] sm:$0xff]
        %v546 = vld [vmem:[#allocation2 + $0x3e0] sm:$0xff]
        %v547 = vld [vmem:[#allocation2 + $0x3e8] sm:$0xff]
        %v548 = vld [vmem:[#allocation2 + $0x3f0] sm:$0xff]
        %v549 = vld [vmem:[#allocation2 + $0x3f8] sm:$0xff]
        %v550 = vld [vmem:[#allocation2 + $0x400] sm:$0xff]
        %v551 = vld [vmem:[#allocation2 + $0x408] sm:$0xff]
        %v552 = vld [vmem:[#allocation2 + $0x410] sm:$0xff]
        %v553 = vld [vmem:[#allocation2 + $0x418] sm:$0xff]
        %v554 = vld [vmem:[#allocation2 + $0x420] sm:$0xff]
        %v555 = vld [vmem:[#allocation2 + $0x428] sm:$0xff]
        %v556 = vld [vmem:[#allocation2 + $0x430] sm:$0xff]
        %v557 = vld [vmem:[#allocation2 + $0x438] sm:$0xff]
        %v558 = vld [vmem:[#allocation2 + $0x440] sm:$0xff]
        %v559 = vld [vmem:[#allocation2 + $0x448] sm:$0xff]
        %v560 = vld [vmem:[#allocation2 + $0x450] sm:$0xff]
        %v561 = vld [vmem:[#allocation2 + $0x458] sm:$0xff]
        %v562 = vld [vmem:[#allocation2 + $0x460] sm:$0xff]
        %v563 = vld [vmem:[#allocation2 + $0x468] sm:$0xff]
        %v564 = vld [vmem:[#allocation2 + $0x470] sm:$0xff]
        %v565 = vld [vmem:[#allocation2 + $0x478] sm:$0xff]
        %v566 = vld [vmem:[#allocation2 + $0x480] sm:$0xff]
        %v567 = vld [vmem:[#allocation2 + $0x488] sm:$0xff]
        %v568 = vld [vmem:[#allocation2 + $0x490] sm:$0xff]
        %v569 = vld [vmem:[#allocation2 + $0x498] sm:$0xff]
        %v570 = vld [vmem:[#allocation2 + $0x4a0] sm:$0xff]
        %v571 = vld [vmem:[#allocation2 + $0x4a8] sm:$0xff]
        %v572 = vld [vmem:[#allocation2 + $0x4b0] sm:$0xff]
        %v573 = vld [vmem:[#allocation2 + $0x4b8] sm:$0xff]
        %v574 = vld [vmem:[#allocation2 + $0x4c0] sm:$0xff]
        %v575 = vld [vmem:[#allocation2 + $0x4c8] sm:$0xff]
        %v576 = vld [vmem:[#allocation2 + $0x4d0] sm:$0xff]
        %v577 = vld [vmem:[#allocation2 + $0x4d8] sm:$0xff]
        %v578 = vld [vmem:[#allocation2 + $0x4e0] sm:$0xff]
        %v579 = vld [vmem:[#allocation2 + $0x4e8] sm:$0xff]
        %v580 = vld [vmem:[#allocation2 + $0x4f0] sm:$0xff]
        %v581 = vld [vmem:[#allocation2 + $0x4f8] sm:$0xff]
        %v582 = vld [vmem:[#allocation2 + $0x500] sm:$0xff]
        %v583 = vld [vmem:[#allocation2 + $0x508] sm:$0xff]
        %v584 = vld [vmem:[#allocation2 + $0x510] sm:$0xff]
        %v585 = vld [vmem:[#allocation2 + $0x518] sm:$0xff]
        %v586 = vld [vmem:[#allocation2 + $0x520] sm:$0xff]
        %v587 = vld [vmem:[#allocation2 + $0x528] sm:$0xff]
        %v588 = vld [vmem:[#allocation2 + $0x530] sm:$0xff]
        %v589 = vld [vmem:[#allocation2 + $0x538] sm:$0xff]
        %v590 = vld [vmem:[#allocation2 + $0x540] sm:$0xff]
        %v591 = vld [vmem:[#allocation2 + $0x548] sm:$0xff]
        %v592 = vld [vmem:[#allocation2 + $0x550] sm:$0xff]
        %v593 = vld [vmem:[#allocation2 + $0x558] sm:$0xff]
        %v594 = vld [vmem:[#allocation2 + $0x560] sm:$0xff]
        %v595 = vld [vmem:[#allocation2 + $0x568] sm:$0xff]
        %v596 = vld [vmem:[#allocation2 + $0x570] sm:$0xff]
        %v597 = vld [vmem:[#allocation2 + $0x578] sm:$0xff]
        %v598 = vld [vmem:[#allocation2 + $0x580] sm:$0xff]
        %v599 = vld [vmem:[#allocation2 + $0x588] sm:$0xff]
        %v600 = vld [vmem:[#allocation2 + $0x590] sm:$0xff]
        %v601 = vld [vmem:[#allocation2 + $0x598] sm:$0xff]
        %v602 = vld [vmem:[#allocation2 + $0x5a0] sm:$0xff]
        %v603 = vld [vmem:[#allocation2 + $0x5a8] sm:$0xff]
        %v604 = vld [vmem:[#allocation2 + $0x5b0] sm:$0xff]
        %v605 = vld [vmem:[#allocation2 + $0x5b8] sm:$0xff]
        %v606 = vld [vmem:[#allocation2 + $0x5c0] sm:$0xff]
        %v607 = vld [vmem:[#allocation2 + $0x5c8] sm:$0xff]
        %v608 = vld [vmem:[#allocation2 + $0x5d0] sm:$0xff]
        %v609 = vld [vmem:[#allocation2 + $0x5d8] sm:$0xff]
        %v610 = vld [vmem:[#allocation2 + $0x5e0] sm:$0xff]
        %v611 = vld [vmem:[#allocation2 + $0x5e8] sm:$0xff]
        %v612 = vld [vmem:[#allocation2 + $0x5f0] sm:$0xff]
        %v613 = vld [vmem:[#allocation2 + $0x5f8] sm:$0xff]
        %v614 = vld [vmem:[#allocation3] sm:$0xff]
        %v615 = vld [vmem:[#allocation3 + $0x8] sm:$0xff]
        %v616 = vld [vmem:[#allocation3 + $0x10] sm:$0xff]
        %v617 = vld [vmem:[#allocation3 + $0x18] sm:$0xff]
        %v618 = vld [vmem:[#allocation3 + $0x20] sm:$0xff]
        %v619 = vld [vmem:[#allocation3 + $0x28] sm:$0xff]
        %v620 = vld [vmem:[#allocation3 + $0x30] sm:$0xff]
        %v621 = vld [vmem:[#allocation3 + $0x38] sm:$0xff]
        %v622 = vld [vmem:[#allocation3 + $0x40] sm:$0xff]
        %v623 = vld [vmem:[#allocation3 + $0x48] sm:$0xff]
        %v624 = vld [vmem:[#allocation3 + $0x50] sm:$0xff]
        %v625 = vld [vmem:[#allocation3 + $0x58] sm:$0xff]
        %v626 = vld [vmem:[#allocation3 + $0x60] sm:$0xff]
        %v627 = vld [vmem:[#allocation3 + $0x68] sm:$0xff]
        %v628 = vld [vmem:[#allocation3 + $0x70] sm:$0xff]
        %v629 = vld [vmem:[#allocation3 + $0x78] sm:$0xff]
        %v630 = vld [vmem:[#allocation3 + $0x80] sm:$0xff]
        %v631 = vld [vmem:[#allocation3 + $0x88] sm:$0xff]
        %v632 = vld [vmem:[#allocation3 + $0x90] sm:$0xff]
        %v633 = vld [vmem:[#allocation3 + $0x98] sm:$0xff]
        %v634 = vld [vmem:[#allocation3 + $0xa0] sm:$0xff]
        %v635 = vld [vmem:[#allocation3 + $0xa8] sm:$0xff]
        %v636 = vld [vmem:[#allocation3 + $0xb0] sm:$0xff]
        %v637 = vld [vmem:[#allocation3 + $0xb8] sm:$0xff]
        %v638 = vld [vmem:[#allocation3 + $0xc0] sm:$0xff]
        %v639 = vld [vmem:[#allocation3 + $0xc8] sm:$0xff]
        %v640 = vld [vmem:[#allocation3 + $0xd0] sm:$0xff]
        %v641 = vld [vmem:[#allocation3 + $0xd8] sm:$0xff]
        %v642 = vld [vmem:[#allocation3 + $0xe0] sm:$0xff]
        %v643 = vld [vmem:[#allocation3 + $0xe8] sm:$0xff]
        %v644 = vld [vmem:[#allocation3 + $0xf0] sm:$0xff]
        %v645 = vld [vmem:[#allocation3 + $0xf8] sm:$0xff]
        %v646 = vld [vmem:[#allocation3 + $0x100] sm:$0xff]
        %v647 = vld [vmem:[#allocation3 + $0x108] sm:$0xff]
        %v648 = vld [vmem:[#allocation3 + $0x110] sm:$0xff]
        %v649 = vld [vmem:[#allocation3 + $0x118] sm:$0xff]
        %v650 = vld [vmem:[#allocation3 + $0x120] sm:$0xff]
        %v651 = vld [vmem:[#allocation3 + $0x128] sm:$0xff]
        %v652 = vld [vmem:[#allocation3 + $0x130] sm:$0xff]
        %v653 = vld [vmem:[#allocation3 + $0x138] sm:$0xff]
        %v654 = vld [vmem:[#allocation3 + $0x140] sm:$0xff]
        %v655 = vld [vmem:[#allocation3 + $0x148] sm:$0xff]
        %v656 = vld [vmem:[#allocation3 + $0x150] sm:$0xff]
        %v657 = vld [vmem:[#allocation3 + $0x158] sm:$0xff]
        %v658 = vld [vmem:[#allocation3 + $0x160] sm:$0xff]
        %v659 = vld [vmem:[#allocation3 + $0x168] sm:$0xff]
        %v660 = vld [vmem:[#allocation3 + $0x170] sm:$0xff]
        %v661 = vld [vmem:[#allocation3 + $0x178] sm:$0xff]
        %v662 = vld [vmem:[#allocation3 + $0x180] sm:$0xff]
        %v663 = vld [vmem:[#allocation3 + $0x188] sm:$0xff]
        %v664 = vld [vmem:[#allocation3 + $0x190] sm:$0xff]
        %v665 = vld [vmem:[#allocation3 + $0x198] sm:$0xff]
        %v666 = vld [vmem:[#allocation3 + $0x1a0] sm:$0xff]
        %v667 = vld [vmem:[#allocation3 + $0x1a8] sm:$0xff]
        %v668 = vld [vmem:[#allocation3 + $0x1b0] sm:$0xff]
        %v669 = vld [vmem:[#allocation3 + $0x1b8] sm:$0xff]
        %v670 = vld [vmem:[#allocation3 + $0x1c0] sm:$0xff]
        %v671 = vld [vmem:[#allocation3 + $0x1c8] sm:$0xff]
        %v672 = vld [vmem:[#allocation3 + $0x1d0] sm:$0xff]
        %v673 = vld [vmem:[#allocation3 + $0x1d8] sm:$0xff]
        %v674 = vld [vmem:[#allocation3 + $0x1e0] sm:$0xff]
        %v675 = vld [vmem:[#allocation3 + $0x1e8] sm:$0xff]
        %v676 = vld [vmem:[#allocation3 + $0x1f0] sm:$0xff]
        %v677 = vld [vmem:[#allocation3 + $0x1f8] sm:$0xff]
        %v678 = vld [vmem:[%s198] sm:$0xff]
        %v679 = vld [vmem:[%s198 + $0x8] sm:$0xf]
        %v680 = vld [vmem:[%s198 + $0xc] sm:$0xff]
        %v681 = vld [vmem:[%s198 + $0x14] sm:$0xf]
        %v682 = vld [vmem:[%s198 + $0x18] sm:$0xff]
        %v683 = vld [vmem:[%s198 + $0x20] sm:$0xf]
        %v684 = vld [vmem:[%s198 + $0x24] sm:$0xff]
        %v685 = vld [vmem:[%s198 + $0x2c] sm:$0xf]
        %v686 = vld [vmem:[%s198 + $0x30] sm:$0xff]
        %v687 = vld [vmem:[%s198 + $0x38] sm:$0xf]
        %v688 = vld [vmem:[%s198 + $0x3c] sm:$0xff]
        %v689 = vld [vmem:[%s198 + $0x44] sm:$0xf]
        %v690 = vld [vmem:[%s198 + $0x48] sm:$0xff]
        %v691 = vld [vmem:[%s198 + $0x50] sm:$0xf]
        %v692 = vld [vmem:[%s198 + $0x54] sm:$0xff]
        %v693 = vld [vmem:[%s198 + $0x5c] sm:$0xf]
        %v694 = vld [vmem:[%s198 + $0x60] sm:$0xff]
        %v695 = vld [vmem:[%s198 + $0x68] sm:$0xf]
        %v696 = vld [vmem:[%s198 + $0x6c] sm:$0xff]
        %v697 = vld [vmem:[%s198 + $0x74] sm:$0xf]
        %v698 = vld [vmem:[%s198 + $0x78] sm:$0xff]
        %v699 = vld [vmem:[%s198 + $0x80] sm:$0xf]
        %v700 = vld [vmem:[%s198 + $0x84] sm:$0xff]
        %v701 = vld [vmem:[%s198 + $0x8c] sm:$0xf]
        %v702 = vld [vmem:[%s198 + $0x90] sm:$0xff]
        %v703 = vld [vmem:[%s198 + $0x98] sm:$0xf]
        %v704 = vld [vmem:[%s198 + $0x9c] sm:$0xff]
        %v705 = vld [vmem:[%s198 + $0xa4] sm:$0xf]
        %v706 = vld [vmem:[%s198 + $0xa8] sm:$0xff]
        %v707 = vld [vmem:[%s198 + $0xb0] sm:$0xf]
        %v708 = vld [vmem:[%s198 + $0xb4] sm:$0xff]
        %v709 = vld [vmem:[%s198 + $0xbc] sm:$0xf]
        %v710 = vld [vmem:[%s198 + $0xc0] sm:$0xff]
        %v711 = vld [vmem:[%s198 + $0xc8] sm:$0xf]
        %v712 = vld [vmem:[%s198 + $0xcc] sm:$0xff]
        %v713 = vld [vmem:[%s198 + $0xd4] sm:$0xf]
        %v714 = vld [vmem:[%s198 + $0xd8] sm:$0xff]
        %v715 = vld [vmem:[%s198 + $0xe0] sm:$0xf]
        %v716 = vld [vmem:[%s198 + $0xe4] sm:$0xff]
        %v717 = vld [vmem:[%s198 + $0xec] sm:$0xf]
        %v718 = vld [vmem:[%s198 + $0xf0] sm:$0xff]
        %v719 = vld [vmem:[%s198 + $0xf8] sm:$0xf]
        %v720 = vld [vmem:[%s198 + $0xfc] sm:$0xff]
        %v721 = vld [vmem:[%s198 + $0x104] sm:$0xf]
        %v722 = vld [vmem:[%s198 + $0x108] sm:$0xff]
        %v723 = vld [vmem:[%s198 + $0x110] sm:$0xf]
        %v724 = vld [vmem:[%s198 + $0x114] sm:$0xff]
        %v725 = vld [vmem:[%s198 + $0x11c] sm:$0xf]
        %v726 = vld [vmem:[%s198 + $0x120] sm:$0xff]
        %v727 = vld [vmem:[%s198 + $0x128] sm:$0xf]
        %v728 = vld [vmem:[%s198 + $0x12c] sm:$0xff]
        %v729 = vld [vmem:[%s198 + $0x134] sm:$0xf]
        %v730 = vld [vmem:[%s198 + $0x138] sm:$0xff]
        %v731 = vld [vmem:[%s198 + $0x140] sm:$0xf]
        %v732 = vld [vmem:[%s198 + $0x144] sm:$0xff]
        %v733 = vld [vmem:[%s198 + $0x14c] sm:$0xf]
        %v734 = vld [vmem:[%s198 + $0x150] sm:$0xff]
        %v735 = vld [vmem:[%s198 + $0x158] sm:$0xf]
        %v736 = vld [vmem:[%s198 + $0x15c] sm:$0xff]
        %v737 = vld [vmem:[%s198 + $0x164] sm:$0xf]
        %v738 = vld [vmem:[%s198 + $0x168] sm:$0xff]
        %v739 = vld [vmem:[%s198 + $0x170] sm:$0xf]
        %v740 = vld [vmem:[%s198 + $0x174] sm:$0xff]
        %v741 = vld [vmem:[%s198 + $0x17c] sm:$0xf]
        %v806 = vunpack.c.l.b16 %v614
        %v807 = vunpack.c.h.b16 %v614
        %v808 = vunpack.c.l.b16 %v615
        %v809 = vunpack.c.h.b16 %v615
        %v810 = vunpack.c.l.b16 %v616
        %v811 = vunpack.c.h.b16 %v616
        %v812 = vunpack.c.l.b16 %v617
        %v813 = vunpack.c.h.b16 %v617
        %v814 = vunpack.c.l.b16 %v618
        %v815 = vunpack.c.h.b16 %v618
        %v816 = vunpack.c.l.b16 %v619
        %v817 = vunpack.c.h.b16 %v619
        %v818 = vunpack.c.l.b16 %v620
        %v819 = vunpack.c.h.b16 %v620
        %v820 = vunpack.c.l.b16 %v621
        %v821 = vunpack.c.h.b16 %v621
        %v822 = vunpack.c.l.b16 %v622
        %v823 = vunpack.c.h.b16 %v622
        %v824 = vunpack.c.l.b16 %v623
        %v825 = vunpack.c.h.b16 %v623
        %v826 = vunpack.c.l.b16 %v624
        %v827 = vunpack.c.h.b16 %v624
        %v828 = vunpack.c.l.b16 %v625
        %v829 = vunpack.c.h.b16 %v625
        %v830 = vunpack.c.l.b16 %v626
        %v831 = vunpack.c.h.b16 %v626
        %v832 = vunpack.c.l.b16 %v627
        %v833 = vunpack.c.h.b16 %v627
        %v834 = vunpack.c.l.b16 %v628
        %v835 = vunpack.c.h.b16 %v628
        %v836 = vunpack.c.l.b16 %v629
        %v837 = vunpack.c.h.b16 %v629
        %v838 = vunpack.c.l.b16 %v630
        %v839 = vunpack.c.h.b16 %v630
        %v840 = vunpack.c.l.b16 %v631
        %v841 = vunpack.c.h.b16 %v631
        %v842 = vunpack.c.l.b16 %v632
        %v843 = vunpack.c.h.b16 %v632
        %v844 = vunpack.c.l.b16 %v633
        %v845 = vunpack.c.h.b16 %v633
        %v846 = vunpack.c.l.b16 %v634
        %v847 = vunpack.c.h.b16 %v634
        %v848 = vunpack.c.l.b16 %v635
        %v849 = vunpack.c.h.b16 %v635
        %v850 = vunpack.c.l.b16 %v636
        %v851 = vunpack.c.h.b16 %v636
        %v852 = vunpack.c.l.b16 %v637
        %v853 = vunpack.c.h.b16 %v637
        %v854 = vunpack.c.l.b16 %v638
        %v855 = vunpack.c.h.b16 %v638
        %v856 = vunpack.c.l.b16 %v639
        %v857 = vunpack.c.h.b16 %v639
        %v858 = vunpack.c.l.b16 %v640
        %v859 = vunpack.c.h.b16 %v640
        %v860 = vunpack.c.l.b16 %v641
        %v861 = vunpack.c.h.b16 %v641
        %v862 = vunpack.c.l.b16 %v642
        %v863 = vunpack.c.h.b16 %v642
        %v864 = vunpack.c.l.b16 %v643
        %v865 = vunpack.c.h.b16 %v643
        %v866 = vunpack.c.l.b16 %v644
        %v867 = vunpack.c.h.b16 %v644
        %v868 = vunpack.c.l.b16 %v645
        %v869 = vunpack.c.h.b16 %v645
        %v870 = vunpack.c.l.b16 %v646
        %v871 = vunpack.c.h.b16 %v646
        %v872 = vunpack.c.l.b16 %v647
        %v873 = vunpack.c.h.b16 %v647
        %v874 = vunpack.c.l.b16 %v648
        %v875 = vunpack.c.h.b16 %v648
        %v876 = vunpack.c.l.b16 %v649
        %v877 = vunpack.c.h.b16 %v649
        %v878 = vunpack.c.l.b16 %v650
        %v879 = vunpack.c.h.b16 %v650
        %v880 = vunpack.c.l.b16 %v651
        %v881 = vunpack.c.h.b16 %v651
        %v882 = vunpack.c.l.b16 %v652
        %v883 = vunpack.c.h.b16 %v652
        %v884 = vunpack.c.l.b16 %v653
        %v885 = vunpack.c.h.b16 %v653
        %v886 = vunpack.c.l.b16 %v654
        %v887 = vunpack.c.h.b16 %v654
        %v888 = vunpack.c.l.b16 %v655
        %v889 = vunpack.c.h.b16 %v655
        %v890 = vunpack.c.l.b16 %v656
        %v891 = vunpack.c.h.b16 %v656
        %v892 = vunpack.c.l.b16 %v657
        %v893 = vunpack.c.h.b16 %v657
        %v894 = vunpack.c.l.b16 %v658
        %v895 = vunpack.c.h.b16 %v658
        %v896 = vunpack.c.l.b16 %v659
        %v897 = vunpack.c.h.b16 %v659
        %v898 = vunpack.c.l.b16 %v660
        %v899 = vunpack.c.h.b16 %v660
        %v900 = vunpack.c.l.b16 %v661
        %v901 = vunpack.c.h.b16 %v661
        %v902 = vunpack.c.l.b16 %v662
        %v903 = vunpack.c.h.b16 %v662
        %v904 = vunpack.c.l.b16 %v663
        %v905 = vunpack.c.h.b16 %v663
        %v906 = vunpack.c.l.b16 %v664
        %v907 = vunpack.c.h.b16 %v664
        %v908 = vunpack.c.l.b16 %v665
        %v909 = vunpack.c.h.b16 %v665
        %v910 = vunpack.c.l.b16 %v666
        %v911 = vunpack.c.h.b16 %v666
        %v912 = vunpack.c.l.b16 %v667
        %v913 = vunpack.c.h.b16 %v667
        %v914 = vunpack.c.l.b16 %v668
        %v915 = vunpack.c.h.b16 %v668
        %v916 = vunpack.c.l.b16 %v669
        %v917 = vunpack.c.h.b16 %v669
        %v918 = vunpack.c.l.b16 %v670
        %v919 = vunpack.c.h.b16 %v670
        %v920 = vunpack.c.l.b16 %v671
        %v921 = vunpack.c.h.b16 %v671
        %v922 = vunpack.c.l.b16 %v672
        %v923 = vunpack.c.h.b16 %v672
        %v924 = vunpack.c.l.b16 %v673
        %v925 = vunpack.c.h.b16 %v673
        %v926 = vunpack.c.l.b16 %v674
        %v927 = vunpack.c.h.b16 %v674
        %v928 = vunpack.c.l.b16 %v675
        %v929 = vunpack.c.h.b16 %v675
        %v930 = vunpack.c.l.b16 %v676
        %v931 = vunpack.c.h.b16 %v676
        %v932 = vunpack.c.l.b16 %v677
        %v933 = vunpack.c.h.b16 %v677
        %v934 = vpack.c.b16 %v808, %v806
        %v935 = vpack.c.b16 %v809, %v807
        %v936 = vpack.c.b16 %v812, %v810
        %v937 = vpack.c.b16 %v813, %v811
        %v938 = vpack.c.b16 %v816, %v814
        %v939 = vpack.c.b16 %v817, %v815
        %v940 = vpack.c.b16 %v820, %v818
        %v941 = vpack.c.b16 %v821, %v819
        %v942 = vpack.c.b16 %v824, %v822
        %v943 = vpack.c.b16 %v825, %v823
        %v944 = vpack.c.b16 %v828, %v826
        %v945 = vpack.c.b16 %v829, %v827
        %v946 = vpack.c.b16 %v832, %v830
        %v947 = vpack.c.b16 %v833, %v831
        %v948 = vpack.c.b16 %v836, %v834
        %v949 = vpack.c.b16 %v837, %v835
        %v950 = vpack.c.b16 %v840, %v838
        %v951 = vpack.c.b16 %v841, %v839
        %v952 = vpack.c.b16 %v844, %v842
        %v953 = vpack.c.b16 %v845, %v843
        %v954 = vpack.c.b16 %v848, %v846
        %v955 = vpack.c.b16 %v849, %v847
        %v956 = vpack.c.b16 %v852, %v850
        %v957 = vpack.c.b16 %v853, %v851
        %v958 = vpack.c.b16 %v856, %v854
        %v959 = vpack.c.b16 %v857, %v855
        %v960 = vpack.c.b16 %v860, %v858
        %v961 = vpack.c.b16 %v861, %v859
        %v962 = vpack.c.b16 %v864, %v862
        %v963 = vpack.c.b16 %v865, %v863
        %v964 = vpack.c.b16 %v868, %v866
        %v965 = vpack.c.b16 %v869, %v867
        %v966 = vpack.c.b16 %v872, %v870
        %v967 = vpack.c.b16 %v873, %v871
        %v968 = vpack.c.b16 %v876, %v874
        %v969 = vpack.c.b16 %v877, %v875
        %v970 = vpack.c.b16 %v880, %v878
        %v971 = vpack.c.b16 %v881, %v879
        %v972 = vpack.c.b16 %v884, %v882
        %v973 = vpack.c.b16 %v885, %v883
        %v974 = vpack.c.b16 %v888, %v886
        %v975 = vpack.c.b16 %v889, %v887
        %v976 = vpack.c.b16 %v892, %v890
        %v977 = vpack.c.b16 %v893, %v891
        %v978 = vpack.c.b16 %v896, %v894
        %v979 = vpack.c.b16 %v897, %v895
        %v980 = vpack.c.b16 %v900, %v898
        %v981 = vpack.c.b16 %v901, %v899
        %v982 = vpack.c.b16 %v904, %v902
        %v983 = vpack.c.b16 %v905, %v903
        %v984 = vpack.c.b16 %v908, %v906
        %v985 = vpack.c.b16 %v909, %v907
        %v986 = vpack.c.b16 %v912, %v910
        %v987 = vpack.c.b16 %v913, %v911
        %v988 = vpack.c.b16 %v916, %v914
        %v989 = vpack.c.b16 %v917, %v915
        %v990 = vpack.c.b16 %v920, %v918
        %v991 = vpack.c.b16 %v921, %v919
        %v992 = vpack.c.b16 %v924, %v922
        %v993 = vpack.c.b16 %v925, %v923
        %v994 = vpack.c.b16 %v928, %v926
        %v995 = vpack.c.b16 %v929, %v927
        %v996 = vpack.c.b16 %v932, %v930
        %v997 = vpack.c.b16 %v933, %v931
        %v1126 = vunpack.c.l.b16 %v678
        %v1127 = vunpack.c.h.b16 %v678
        %v1128 = vunpack.c.l.b16 %v679
        %v1129 = vunpack.c.l.b16 %v680
        %v1130 = vunpack.c.h.b16 %v680
        %v1131 = vunpack.c.l.b16 %v681
        %v1132 = vunpack.c.l.b16 %v682
        %v1133 = vunpack.c.h.b16 %v682
        %v1134 = vunpack.c.l.b16 %v683
        %v1135 = vunpack.c.l.b16 %v684
        %v1136 = vunpack.c.h.b16 %v684
        %v1137 = vunpack.c.l.b16 %v685
        %v1138 = vunpack.c.l.b16 %v686
        %v1139 = vunpack.c.h.b16 %v686
        %v1140 = vunpack.c.l.b16 %v687
        %v1141 = vunpack.c.l.b16 %v688
        %v1142 = vunpack.c.h.b16 %v688
        %v1143 = vunpack.c.l.b16 %v689
        %v1144 = vunpack.c.l.b16 %v690
        %v1145 = vunpack.c.h.b16 %v690
        %v1146 = vunpack.c.l.b16 %v691
        %v1147 = vunpack.c.l.b16 %v692
        %v1148 = vunpack.c.h.b16 %v692
        %v1149 = vunpack.c.l.b16 %v693
        %v1150 = vunpack.c.l.b16 %v694
        %v1151 = vunpack.c.h.b16 %v694
        %v1152 = vunpack.c.l.b16 %v695
        %v1153 = vunpack.c.l.b16 %v696
        %v1154 = vunpack.c.h.b16 %v696
        %v1155 = vunpack.c.l.b16 %v697
        %v1156 = vunpack.c.l.b16 %v698
        %v1157 = vunpack.c.h.b16 %v698
        %v1158 = vunpack.c.l.b16 %v699
        %v1159 = vunpack.c.l.b16 %v700
        %v1160 = vunpack.c.h.b16 %v700
        %v1161 = vunpack.c.l.b16 %v701
        %v1162 = vunpack.c.l.b16 %v702
        %v1163 = vunpack.c.h.b16 %v702
        %v1164 = vunpack.c.l.b16 %v703
        %v1165 = vunpack.c.l.b16 %v704
        %v1166 = vunpack.c.h.b16 %v704
        %v1167 = vunpack.c.l.b16 %v705
        %v1168 = vunpack.c.l.b16 %v706
        %v1169 = vunpack.c.h.b16 %v706
        %v1170 = vunpack.c.l.b16 %v707
        %v1171 = vunpack.c.l.b16 %v708
        %v1172 = vunpack.c.h.b16 %v708
        %v1173 = vunpack.c.l.b16 %v709
        %v1174 = vunpack.c.l.b16 %v710
        %v1175 = vunpack.c.h.b16 %v710
        %v1176 = vunpack.c.l.b16 %v711
        %v1177 = vunpack.c.l.b16 %v712
        %v1178 = vunpack.c.h.b16 %v712
        %v1179 = vunpack.c.l.b16 %v713
        %v1180 = vunpack.c.l.b16 %v714
        %v1181 = vunpack.c.h.b16 %v714
        %v1182 = vunpack.c.l.b16 %v715
        %v1183 = vunpack.c.l.b16 %v716
        %v1184 = vunpack.c.h.b16 %v716
        %v1185 = vunpack.c.l.b16 %v717
        %v1186 = vunpack.c.l.b16 %v718
        %v1187 = vunpack.c.h.b16 %v718
        %v1188 = vunpack.c.l.b16 %v719
        %v1189 = vunpack.c.l.b16 %v720
        %v1190 = vunpack.c.h.b16 %v720
        %v1191 = vunpack.c.l.b16 %v721
        %v1192 = vunpack.c.l.b16 %v722
        %v1193 = vunpack.c.h.b16 %v722
        %v1194 = vunpack.c.l.b16 %v723
        %v1195 = vunpack.c.l.b16 %v724
        %v1196 = vunpack.c.h.b16 %v724
        %v1197 = vunpack.c.l.b16 %v725
        %v1198 = vunpack.c.l.b16 %v726
        %v1199 = vunpack.c.h.b16 %v726
        %v1200 = vunpack.c.l.b16 %v727
        %v1201 = vunpack.c.l.b16 %v728
        %v1202 = vunpack.c.h.b16 %v728
        %v1203 = vunpack.c.l.b16 %v729
        %v1204 = vunpack.c.l.b16 %v730
        %v1205 = vunpack.c.h.b16 %v730
        %v1206 = vunpack.c.l.b16 %v731
        %v1207 = vunpack.c.l.b16 %v732
        %v1208 = vunpack.c.h.b16 %v732
        %v1209 = vunpack.c.l.b16 %v733
        %v1210 = vunpack.c.l.b16 %v734
        %v1211 = vunpack.c.h.b16 %v734
        %v1212 = vunpack.c.l.b16 %v735
        %v1213 = vunpack.c.l.b16 %v736
        %v1214 = vunpack.c.h.b16 %v736
        %v1215 = vunpack.c.l.b16 %v737
        %v1216 = vunpack.c.l.b16 %v738
        %v1217 = vunpack.c.h.b16 %v738
        %v1218 = vunpack.c.l.b16 %v739
        %v1219 = vunpack.c.l.b16 %v740
        %v1220 = vunpack.c.h.b16 %v740
        %v1221 = vunpack.c.l.b16 %v741
        %v1222 = vpack.c.b16 %v1129, %v1126
        %v1223 = vpack.c.b16 %v1130, %v1127
        %v1224 = vpack.c.b16 %v1131, %v1128
        %v1225 = vpack.c.b16 %v1135, %v1132
        %v1226 = vpack.c.b16 %v1136, %v1133
        %v1227 = vpack.c.b16 %v1137, %v1134
        %v1228 = vpack.c.b16 %v1141, %v1138
        %v1229 = vpack.c.b16 %v1142, %v1139
        %v1230 = vpack.c.b16 %v1143, %v1140
        %v1231 = vpack.c.b16 %v1147, %v1144
        %v1232 = vpack.c.b16 %v1148, %v1145
        %v1233 = vpack.c.b16 %v1149, %v1146
        %v1234 = vpack.c.b16 %v1153, %v1150
        %v1235 = vpack.c.b16 %v1154, %v1151
        %v1236 = vpack.c.b16 %v1155, %v1152
        %v1237 = vpack.c.b16 %v1159, %v1156
        %v1238 = vpack.c.b16 %v1160, %v1157
        %v1239 = vpack.c.b16 %v1161, %v1158
        %v1240 = vpack.c.b16 %v1165, %v1162
        %v1241 = vpack.c.b16 %v1166, %v1163
        %v1242 = vpack.c.b16 %v1167, %v1164
        %v1243 = vpack.c.b16 %v1171, %v1168
        %v1244 = vpack.c.b16 %v1172, %v1169
        %v1245 = vpack.c.b16 %v1173, %v1170
        %v1246 = vpack.c.b16 %v1177, %v1174
        %v1247 = vpack.c.b16 %v1178, %v1175
        %v1248 = vpack.c.b16 %v1179, %v1176
        %v1249 = vpack.c.b16 %v1183, %v1180
        %v1250 = vpack.c.b16 %v1184, %v1181
        %v1251 = vpack.c.b16 %v1185, %v1182
        %v1252 = vpack.c.b16 %v1189, %v1186
        %v1253 = vpack.c.b16 %v1190, %v1187
        %v1254 = vpack.c.b16 %v1191, %v1188
        %v1255 = vpack.c.b16 %v1195, %v1192
        %v1256 = vpack.c.b16 %v1196, %v1193
        %v1257 = vpack.c.b16 %v1197, %v1194
        %v1258 = vpack.c.b16 %v1201, %v1198
        %v1259 = vpack.c.b16 %v1202, %v1199
        %v1260 = vpack.c.b16 %v1203, %v1200
        %v1261 = vpack.c.b16 %v1207, %v1204
        %v1262 = vpack.c.b16 %v1208, %v1205
        %v1263 = vpack.c.b16 %v1209, %v1206
        %v1264 = vpack.c.b16 %v1213, %v1210
        %v1265 = vpack.c.b16 %v1214, %v1211
        %v1266 = vpack.c.b16 %v1215, %v1212
        %v1267 = vpack.c.b16 %v1219, %v1216
        %v1268 = vpack.c.b16 %v1220, %v1217
        %v1269 = vpack.c.b16 %v1221, %v1218
        %1318 = vmatpush.bf16.msra.mxu0 %v1243
        %1319 = vmatpush.bf16.msra.mxu0 %v1240
        %1320 = vmatpush.bf16.msra.mxu0 %v1237
        %1321 = vmatpush.bf16.msra.mxu0 %v1234
        %1322 = vmatpush.bf16.msra.mxu0 %v1231
        %1323 = vmatpush.bf16.msra.mxu0 %v1228
        %1324 = vmatpush.bf16.msra.mxu0 %v1225
        %1325 = vmatpush.bf16.msra.mxu0 %v1222
        %1326 = vmatmul.bf16.gmra.mxu0 %v934
        %v1327 = vpop.f32.mrf.mxu0
        %v1328 = vadd.f32 0.0, %v1327
        %v1329 = vpop.f32.mrf.mxu0
        %v1330 = vadd.f32 0.0, %v1329
        %1331 = vmatmul.bf16.gmra.mxu0 %v936
        %v1332 = vpop.f32.mrf.mxu0
        %v1333 = vadd.f32 0.0, %v1332
        %v1334 = vpop.f32.mrf.mxu0
        %v1335 = vadd.f32 0.0, %v1334
        %1336 = vmatmul.bf16.gmra.mxu0 %v938
        %v1337 = vpop.f32.mrf.mxu0
        %v1338 = vadd.f32 0.0, %v1337
        %v1339 = vpop.f32.mrf.mxu0
        %v1340 = vadd.f32 0.0, %v1339
        %1341 = vmatmul.bf16.gmra.mxu0 %v940
        %v1342 = vpop.f32.mrf.mxu0
        %v1343 = vadd.f32 0.0, %v1342
        %v1344 = vpop.f32.mrf.mxu0
        %v1345 = vadd.f32 0.0, %v1344
        %1346 = vmatmul.bf16.gmra.mxu0 %v942
        %v1347 = vpop.f32.mrf.mxu0
        %v1348 = vadd.f32 0.0, %v1347
        %v1349 = vpop.f32.mrf.mxu0
        %v1350 = vadd.f32 0.0, %v1349
        %1351 = vmatmul.bf16.gmra.mxu0 %v944
        %v1352 = vpop.f32.mrf.mxu0
        %v1353 = vadd.f32 0.0, %v1352
        %v1354 = vpop.f32.mrf.mxu0
        %v1355 = vadd.f32 0.0, %v1354
        %1356 = vmatmul.bf16.gmra.mxu0 %v946
        %v1357 = vpop.f32.mrf.mxu0
        %v1358 = vadd.f32 0.0, %v1357
        %v1359 = vpop.f32.mrf.mxu0
        %v1360 = vadd.f32 0.0, %v1359
        %1361 = vmatmul.bf16.gmra.mxu0 %v948
        %v1362 = vpop.f32.mrf.mxu0
        %v1363 = vadd.f32 0.0, %v1362
        %v1364 = vpop.f32.mrf.mxu0
        %v1365 = vadd.f32 0.0, %v1364
        %1366 = vmatmul.bf16.gmra.mxu0 %v950
        %v1367 = vpop.f32.mrf.mxu0
        %v1368 = vadd.f32 0.0, %v1367
        %v1369 = vpop.f32.mrf.mxu0
        %v1370 = vadd.f32 0.0, %v1369
        %1371 = vmatmul.bf16.gmra.mxu0 %v952
        %v1372 = vpop.f32.mrf.mxu0
        %v1373 = vadd.f32 0.0, %v1372
        %v1374 = vpop.f32.mrf.mxu0
        %v1375 = vadd.f32 0.0, %v1374
        %1376 = vmatmul.bf16.gmra.mxu0 %v954
        %v1377 = vpop.f32.mrf.mxu0
        %v1378 = vadd.f32 0.0, %v1377
        %v1379 = vpop.f32.mrf.mxu0
        %v1380 = vadd.f32 0.0, %v1379
        %1381 = vmatmul.bf16.gmra.mxu0 %v956
        %v1382 = vpop.f32.mrf.mxu0
        %v1383 = vadd.f32 0.0, %v1382
        %v1384 = vpop.f32.mrf.mxu0
        %v1385 = vadd.f32 0.0, %v1384
        %1386 = vmatmul.bf16.gmra.mxu0 %v958
        %v1387 = vpop.f32.mrf.mxu0
        %v1388 = vadd.f32 0.0, %v1387
        %v1389 = vpop.f32.mrf.mxu0
        %v1390 = vadd.f32 0.0, %v1389
        %1391 = vmatmul.bf16.gmra.mxu0 %v960
        %v1392 = vpop.f32.mrf.mxu0
        %v1393 = vadd.f32 0.0, %v1392
        %v1394 = vpop.f32.mrf.mxu0
        %v1395 = vadd.f32 0.0, %v1394
        %1396 = vmatmul.bf16.gmra.mxu0 %v962
        %v1397 = vpop.f32.mrf.mxu0
        %v1398 = vadd.f32 0.0, %v1397
        %v1399 = vpop.f32.mrf.mxu0
        %v1400 = vadd.f32 0.0, %v1399
        %1401 = vmatmul.bf16.gmra.mxu0 %v964
        %v1402 = vpop.f32.mrf.mxu0
        %v1403 = vadd.f32 0.0, %v1402
        %v1404 = vpop.f32.mrf.mxu0
        %v1405 = vadd.f32 0.0, %v1404
        %1406 = vmatmul.bf16.gmra.mxu0 %v966
        %v1407 = vpop.f32.mrf.mxu0
        %v1408 = vadd.f32 0.0, %v1407
        %v1409 = vpop.f32.mrf.mxu0
        %v1410 = vadd.f32 0.0, %v1409
        %1411 = vmatmul.bf16.gmra.mxu0 %v968
        %v1412 = vpop.f32.mrf.mxu0
        %v1413 = vadd.f32 0.0, %v1412
        %v1414 = vpop.f32.mrf.mxu0
        %v1415 = vadd.f32 0.0, %v1414
        %1416 = vmatmul.bf16.gmra.mxu0 %v970
        %v1417 = vpop.f32.mrf.mxu0
        %v1418 = vadd.f32 0.0, %v1417
        %v1419 = vpop.f32.mrf.mxu0
        %v1420 = vadd.f32 0.0, %v1419
        %1421 = vmatmul.bf16.gmra.mxu0 %v972
        %v1422 = vpop.f32.mrf.mxu0
        %v1423 = vadd.f32 0.0, %v1422
        %v1424 = vpop.f32.mrf.mxu0
        %v1425 = vadd.f32 0.0, %v1424
        %1426 = vmatmul.bf16.gmra.mxu0 %v974
        %v1427 = vpop.f32.mrf.mxu0
        %v1428 = vadd.f32 0.0, %v1427
        %v1429 = vpop.f32.mrf.mxu0
        %v1430 = vadd.f32 0.0, %v1429
        %1431 = vmatmul.bf16.gmra.mxu0 %v976
        %v1432 = vpop.f32.mrf.mxu0
        %v1433 = vadd.f32 0.0, %v1432
        %v1434 = vpop.f32.mrf.mxu0
        %v1435 = vadd.f32 0.0, %v1434
        %1436 = vmatmul.bf16.gmra.mxu0 %v978
        %v1437 = vpop.f32.mrf.mxu0
        %v1438 = vadd.f32 0.0, %v1437
        %v1439 = vpop.f32.mrf.mxu0
        %v1440 = vadd.f32 0.0, %v1439
        %1441 = vmatmul.bf16.gmra.mxu0 %v980
        %v1442 = vpop.f32.mrf.mxu0
        %v1443 = vadd.f32 0.0, %v1442
        %v1444 = vpop.f32.mrf.mxu0
        %v1445 = vadd.f32 0.0, %v1444
        %1446 = vmatmul.bf16.gmra.mxu0 %v982
        %v1447 = vpop.f32.mrf.mxu0
        %v1448 = vadd.f32 0.0, %v1447
        %v1449 = vpop.f32.mrf.mxu0
        %v1450 = vadd.f32 0.0, %v1449
        %1451 = vmatmul.bf16.gmra.mxu0 %v984
        %v1452 = vpop.f32.mrf.mxu0
        %v1453 = vadd.f32 0.0, %v1452
        %v1454 = vpop.f32.mrf.mxu0
        %v1455 = vadd.f32 0.0, %v1454
        %1456 = vmatmul.bf16.gmra.mxu0 %v986
        %v1457 = vpop.f32.mrf.mxu0
        %v1458 = vadd.f32 0.0, %v1457
        %v1459 = vpop.f32.mrf.mxu0
        %v1460 = vadd.f32 0.0, %v1459
        %1461 = vmatmul.bf16.gmra.mxu0 %v988
        %v1462 = vpop.f32.mrf.mxu0
        %v1463 = vadd.f32 0.0, %v1462
        %v1464 = vpop.f32.mrf.mxu0
        %v1465 = vadd.f32 0.0, %v1464
        %1466 = vmatmul.bf16.gmra.mxu0 %v990
        %v1467 = vpop.f32.mrf.mxu0
        %v1468 = vadd.f32 0.0, %v1467
        %v1469 = vpop.f32.mrf.mxu0
        %v1470 = vadd.f32 0.0, %v1469
        %1471 = vmatmul.bf16.gmra.mxu0 %v992
        %v1472 = vpop.f32.mrf.mxu0
        %v1473 = vadd.f32 0.0, %v1472
        %v1474 = vpop.f32.mrf.mxu0
        %v1475 = vadd.f32 0.0, %v1474
        %1476 = vmatmul.bf16.gmra.mxu0 %v994
        %v1477 = vpop.f32.mrf.mxu0
        %v1478 = vadd.f32 0.0, %v1477
        %v1479 = vpop.f32.mrf.mxu0
        %v1480 = vadd.f32 0.0, %v1479
        %1481 = vmatmul.bf16.gmra.mxu0 %v996
        %v1482 = vpop.f32.mrf.mxu0
        %v1483 = vadd.f32 0.0, %v1482
        %v1484 = vpop.f32.mrf.mxu0
        %v1485 = vadd.f32 0.0, %v1484
        %1486 = vdwg.mxu0
        %1487 = vmatpush.bf16.msra.mxu0 %v1267
        %1488 = vmatpush.bf16.msra.mxu0 %v1264
        %1489 = vmatpush.bf16.msra.mxu0 %v1261
        %1490 = vmatpush.bf16.msra.mxu0 %v1258
        %1491 = vmatpush.bf16.msra.mxu0 %v1255
        %1492 = vmatpush.bf16.msra.mxu0 %v1252
        %1493 = vmatpush.bf16.msra.mxu0 %v1249
        %1494 = vmatpush.bf16.msra.mxu0 %v1246
        %1495 = vmatmul.bf16.gmra.mxu0 %v935
        %v1496 = vpop.f32.mrf.mxu0
        %v1497 = vadd.f32 %v1328, %v1496
        %v1498 = vpop.f32.mrf.mxu0
        %v1499 = vadd.f32 %v1330, %v1498
        %1500 = vmatmul.bf16.gmra.mxu0 %v937
        %v1501 = vpop.f32.mrf.mxu0
        %v1502 = vadd.f32 %v1333, %v1501
        %v1503 = vpop.f32.mrf.mxu0
        %v1504 = vadd.f32 %v1335, %v1503
        %1505 = vmatmul.bf16.gmra.mxu0 %v939
        %v1506 = vpop.f32.mrf.mxu0
        %v1507 = vadd.f32 %v1338, %v1506
        %v1508 = vpop.f32.mrf.mxu0
        %v1509 = vadd.f32 %v1340, %v1508
        %1510 = vmatmul.bf16.gmra.mxu0 %v941
        %v1511 = vpop.f32.mrf.mxu0
        %v1512 = vadd.f32 %v1343, %v1511
        %v1513 = vpop.f32.mrf.mxu0
        %v1514 = vadd.f32 %v1345, %v1513
        %1515 = vmatmul.bf16.gmra.mxu0 %v943
        %v1516 = vpop.f32.mrf.mxu0
        %v1517 = vadd.f32 %v1348, %v1516
        %v1518 = vpop.f32.mrf.mxu0
        %v1519 = vadd.f32 %v1350, %v1518
        %1520 = vmatmul.bf16.gmra.mxu0 %v945
        %v1521 = vpop.f32.mrf.mxu0
        %v1522 = vadd.f32 %v1353, %v1521
        %v1523 = vpop.f32.mrf.mxu0
        %v1524 = vadd.f32 %v1355, %v1523
        %1525 = vmatmul.bf16.gmra.mxu0 %v947
        %v1526 = vpop.f32.mrf.mxu0
        %v1527 = vadd.f32 %v1358, %v1526
        %v1528 = vpop.f32.mrf.mxu0
        %v1529 = vadd.f32 %v1360, %v1528
        %1530 = vmatmul.bf16.gmra.mxu0 %v949
        %v1531 = vpop.f32.mrf.mxu0
        %v1532 = vadd.f32 %v1363, %v1531
        %v1533 = vpop.f32.mrf.mxu0
        %v1534 = vadd.f32 %v1365, %v1533
        %1535 = vmatmul.bf16.gmra.mxu0 %v951
        %v1536 = vpop.f32.mrf.mxu0
        %v1537 = vadd.f32 %v1368, %v1536
        %v1538 = vpop.f32.mrf.mxu0
        %v1539 = vadd.f32 %v1370, %v1538
        %1540 = vmatmul.bf16.gmra.mxu0 %v953
        %v1541 = vpop.f32.mrf.mxu0
        %v1542 = vadd.f32 %v1373, %v1541
        %v1543 = vpop.f32.mrf.mxu0
        %v1544 = vadd.f32 %v1375, %v1543
        %1545 = vmatmul.bf16.gmra.mxu0 %v955
        %v1546 = vpop.f32.mrf.mxu0
        %v1547 = vadd.f32 %v1378, %v1546
        %v1548 = vpop.f32.mrf.mxu0
        %v1549 = vadd.f32 %v1380, %v1548
        %1550 = vmatmul.bf16.gmra.mxu0 %v957
        %v1551 = vpop.f32.mrf.mxu0
        %v1552 = vadd.f32 %v1383, %v1551
        %v1553 = vpop.f32.mrf.mxu0
        %v1554 = vadd.f32 %v1385, %v1553
        %1555 = vmatmul.bf16.gmra.mxu0 %v959
        %v1556 = vpop.f32.mrf.mxu0
        %v1557 = vadd.f32 %v1388, %v1556
        %v1558 = vpop.f32.mrf.mxu0
        %v1559 = vadd.f32 %v1390, %v1558
        %1560 = vmatmul.bf16.gmra.mxu0 %v961
        %v1561 = vpop.f32.mrf.mxu0
        %v1562 = vadd.f32 %v1393, %v1561
        %v1563 = vpop.f32.mrf.mxu0
        %v1564 = vadd.f32 %v1395, %v1563
        %1565 = vmatmul.bf16.gmra.mxu0 %v963
        %v1566 = vpop.f32.mrf.mxu0
        %v1567 = vadd.f32 %v1398, %v1566
        %v1568 = vpop.f32.mrf.mxu0
        %v1569 = vadd.f32 %v1400, %v1568
        %1570 = vmatmul.bf16.gmra.mxu0 %v965
        %v1571 = vpop.f32.mrf.mxu0
        %v1572 = vadd.f32 %v1403, %v1571
        %v1573 = vpop.f32.mrf.mxu0
        %v1574 = vadd.f32 %v1405, %v1573
        %1575 = vmatmul.bf16.gmra.mxu0 %v967
        %v1576 = vpop.f32.mrf.mxu0
        %v1577 = vadd.f32 %v1408, %v1576
        %v1578 = vpop.f32.mrf.mxu0
        %v1579 = vadd.f32 %v1410, %v1578
        %1580 = vmatmul.bf16.gmra.mxu0 %v969
        %v1581 = vpop.f32.mrf.mxu0
        %v1582 = vadd.f32 %v1413, %v1581
        %v1583 = vpop.f32.mrf.mxu0
        %v1584 = vadd.f32 %v1415, %v1583
        %1585 = vmatmul.bf16.gmra.mxu0 %v971
        %v1586 = vpop.f32.mrf.mxu0
        %v1587 = vadd.f32 %v1418, %v1586
        %v1588 = vpop.f32.mrf.mxu0
        %v1589 = vadd.f32 %v1420, %v1588
        %1590 = vmatmul.bf16.gmra.mxu0 %v973
        %v1591 = vpop.f32.mrf.mxu0
        %v1592 = vadd.f32 %v1423, %v1591
        %v1593 = vpop.f32.mrf.mxu0
        %v1594 = vadd.f32 %v1425, %v1593
        %1595 = vmatmul.bf16.gmra.mxu0 %v975
        %v1596 = vpop.f32.mrf.mxu0
        %v1597 = vadd.f32 %v1428, %v1596
        %v1598 = vpop.f32.mrf.mxu0
        %v1599 = vadd.f32 %v1430, %v1598
        %1600 = vmatmul.bf16.gmra.mxu0 %v977
        %v1601 = vpop.f32.mrf.mxu0
        %v1602 = vadd.f32 %v1433, %v1601
        %v1603 = vpop.f32.mrf.mxu0
        %v1604 = vadd.f32 %v1435, %v1603
        %1605 = vmatmul.bf16.gmra.mxu0 %v979
        %v1606 = vpop.f32.mrf.mxu0
        %v1607 = vadd.f32 %v1438, %v1606
        %v1608 = vpop.f32.mrf.mxu0
        %v1609 = vadd.f32 %v1440, %v1608
        %1610 = vmatmul.bf16.gmra.mxu0 %v981
        %v1611 = vpop.f32.mrf.mxu0
        %v1612 = vadd.f32 %v1443, %v1611
        %v1613 = vpop.f32.mrf.mxu0
        %v1614 = vadd.f32 %v1445, %v1613
        %1615 = vmatmul.bf16.gmra.mxu0 %v983
        %v1616 = vpop.f32.mrf.mxu0
        %v1617 = vadd.f32 %v1448, %v1616
        %v1618 = vpop.f32.mrf.mxu0
        %v1619 = vadd.f32 %v1450, %v1618
        %1620 = vmatmul.bf16.gmra.mxu0 %v985
        %v1621 = vpop.f32.mrf.mxu0
        %v1622 = vadd.f32 %v1453, %v1621
        %v1623 = vpop.f32.mrf.mxu0
        %v1624 = vadd.f32 %v1455, %v1623
        %1625 = vmatmul.bf16.gmra.mxu0 %v987
        %v1626 = vpop.f32.mrf.mxu0
        %v1627 = vadd.f32 %v1458, %v1626
        %v1628 = vpop.f32.mrf.mxu0
        %v1629 = vadd.f32 %v1460, %v1628
        %1630 = vmatmul.bf16.gmra.mxu0 %v989
        %v1631 = vpop.f32.mrf.mxu0
        %v1632 = vadd.f32 %v1463, %v1631
        %v1633 = vpop.f32.mrf.mxu0
        %v1634 = vadd.f32 %v1465, %v1633
        %1635 = vmatmul.bf16.gmra.mxu0 %v991
        %v1636 = vpop.f32.mrf.mxu0
        %v1637 = vadd.f32 %v1468, %v1636
        %v1638 = vpop.f32.mrf.mxu0
        %v1639 = vadd.f32 %v1470, %v1638
        %1640 = vmatmul.bf16.gmra.mxu0 %v993
        %v1641 = vpop.f32.mrf.mxu0
        %v1642 = vadd.f32 %v1473, %v1641
        %v1643 = vpop.f32.mrf.mxu0
        %v1644 = vadd.f32 %v1475, %v1643
        %1645 = vmatmul.bf16.gmra.mxu0 %v995
        %v1646 = vpop.f32.mrf.mxu0
        %v1647 = vadd.f32 %v1478, %v1646
        %v1648 = vpop.f32.mrf.mxu0
        %v1649 = vadd.f32 %v1480, %v1648
        %1650 = vmatmul.bf16.gmra.mxu0 %v997
        %v1651 = vpop.f32.mrf.mxu0
        %v1652 = vadd.f32 %v1483, %v1651
        %v1653 = vpop.f32.mrf.mxu0
        %v1654 = vadd.f32 %v1485, %v1653
        %1655 = vdwg.mxu0
        %1656 = vmatpush.bf16.msra.mxu0 %v1244
        %1657 = vmatpush.bf16.msra.mxu0 %v1241
        %1658 = vmatpush.bf16.msra.mxu0 %v1238
        %1659 = vmatpush.bf16.msra.mxu0 %v1235
        %1660 = vmatpush.bf16.msra.mxu0 %v1232
        %1661 = vmatpush.bf16.msra.mxu0 %v1229
        %1662 = vmatpush.bf16.msra.mxu0 %v1226
        %1663 = vmatpush.bf16.msra.mxu0 %v1223
        %1664 = vmatmul.bf16.gmra.mxu0 %v934
        %v1665 = vpop.f32.mrf.mxu0
        %v1666 = vadd.f32 0.0, %v1665
        %v1667 = vpop.f32.mrf.mxu0
        %v1668 = vadd.f32 0.0, %v1667
        %1669 = vmatmul.bf16.gmra.mxu0 %v936
        %v1670 = vpop.f32.mrf.mxu0
        %v1671 = vadd.f32 0.0, %v1670
        %v1672 = vpop.f32.mrf.mxu0
        %v1673 = vadd.f32 0.0, %v1672
        %1674 = vmatmul.bf16.gmra.mxu0 %v938
        %v1675 = vpop.f32.mrf.mxu0
        %v1676 = vadd.f32 0.0, %v1675
        %v1677 = vpop.f32.mrf.mxu0
        %v1678 = vadd.f32 0.0, %v1677
        %1679 = vmatmul.bf16.gmra.mxu0 %v940
        %v1680 = vpop.f32.mrf.mxu0
        %v1681 = vadd.f32 0.0, %v1680
        %v1682 = vpop.f32.mrf.mxu0
        %v1683 = vadd.f32 0.0, %v1682
        %1684 = vmatmul.bf16.gmra.mxu0 %v942
        %v1685 = vpop.f32.mrf.mxu0
        %v1686 = vadd.f32 0.0, %v1685
        %v1687 = vpop.f32.mrf.mxu0
        %v1688 = vadd.f32 0.0, %v1687
        %1689 = vmatmul.bf16.gmra.mxu0 %v944
        %v1690 = vpop.f32.mrf.mxu0
        %v1691 = vadd.f32 0.0, %v1690
        %v1692 = vpop.f32.mrf.mxu0
        %v1693 = vadd.f32 0.0, %v1692
        %1694 = vmatmul.bf16.gmra.mxu0 %v946
        %v1695 = vpop.f32.mrf.mxu0
        %v1696 = vadd.f32 0.0, %v1695
        %v1697 = vpop.f32.mrf.mxu0
        %v1698 = vadd.f32 0.0, %v1697
        %1699 = vmatmul.bf16.gmra.mxu0 %v948
        %v1700 = vpop.f32.mrf.mxu0
        %v1701 = vadd.f32 0.0, %v1700
        %v1702 = vpop.f32.mrf.mxu0
        %v1703 = vadd.f32 0.0, %v1702
        %1704 = vmatmul.bf16.gmra.mxu0 %v950
        %v1705 = vpop.f32.mrf.mxu0
        %v1706 = vadd.f32 0.0, %v1705
        %v1707 = vpop.f32.mrf.mxu0
        %v1708 = vadd.f32 0.0, %v1707
        %1709 = vmatmul.bf16.gmra.mxu0 %v952
        %v1710 = vpop.f32.mrf.mxu0
        %v1711 = vadd.f32 0.0, %v1710
        %v1712 = vpop.f32.mrf.mxu0
        %v1713 = vadd.f32 0.0, %v1712
        %1714 = vmatmul.bf16.gmra.mxu0 %v954
        %v1715 = vpop.f32.mrf.mxu0
        %v1716 = vadd.f32 0.0, %v1715
        %v1717 = vpop.f32.mrf.mxu0
        %v1718 = vadd.f32 0.0, %v1717
        %1719 = vmatmul.bf16.gmra.mxu0 %v956
        %v1720 = vpop.f32.mrf.mxu0
        %v1721 = vadd.f32 0.0, %v1720
        %v1722 = vpop.f32.mrf.mxu0
        %v1723 = vadd.f32 0.0, %v1722
        %1724 = vmatmul.bf16.gmra.mxu0 %v958
        %v1725 = vpop.f32.mrf.mxu0
        %v1726 = vadd.f32 0.0, %v1725
        %v1727 = vpop.f32.mrf.mxu0
        %v1728 = vadd.f32 0.0, %v1727
        %1729 = vmatmul.bf16.gmra.mxu0 %v960
        %v1730 = vpop.f32.mrf.mxu0
        %v1731 = vadd.f32 0.0, %v1730
        %v1732 = vpop.f32.mrf.mxu0
        %v1733 = vadd.f32 0.0, %v1732
        %1734 = vmatmul.bf16.gmra.mxu0 %v962
        %v1735 = vpop.f32.mrf.mxu0
        %v1736 = vadd.f32 0.0, %v1735
        %v1737 = vpop.f32.mrf.mxu0
        %v1738 = vadd.f32 0.0, %v1737
        %1739 = vmatmul.bf16.gmra.mxu0 %v964
        %v1740 = vpop.f32.mrf.mxu0
        %v1741 = vadd.f32 0.0, %v1740
        %v1742 = vpop.f32.mrf.mxu0
        %v1743 = vadd.f32 0.0, %v1742
        %1744 = vmatmul.bf16.gmra.mxu0 %v966
        %v1745 = vpop.f32.mrf.mxu0
        %v1746 = vadd.f32 0.0, %v1745
        %v1747 = vpop.f32.mrf.mxu0
        %v1748 = vadd.f32 0.0, %v1747
        %1749 = vmatmul.bf16.gmra.mxu0 %v968
        %v1750 = vpop.f32.mrf.mxu0
        %v1751 = vadd.f32 0.0, %v1750
        %v1752 = vpop.f32.mrf.mxu0
        %v1753 = vadd.f32 0.0, %v1752
        %1754 = vmatmul.bf16.gmra.mxu0 %v970
        %v1755 = vpop.f32.mrf.mxu0
        %v1756 = vadd.f32 0.0, %v1755
        %v1757 = vpop.f32.mrf.mxu0
        %v1758 = vadd.f32 0.0, %v1757
        %1759 = vmatmul.bf16.gmra.mxu0 %v972
        %v1760 = vpop.f32.mrf.mxu0
        %v1761 = vadd.f32 0.0, %v1760
        %v1762 = vpop.f32.mrf.mxu0
        %v1763 = vadd.f32 0.0, %v1762
        %1764 = vmatmul.bf16.gmra.mxu0 %v974
        %v1765 = vpop.f32.mrf.mxu0
        %v1766 = vadd.f32 0.0, %v1765
        %v1767 = vpop.f32.mrf.mxu0
        %v1768 = vadd.f32 0.0, %v1767
        %1769 = vmatmul.bf16.gmra.mxu0 %v976
        %v1770 = vpop.f32.mrf.mxu0
        %v1771 = vadd.f32 0.0, %v1770
        %v1772 = vpop.f32.mrf.mxu0
        %v1773 = vadd.f32 0.0, %v1772
        %1774 = vmatmul.bf16.gmra.mxu0 %v978
        %v1775 = vpop.f32.mrf.mxu0
        %v1776 = vadd.f32 0.0, %v1775
        %v1777 = vpop.f32.mrf.mxu0
        %v1778 = vadd.f32 0.0, %v1777
        %1779 = vmatmul.bf16.gmra.mxu0 %v980
        %v1780 = vpop.f32.mrf.mxu0
        %v1781 = vadd.f32 0.0, %v1780
        %v1782 = vpop.f32.mrf.mxu0
        %v1783 = vadd.f32 0.0, %v1782
        %1784 = vmatmul.bf16.gmra.mxu0 %v982
        %v1785 = vpop.f32.mrf.mxu0
        %v1786 = vadd.f32 0.0, %v1785
        %v1787 = vpop.f32.mrf.mxu0
        %v1788 = vadd.f32 0.0, %v1787
        %1789 = vmatmul.bf16.gmra.mxu0 %v984
        %v1790 = vpop.f32.mrf.mxu0
        %v1791 = vadd.f32 0.0, %v1790
        %v1792 = vpop.f32.mrf.mxu0
        %v1793 = vadd.f32 0.0, %v1792
        %1794 = vmatmul.bf16.gmra.mxu0 %v986
        %v1795 = vpop.f32.mrf.mxu0
        %v1796 = vadd.f32 0.0, %v1795
        %v1797 = vpop.f32.mrf.mxu0
        %v1798 = vadd.f32 0.0, %v1797
        %1799 = vmatmul.bf16.gmra.mxu0 %v988
        %v1800 = vpop.f32.mrf.mxu0
        %v1801 = vadd.f32 0.0, %v1800
        %v1802 = vpop.f32.mrf.mxu0
        %v1803 = vadd.f32 0.0, %v1802
        %1804 = vmatmul.bf16.gmra.mxu0 %v990
        %v1805 = vpop.f32.mrf.mxu0
        %v1806 = vadd.f32 0.0, %v1805
        %v1807 = vpop.f32.mrf.mxu0
        %v1808 = vadd.f32 0.0, %v1807
        %1809 = vmatmul.bf16.gmra.mxu0 %v992
        %v1810 = vpop.f32.mrf.mxu0
        %v1811 = vadd.f32 0.0, %v1810
        %v1812 = vpop.f32.mrf.mxu0
        %v1813 = vadd.f32 0.0, %v1812
        %1814 = vmatmul.bf16.gmra.mxu0 %v994
        %v1815 = vpop.f32.mrf.mxu0
        %v1816 = vadd.f32 0.0, %v1815
        %v1817 = vpop.f32.mrf.mxu0
        %v1818 = vadd.f32 0.0, %v1817
        %1819 = vmatmul.bf16.gmra.mxu0 %v996
        %v1820 = vpop.f32.mrf.mxu0
        %v1821 = vadd.f32 0.0, %v1820
        %v1822 = vpop.f32.mrf.mxu0
        %v1823 = vadd.f32 0.0, %v1822
        %1824 = vdwg.mxu0
        %1825 = vmatpush.bf16.msra.mxu0 %v1268
        %1826 = vmatpush.bf16.msra.mxu0 %v1265
        %1827 = vmatpush.bf16.msra.mxu0 %v1262
        %1828 = vmatpush.bf16.msra.mxu0 %v1259
        %1829 = vmatpush.bf16.msra.mxu0 %v1256
        %1830 = vmatpush.bf16.msra.mxu0 %v1253
        %1831 = vmatpush.bf16.msra.mxu0 %v1250
        %1832 = vmatpush.bf16.msra.mxu0 %v1247
        %1833 = vmatmul.bf16.gmra.mxu0 %v935
        %v1834 = vpop.f32.mrf.mxu0
        %v1835 = vadd.f32 %v1666, %v1834
        %v1836 = vpop.f32.mrf.mxu0
        %v1837 = vadd.f32 %v1668, %v1836
        %1838 = vmatmul.bf16.gmra.mxu0 %v937
        %v1839 = vpop.f32.mrf.mxu0
        %v1840 = vadd.f32 %v1671, %v1839
        %v1841 = vpop.f32.mrf.mxu0
        %v1842 = vadd.f32 %v1673, %v1841
        %1843 = vmatmul.bf16.gmra.mxu0 %v939
        %v1844 = vpop.f32.mrf.mxu0
        %v1845 = vadd.f32 %v1676, %v1844
        %v1846 = vpop.f32.mrf.mxu0
        %v1847 = vadd.f32 %v1678, %v1846
        %1848 = vmatmul.bf16.gmra.mxu0 %v941
        %v1849 = vpop.f32.mrf.mxu0
        %v1850 = vadd.f32 %v1681, %v1849
        %v1851 = vpop.f32.mrf.mxu0
        %v1852 = vadd.f32 %v1683, %v1851
        %1853 = vmatmul.bf16.gmra.mxu0 %v943
        %v1854 = vpop.f32.mrf.mxu0
        %v1855 = vadd.f32 %v1686, %v1854
        %v1856 = vpop.f32.mrf.mxu0
        %v1857 = vadd.f32 %v1688, %v1856
        %1858 = vmatmul.bf16.gmra.mxu0 %v945
        %v1859 = vpop.f32.mrf.mxu0
        %v1860 = vadd.f32 %v1691, %v1859
        %v1861 = vpop.f32.mrf.mxu0
        %v1862 = vadd.f32 %v1693, %v1861
        %1863 = vmatmul.bf16.gmra.mxu0 %v947
        %v1864 = vpop.f32.mrf.mxu0
        %v1865 = vadd.f32 %v1696, %v1864
        %v1866 = vpop.f32.mrf.mxu0
        %v1867 = vadd.f32 %v1698, %v1866
        %1868 = vmatmul.bf16.gmra.mxu0 %v949
        %v1869 = vpop.f32.mrf.mxu0
        %v1870 = vadd.f32 %v1701, %v1869
        %v1871 = vpop.f32.mrf.mxu0
        %v1872 = vadd.f32 %v1703, %v1871
        %1873 = vmatmul.bf16.gmra.mxu0 %v951
        %v1874 = vpop.f32.mrf.mxu0
        %v1875 = vadd.f32 %v1706, %v1874
        %v1876 = vpop.f32.mrf.mxu0
        %v1877 = vadd.f32 %v1708, %v1876
        %1878 = vmatmul.bf16.gmra.mxu0 %v953
        %v1879 = vpop.f32.mrf.mxu0
        %v1880 = vadd.f32 %v1711, %v1879
        %v1881 = vpop.f32.mrf.mxu0
        %v1882 = vadd.f32 %v1713, %v1881
        %1883 = vmatmul.bf16.gmra.mxu0 %v955
        %v1884 = vpop.f32.mrf.mxu0
        %v1885 = vadd.f32 %v1716, %v1884
        %v1886 = vpop.f32.mrf.mxu0
        %v1887 = vadd.f32 %v1718, %v1886
        %1888 = vmatmul.bf16.gmra.mxu0 %v957
        %v1889 = vpop.f32.mrf.mxu0
        %v1890 = vadd.f32 %v1721, %v1889
        %v1891 = vpop.f32.mrf.mxu0
        %v1892 = vadd.f32 %v1723, %v1891
        %1893 = vmatmul.bf16.gmra.mxu0 %v959
        %v1894 = vpop.f32.mrf.mxu0
        %v1895 = vadd.f32 %v1726, %v1894
        %v1896 = vpop.f32.mrf.mxu0
        %v1897 = vadd.f32 %v1728, %v1896
        %1898 = vmatmul.bf16.gmra.mxu0 %v961
        %v1899 = vpop.f32.mrf.mxu0
        %v1900 = vadd.f32 %v1731, %v1899
        %v1901 = vpop.f32.mrf.mxu0
        %v1902 = vadd.f32 %v1733, %v1901
        %1903 = vmatmul.bf16.gmra.mxu0 %v963
        %v1904 = vpop.f32.mrf.mxu0
        %v1905 = vadd.f32 %v1736, %v1904
        %v1906 = vpop.f32.mrf.mxu0
        %v1907 = vadd.f32 %v1738, %v1906
        %1908 = vmatmul.bf16.gmra.mxu0 %v965
        %v1909 = vpop.f32.mrf.mxu0
        %v1910 = vadd.f32 %v1741, %v1909
        %v1911 = vpop.f32.mrf.mxu0
        %v1912 = vadd.f32 %v1743, %v1911
        %1913 = vmatmul.bf16.gmra.mxu0 %v967
        %v1914 = vpop.f32.mrf.mxu0
        %v1915 = vadd.f32 %v1746, %v1914
        %v1916 = vpop.f32.mrf.mxu0
        %v1917 = vadd.f32 %v1748, %v1916
        %1918 = vmatmul.bf16.gmra.mxu0 %v969
        %v1919 = vpop.f32.mrf.mxu0
        %v1920 = vadd.f32 %v1751, %v1919
        %v1921 = vpop.f32.mrf.mxu0
        %v1922 = vadd.f32 %v1753, %v1921
        %1923 = vmatmul.bf16.gmra.mxu0 %v971
        %v1924 = vpop.f32.mrf.mxu0
        %v1925 = vadd.f32 %v1756, %v1924
        %v1926 = vpop.f32.mrf.mxu0
        %v1927 = vadd.f32 %v1758, %v1926
        %1928 = vmatmul.bf16.gmra.mxu0 %v973
        %v1929 = vpop.f32.mrf.mxu0
        %v1930 = vadd.f32 %v1761, %v1929
        %v1931 = vpop.f32.mrf.mxu0
        %v1932 = vadd.f32 %v1763, %v1931
        %1933 = vmatmul.bf16.gmra.mxu0 %v975
        %v1934 = vpop.f32.mrf.mxu0
        %v1935 = vadd.f32 %v1766, %v1934
        %v1936 = vpop.f32.mrf.mxu0
        %v1937 = vadd.f32 %v1768, %v1936
        %1938 = vmatmul.bf16.gmra.mxu0 %v977
        %v1939 = vpop.f32.mrf.mxu0
        %v1940 = vadd.f32 %v1771, %v1939
        %v1941 = vpop.f32.mrf.mxu0
        %v1942 = vadd.f32 %v1773, %v1941
        %1943 = vmatmul.bf16.gmra.mxu0 %v979
        %v1944 = vpop.f32.mrf.mxu0
        %v1945 = vadd.f32 %v1776, %v1944
        %v1946 = vpop.f32.mrf.mxu0
        %v1947 = vadd.f32 %v1778, %v1946
        %1948 = vmatmul.bf16.gmra.mxu0 %v981
        %v1949 = vpop.f32.mrf.mxu0
        %v1950 = vadd.f32 %v1781, %v1949
        %v1951 = vpop.f32.mrf.mxu0
        %v1952 = vadd.f32 %v1783, %v1951
        %1953 = vmatmul.bf16.gmra.mxu0 %v983
        %v1954 = vpop.f32.mrf.mxu0
        %v1955 = vadd.f32 %v1786, %v1954
        %v1956 = vpop.f32.mrf.mxu0
        %v1957 = vadd.f32 %v1788, %v1956
        %1958 = vmatmul.bf16.gmra.mxu0 %v985
        %v1959 = vpop.f32.mrf.mxu0
        %v1960 = vadd.f32 %v1791, %v1959
        %v1961 = vpop.f32.mrf.mxu0
        %v1962 = vadd.f32 %v1793, %v1961
        %1963 = vmatmul.bf16.gmra.mxu0 %v987
        %v1964 = vpop.f32.mrf.mxu0
        %v1965 = vadd.f32 %v1796, %v1964
        %v1966 = vpop.f32.mrf.mxu0
        %v1967 = vadd.f32 %v1798, %v1966
        %1968 = vmatmul.bf16.gmra.mxu0 %v989
        %v1969 = vpop.f32.mrf.mxu0
        %v1970 = vadd.f32 %v1801, %v1969
        %v1971 = vpop.f32.mrf.mxu0
        %v1972 = vadd.f32 %v1803, %v1971
        %1973 = vmatmul.bf16.gmra.mxu0 %v991
        %v1974 = vpop.f32.mrf.mxu0
        %v1975 = vadd.f32 %v1806, %v1974
        %v1976 = vpop.f32.mrf.mxu0
        %v1977 = vadd.f32 %v1808, %v1976
        %1978 = vmatmul.bf16.gmra.mxu0 %v993
        %v1979 = vpop.f32.mrf.mxu0
        %v1980 = vadd.f32 %v1811, %v1979
        %v1981 = vpop.f32.mrf.mxu0
        %v1982 = vadd.f32 %v1813, %v1981
        %1983 = vmatmul.bf16.gmra.mxu0 %v995
        %v1984 = vpop.f32.mrf.mxu0
        %v1985 = vadd.f32 %v1816, %v1984
        %v1986 = vpop.f32.mrf.mxu0
        %v1987 = vadd.f32 %v1818, %v1986
        %1988 = vmatmul.bf16.gmra.mxu0 %v997
        %v1989 = vpop.f32.mrf.mxu0
        %v1990 = vadd.f32 %v1821, %v1989
        %v1991 = vpop.f32.mrf.mxu0
        %v1992 = vadd.f32 %v1823, %v1991
        %1993 = vdwg.mxu0
        %1994 = vmatpush.bf16.msra.mxu0 %v1245
        %1995 = vmatpush.bf16.msra.mxu0 %v1242
        %1996 = vmatpush.bf16.msra.mxu0 %v1239
        %1997 = vmatpush.bf16.msra.mxu0 %v1236
        %1998 = vmatpush.bf16.msra.mxu0 %v1233
        %1999 = vmatpush.bf16.msra.mxu0 %v1230
        %2000 = vmatpush.bf16.msra.mxu0 %v1227
        %2001 = vmatpush.bf16.msra.mxu0 %v1224
        %2002 = vmatmul.bf16.gmra.mxu0 %v934
        %v2003 = vpop.f32.mrf.mxu0
        %v2004 = vadd.f32 0.0, %v2003
        %v2005 = vpop.f32.mrf.mxu0
        %v2006 = vadd.f32 0.0, %v2005
        %2007 = vmatmul.bf16.gmra.mxu0 %v936
        %v2008 = vpop.f32.mrf.mxu0
        %v2009 = vadd.f32 0.0, %v2008
        %v2010 = vpop.f32.mrf.mxu0
        %v2011 = vadd.f32 0.0, %v2010
        %2012 = vmatmul.bf16.gmra.mxu0 %v938
        %v2013 = vpop.f32.mrf.mxu0
        %v2014 = vadd.f32 0.0, %v2013
        %v2015 = vpop.f32.mrf.mxu0
        %v2016 = vadd.f32 0.0, %v2015
        %2017 = vmatmul.bf16.gmra.mxu0 %v940
        %v2018 = vpop.f32.mrf.mxu0
        %v2019 = vadd.f32 0.0, %v2018
        %v2020 = vpop.f32.mrf.mxu0
        %v2021 = vadd.f32 0.0, %v2020
        %2022 = vmatmul.bf16.gmra.mxu0 %v942
        %v2023 = vpop.f32.mrf.mxu0
        %v2024 = vadd.f32 0.0, %v2023
        %v2025 = vpop.f32.mrf.mxu0
        %v2026 = vadd.f32 0.0, %v2025
        %2027 = vmatmul.bf16.gmra.mxu0 %v944
        %v2028 = vpop.f32.mrf.mxu0
        %v2029 = vadd.f32 0.0, %v2028
        %v2030 = vpop.f32.mrf.mxu0
        %v2031 = vadd.f32 0.0, %v2030
        %2032 = vmatmul.bf16.gmra.mxu0 %v946
        %v2033 = vpop.f32.mrf.mxu0
        %v2034 = vadd.f32 0.0, %v2033
        %v2035 = vpop.f32.mrf.mxu0
        %v2036 = vadd.f32 0.0, %v2035
        %2037 = vmatmul.bf16.gmra.mxu0 %v948
        %v2038 = vpop.f32.mrf.mxu0
        %v2039 = vadd.f32 0.0, %v2038
        %v2040 = vpop.f32.mrf.mxu0
        %v2041 = vadd.f32 0.0, %v2040
        %2042 = vmatmul.bf16.gmra.mxu0 %v950
        %v2043 = vpop.f32.mrf.mxu0
        %v2044 = vadd.f32 0.0, %v2043
        %v2045 = vpop.f32.mrf.mxu0
        %v2046 = vadd.f32 0.0, %v2045
        %2047 = vmatmul.bf16.gmra.mxu0 %v952
        %v2048 = vpop.f32.mrf.mxu0
        %v2049 = vadd.f32 0.0, %v2048
        %v2050 = vpop.f32.mrf.mxu0
        %v2051 = vadd.f32 0.0, %v2050
        %2052 = vmatmul.bf16.gmra.mxu0 %v954
        %v2053 = vpop.f32.mrf.mxu0
        %v2054 = vadd.f32 0.0, %v2053
        %v2055 = vpop.f32.mrf.mxu0
        %v2056 = vadd.f32 0.0, %v2055
        %2057 = vmatmul.bf16.gmra.mxu0 %v956
        %v2058 = vpop.f32.mrf.mxu0
        %v2059 = vadd.f32 0.0, %v2058
        %v2060 = vpop.f32.mrf.mxu0
        %v2061 = vadd.f32 0.0, %v2060
        %2062 = vmatmul.bf16.gmra.mxu0 %v958
        %v2063 = vpop.f32.mrf.mxu0
        %v2064 = vadd.f32 0.0, %v2063
        %v2065 = vpop.f32.mrf.mxu0
        %v2066 = vadd.f32 0.0, %v2065
        %2067 = vmatmul.bf16.gmra.mxu0 %v960
        %v2068 = vpop.f32.mrf.mxu0
        %v2069 = vadd.f32 0.0, %v2068
        %v2070 = vpop.f32.mrf.mxu0
        %v2071 = vadd.f32 0.0, %v2070
        %2072 = vmatmul.bf16.gmra.mxu0 %v962
        %v2073 = vpop.f32.mrf.mxu0
        %v2074 = vadd.f32 0.0, %v2073
        %v2075 = vpop.f32.mrf.mxu0
        %v2076 = vadd.f32 0.0, %v2075
        %2077 = vmatmul.bf16.gmra.mxu0 %v964
        %v2078 = vpop.f32.mrf.mxu0
        %v2079 = vadd.f32 0.0, %v2078
        %v2080 = vpop.f32.mrf.mxu0
        %v2081 = vadd.f32 0.0, %v2080
        %2082 = vmatmul.bf16.gmra.mxu0 %v966
        %v2083 = vpop.f32.mrf.mxu0
        %v2084 = vadd.f32 0.0, %v2083
        %v2085 = vpop.f32.mrf.mxu0
        %v2086 = vadd.f32 0.0, %v2085
        %2087 = vmatmul.bf16.gmra.mxu0 %v968
        %v2088 = vpop.f32.mrf.mxu0
        %v2089 = vadd.f32 0.0, %v2088
        %v2090 = vpop.f32.mrf.mxu0
        %v2091 = vadd.f32 0.0, %v2090
        %2092 = vmatmul.bf16.gmra.mxu0 %v970
        %v2093 = vpop.f32.mrf.mxu0
        %v2094 = vadd.f32 0.0, %v2093
        %v2095 = vpop.f32.mrf.mxu0
        %v2096 = vadd.f32 0.0, %v2095
        %2097 = vmatmul.bf16.gmra.mxu0 %v972
        %v2098 = vpop.f32.mrf.mxu0
        %v2099 = vadd.f32 0.0, %v2098
        %v2100 = vpop.f32.mrf.mxu0
        %v2101 = vadd.f32 0.0, %v2100
        %2102 = vmatmul.bf16.gmra.mxu0 %v974
        %v2103 = vpop.f32.mrf.mxu0
        %v2104 = vadd.f32 0.0, %v2103
        %v2105 = vpop.f32.mrf.mxu0
        %v2106 = vadd.f32 0.0, %v2105
        %2107 = vmatmul.bf16.gmra.mxu0 %v976
        %v2108 = vpop.f32.mrf.mxu0
        %v2109 = vadd.f32 0.0, %v2108
        %v2110 = vpop.f32.mrf.mxu0
        %v2111 = vadd.f32 0.0, %v2110
        %2112 = vmatmul.bf16.gmra.mxu0 %v978
        %v2113 = vpop.f32.mrf.mxu0
        %v2114 = vadd.f32 0.0, %v2113
        %v2115 = vpop.f32.mrf.mxu0
        %v2116 = vadd.f32 0.0, %v2115
        %2117 = vmatmul.bf16.gmra.mxu0 %v980
        %v2118 = vpop.f32.mrf.mxu0
        %v2119 = vadd.f32 0.0, %v2118
        %v2120 = vpop.f32.mrf.mxu0
        %v2121 = vadd.f32 0.0, %v2120
        %2122 = vmatmul.bf16.gmra.mxu0 %v982
        %v2123 = vpop.f32.mrf.mxu0
        %v2124 = vadd.f32 0.0, %v2123
        %v2125 = vpop.f32.mrf.mxu0
        %v2126 = vadd.f32 0.0, %v2125
        %2127 = vmatmul.bf16.gmra.mxu0 %v984
        %v2128 = vpop.f32.mrf.mxu0
        %v2129 = vadd.f32 0.0, %v2128
        %v2130 = vpop.f32.mrf.mxu0
        %v2131 = vadd.f32 0.0, %v2130
        %2132 = vmatmul.bf16.gmra.mxu0 %v986
        %v2133 = vpop.f32.mrf.mxu0
        %v2134 = vadd.f32 0.0, %v2133
        %v2135 = vpop.f32.mrf.mxu0
        %v2136 = vadd.f32 0.0, %v2135
        %2137 = vmatmul.bf16.gmra.mxu0 %v988
        %v2138 = vpop.f32.mrf.mxu0
        %v2139 = vadd.f32 0.0, %v2138
        %v2140 = vpop.f32.mrf.mxu0
        %v2141 = vadd.f32 0.0, %v2140
        %2142 = vmatmul.bf16.gmra.mxu0 %v990
        %v2143 = vpop.f32.mrf.mxu0
        %v2144 = vadd.f32 0.0, %v2143
        %v2145 = vpop.f32.mrf.mxu0
        %v2146 = vadd.f32 0.0, %v2145
        %2147 = vmatmul.bf16.gmra.mxu0 %v992
        %v2148 = vpop.f32.mrf.mxu0
        %v2149 = vadd.f32 0.0, %v2148
        %v2150 = vpop.f32.mrf.mxu0
        %v2151 = vadd.f32 0.0, %v2150
        %2152 = vmatmul.bf16.gmra.mxu0 %v994
        %v2153 = vpop.f32.mrf.mxu0
        %v2154 = vadd.f32 0.0, %v2153
        %v2155 = vpop.f32.mrf.mxu0
        %v2156 = vadd.f32 0.0, %v2155
        %2157 = vmatmul.bf16.gmra.mxu0 %v996
        %v2158 = vpop.f32.mrf.mxu0
        %v2159 = vadd.f32 0.0, %v2158
        %v2160 = vpop.f32.mrf.mxu0
        %v2161 = vadd.f32 0.0, %v2160
        %2162 = vdwg.mxu0
        %2163 = vmatpush.bf16.msra.mxu0 %v1269
        %2164 = vmatpush.bf16.msra.mxu0 %v1266
        %2165 = vmatpush.bf16.msra.mxu0 %v1263
        %2166 = vmatpush.bf16.msra.mxu0 %v1260
        %2167 = vmatpush.bf16.msra.mxu0 %v1257
        %2168 = vmatpush.bf16.msra.mxu0 %v1254
        %2169 = vmatpush.bf16.msra.mxu0 %v1251
        %2170 = vmatpush.bf16.msra.mxu0 %v1248
        %2171 = vmatmul.bf16.gmra.mxu0 %v935
        %v2172 = vpop.f32.mrf.mxu0
        %v2173 = vadd.f32 %v2004, %v2172
        %v2174 = vpop.f32.mrf.mxu0
        %v2175 = vadd.f32 %v2006, %v2174
        %2176 = vmatmul.bf16.gmra.mxu0 %v937
        %v2177 = vpop.f32.mrf.mxu0
        %v2178 = vadd.f32 %v2009, %v2177
        %v2179 = vpop.f32.mrf.mxu0
        %v2180 = vadd.f32 %v2011, %v2179
        %2181 = vmatmul.bf16.gmra.mxu0 %v939
        %v2182 = vpop.f32.mrf.mxu0
        %v2183 = vadd.f32 %v2014, %v2182
        %v2184 = vpop.f32.mrf.mxu0
        %v2185 = vadd.f32 %v2016, %v2184
        %2186 = vmatmul.bf16.gmra.mxu0 %v941
        %v2187 = vpop.f32.mrf.mxu0
        %v2188 = vadd.f32 %v2019, %v2187
        %v2189 = vpop.f32.mrf.mxu0
        %v2190 = vadd.f32 %v2021, %v2189
        %2191 = vmatmul.bf16.gmra.mxu0 %v943
        %v2192 = vpop.f32.mrf.mxu0
        %v2193 = vadd.f32 %v2024, %v2192
        %v2194 = vpop.f32.mrf.mxu0
        %v2195 = vadd.f32 %v2026, %v2194
        %2196 = vmatmul.bf16.gmra.mxu0 %v945
        %v2197 = vpop.f32.mrf.mxu0
        %v2198 = vadd.f32 %v2029, %v2197
        %v2199 = vpop.f32.mrf.mxu0
        %v2200 = vadd.f32 %v2031, %v2199
        %2201 = vmatmul.bf16.gmra.mxu0 %v947
        %v2202 = vpop.f32.mrf.mxu0
        %v2203 = vadd.f32 %v2034, %v2202
        %v2204 = vpop.f32.mrf.mxu0
        %v2205 = vadd.f32 %v2036, %v2204
        %2206 = vmatmul.bf16.gmra.mxu0 %v949
        %v2207 = vpop.f32.mrf.mxu0
        %v2208 = vadd.f32 %v2039, %v2207
        %v2209 = vpop.f32.mrf.mxu0
        %v2210 = vadd.f32 %v2041, %v2209
        %2211 = vmatmul.bf16.gmra.mxu0 %v951
        %v2212 = vpop.f32.mrf.mxu0
        %v2213 = vadd.f32 %v2044, %v2212
        %v2214 = vpop.f32.mrf.mxu0
        %v2215 = vadd.f32 %v2046, %v2214
        %2216 = vmatmul.bf16.gmra.mxu0 %v953
        %v2217 = vpop.f32.mrf.mxu0
        %v2218 = vadd.f32 %v2049, %v2217
        %v2219 = vpop.f32.mrf.mxu0
        %v2220 = vadd.f32 %v2051, %v2219
        %2221 = vmatmul.bf16.gmra.mxu0 %v955
        %v2222 = vpop.f32.mrf.mxu0
        %v2223 = vadd.f32 %v2054, %v2222
        %v2224 = vpop.f32.mrf.mxu0
        %v2225 = vadd.f32 %v2056, %v2224
        %2226 = vmatmul.bf16.gmra.mxu0 %v957
        %v2227 = vpop.f32.mrf.mxu0
        %v2228 = vadd.f32 %v2059, %v2227
        %v2229 = vpop.f32.mrf.mxu0
        %v2230 = vadd.f32 %v2061, %v2229
        %2231 = vmatmul.bf16.gmra.mxu0 %v959
        %v2232 = vpop.f32.mrf.mxu0
        %v2233 = vadd.f32 %v2064, %v2232
        %v2234 = vpop.f32.mrf.mxu0
        %v2235 = vadd.f32 %v2066, %v2234
        %2236 = vmatmul.bf16.gmra.mxu0 %v961
        %v2237 = vpop.f32.mrf.mxu0
        %v2238 = vadd.f32 %v2069, %v2237
        %v2239 = vpop.f32.mrf.mxu0
        %v2240 = vadd.f32 %v2071, %v2239
        %2241 = vmatmul.bf16.gmra.mxu0 %v963
        %v2242 = vpop.f32.mrf.mxu0
        %v2243 = vadd.f32 %v2074, %v2242
        %v2244 = vpop.f32.mrf.mxu0
        %v2245 = vadd.f32 %v2076, %v2244
        %2246 = vmatmul.bf16.gmra.mxu0 %v965
        %v2247 = vpop.f32.mrf.mxu0
        %v2248 = vadd.f32 %v2079, %v2247
        %v2249 = vpop.f32.mrf.mxu0
        %v2250 = vadd.f32 %v2081, %v2249
        %2251 = vmatmul.bf16.gmra.mxu0 %v967
        %v2252 = vpop.f32.mrf.mxu0
        %v2253 = vadd.f32 %v2084, %v2252
        %v2254 = vpop.f32.mrf.mxu0
        %v2255 = vadd.f32 %v2086, %v2254
        %2256 = vmatmul.bf16.gmra.mxu0 %v969
        %v2257 = vpop.f32.mrf.mxu0
        %v2258 = vadd.f32 %v2089, %v2257
        %v2259 = vpop.f32.mrf.mxu0
        %v2260 = vadd.f32 %v2091, %v2259
        %2261 = vmatmul.bf16.gmra.mxu0 %v971
        %v2262 = vpop.f32.mrf.mxu0
        %v2263 = vadd.f32 %v2094, %v2262
        %v2264 = vpop.f32.mrf.mxu0
        %v2265 = vadd.f32 %v2096, %v2264
        %2266 = vmatmul.bf16.gmra.mxu0 %v973
        %v2267 = vpop.f32.mrf.mxu0
        %v2268 = vadd.f32 %v2099, %v2267
        %v2269 = vpop.f32.mrf.mxu0
        %v2270 = vadd.f32 %v2101, %v2269
        %2271 = vmatmul.bf16.gmra.mxu0 %v975
        %v2272 = vpop.f32.mrf.mxu0
        %v2273 = vadd.f32 %v2104, %v2272
        %v2274 = vpop.f32.mrf.mxu0
        %v2275 = vadd.f32 %v2106, %v2274
        %2276 = vmatmul.bf16.gmra.mxu0 %v977
        %v2277 = vpop.f32.mrf.mxu0
        %v2278 = vadd.f32 %v2109, %v2277
        %v2279 = vpop.f32.mrf.mxu0
        %v2280 = vadd.f32 %v2111, %v2279
        %2281 = vmatmul.bf16.gmra.mxu0 %v979
        %v2282 = vpop.f32.mrf.mxu0
        %v2283 = vadd.f32 %v2114, %v2282
        %v2284 = vpop.f32.mrf.mxu0
        %v2285 = vadd.f32 %v2116, %v2284
        %2286 = vmatmul.bf16.gmra.mxu0 %v981
        %v2287 = vpop.f32.mrf.mxu0
        %v2288 = vadd.f32 %v2119, %v2287
        %v2289 = vpop.f32.mrf.mxu0
        %v2290 = vadd.f32 %v2121, %v2289
        %2291 = vmatmul.bf16.gmra.mxu0 %v983
        %v2292 = vpop.f32.mrf.mxu0
        %v2293 = vadd.f32 %v2124, %v2292
        %v2294 = vpop.f32.mrf.mxu0
        %v2295 = vadd.f32 %v2126, %v2294
        %2296 = vmatmul.bf16.gmra.mxu0 %v985
        %v2297 = vpop.f32.mrf.mxu0
        %v2298 = vadd.f32 %v2129, %v2297
        %v2299 = vpop.f32.mrf.mxu0
        %v2300 = vadd.f32 %v2131, %v2299
        %2301 = vmatmul.bf16.gmra.mxu0 %v987
        %v2302 = vpop.f32.mrf.mxu0
        %v2303 = vadd.f32 %v2134, %v2302
        %v2304 = vpop.f32.mrf.mxu0
        %v2305 = vadd.f32 %v2136, %v2304
        %2306 = vmatmul.bf16.gmra.mxu0 %v989
        %v2307 = vpop.f32.mrf.mxu0
        %v2308 = vadd.f32 %v2139, %v2307
        %v2309 = vpop.f32.mrf.mxu0
        %v2310 = vadd.f32 %v2141, %v2309
        %2311 = vmatmul.bf16.gmra.mxu0 %v991
        %v2312 = vpop.f32.mrf.mxu0
        %v2313 = vadd.f32 %v2144, %v2312
        %v2314 = vpop.f32.mrf.mxu0
        %v2315 = vadd.f32 %v2146, %v2314
        %2316 = vmatmul.bf16.gmra.mxu0 %v993
        %v2317 = vpop.f32.mrf.mxu0
        %v2318 = vadd.f32 %v2149, %v2317
        %v2319 = vpop.f32.mrf.mxu0
        %v2320 = vadd.f32 %v2151, %v2319
        %2321 = vmatmul.bf16.gmra.mxu0 %v995
        %v2322 = vpop.f32.mrf.mxu0
        %v2323 = vadd.f32 %v2154, %v2322
        %v2324 = vpop.f32.mrf.mxu0
        %v2325 = vadd.f32 %v2156, %v2324
        %2326 = vmatmul.bf16.gmra.mxu0 %v997
        %v2327 = vpop.f32.mrf.mxu0
        %v2328 = vadd.f32 %v2159, %v2327
        %v2329 = vpop.f32.mrf.mxu0
        %v2330 = vadd.f32 %v2161, %v2329
        %2331 = vdwg.mxu0
        %v2332 = vadd.f32 %v422, %v1497
        %v2333 = vadd.f32 %v423, %v1835
        %v2334 = vadd.f32 %v424, %v2173
        %v2335 = vadd.f32 %v425, %v1499
        %v2336 = vadd.f32 %v426, %v1837
        %v2337 = vadd.f32 %v427, %v2175
        %v2338 = vadd.f32 %v428, %v1502
        %v2339 = vadd.f32 %v429, %v1840
        %v2340 = vadd.f32 %v430, %v2178
        %v2341 = vadd.f32 %v431, %v1504
        %v2342 = vadd.f32 %v432, %v1842
        %v2343 = vadd.f32 %v433, %v2180
        %v2344 = vadd.f32 %v434, %v1507
        %v2345 = vadd.f32 %v435, %v1845
        %v2346 = vadd.f32 %v436, %v2183
        %v2347 = vadd.f32 %v437, %v1509
        %v2348 = vadd.f32 %v438, %v1847
        %v2349 = vadd.f32 %v439, %v2185
        %v2350 = vadd.f32 %v440, %v1512
        %v2351 = vadd.f32 %v441, %v1850
        %v2352 = vadd.f32 %v442, %v2188
        %v2353 = vadd.f32 %v443, %v1514
        %v2354 = vadd.f32 %v444, %v1852
        %v2355 = vadd.f32 %v445, %v2190
        %v2356 = vadd.f32 %v446, %v1517
        %v2357 = vadd.f32 %v447, %v1855
        %v2358 = vadd.f32 %v448, %v2193
        %v2359 = vadd.f32 %v449, %v1519
        %v2360 = vadd.f32 %v450, %v1857
        %v2361 = vadd.f32 %v451, %v2195
        %v2362 = vadd.f32 %v452, %v1522
        %v2363 = vadd.f32 %v453, %v1860
        %v2364 = vadd.f32 %v454, %v2198
        %v2365 = vadd.f32 %v455, %v1524
        %v2366 = vadd.f32 %v456, %v1862
        %v2367 = vadd.f32 %v457, %v2200
        %v2368 = vadd.f32 %v458, %v1527
        %v2369 = vadd.f32 %v459, %v1865
        %v2370 = vadd.f32 %v460, %v2203
        %v2371 = vadd.f32 %v461, %v1529
        %v2372 = vadd.f32 %v462, %v1867
        %v2373 = vadd.f32 %v463, %v2205
        %v2374 = vadd.f32 %v464, %v1532
        %v2375 = vadd.f32 %v465, %v1870
        %v2376 = vadd.f32 %v466, %v2208
        %v2377 = vadd.f32 %v467, %v1534
        %v2378 = vadd.f32 %v468, %v1872
        %v2379 = vadd.f32 %v469, %v2210
        %v2380 = vadd.f32 %v470, %v1537
        %v2381 = vadd.f32 %v471, %v1875
        %v2382 = vadd.f32 %v472, %v2213
        %v2383 = vadd.f32 %v473, %v1539
        %v2384 = vadd.f32 %v474, %v1877
        %v2385 = vadd.f32 %v475, %v2215
        %v2386 = vadd.f32 %v476, %v1542
        %v2387 = vadd.f32 %v477, %v1880
        %v2388 = vadd.f32 %v478, %v2218
        %v2389 = vadd.f32 %v479, %v1544
        %v2390 = vadd.f32 %v480, %v1882
        %v2391 = vadd.f32 %v481, %v2220
        %v2392 = vadd.f32 %v482, %v1547
        %v2393 = vadd.f32 %v483, %v1885
        %v2394 = vadd.f32 %v484, %v2223
        %v2395 = vadd.f32 %v485, %v1549
        %v2396 = vadd.f32 %v486, %v1887
        %v2397 = vadd.f32 %v487, %v2225
        %v2398 = vadd.f32 %v488, %v1552
        %v2399 = vadd.f32 %v489, %v1890
        %v2400 = vadd.f32 %v490, %v2228
        %v2401 = vadd.f32 %v491, %v1554
        %v2402 = vadd.f32 %v492, %v1892
        %v2403 = vadd.f32 %v493, %v2230
        %v2404 = vadd.f32 %v494, %v1557
        %v2405 = vadd.f32 %v495, %v1895
        %v2406 = vadd.f32 %v496, %v2233
        %v2407 = vadd.f32 %v497, %v1559
        %v2408 = vadd.f32 %v498, %v1897
        %v2409 = vadd.f32 %v499, %v2235
        %v2410 = vadd.f32 %v500, %v1562
        %v2411 = vadd.f32 %v501, %v1900
        %v2412 = vadd.f32 %v502, %v2238
        %v2413 = vadd.f32 %v503, %v1564
        %v2414 = vadd.f32 %v504, %v1902
        %v2415 = vadd.f32 %v505, %v2240
        %v2416 = vadd.f32 %v506, %v1567
        %v2417 = vadd.f32 %v507, %v1905
        %v2418 = vadd.f32 %v508, %v2243
        %v2419 = vadd.f32 %v509, %v1569
        %v2420 = vadd.f32 %v510, %v1907
        %v2421 = vadd.f32 %v511, %v2245
        %v2422 = vadd.f32 %v512, %v1572
        %v2423 = vadd.f32 %v513, %v1910
        %v2424 = vadd.f32 %v514, %v2248
        %v2425 = vadd.f32 %v515, %v1574
        %v2426 = vadd.f32 %v516, %v1912
        %v2427 = vadd.f32 %v517, %v2250
        %v2428 = vadd.f32 %v518, %v1577
        %v2429 = vadd.f32 %v519, %v1915
        %v2430 = vadd.f32 %v520, %v2253
        %v2431 = vadd.f32 %v521, %v1579
        %v2432 = vadd.f32 %v522, %v1917
        %v2433 = vadd.f32 %v523, %v2255
        %v2434 = vadd.f32 %v524, %v1582
        %v2435 = vadd.f32 %v525, %v1920
        %v2436 = vadd.f32 %v526, %v2258
        %v2437 = vadd.f32 %v527, %v1584
        %v2438 = vadd.f32 %v528, %v1922
        %v2439 = vadd.f32 %v529, %v2260
        %v2440 = vadd.f32 %v530, %v1587
        %v2441 = vadd.f32 %v531, %v1925
        %v2442 = vadd.f32 %v532, %v2263
        %v2443 = vadd.f32 %v533, %v1589
        %v2444 = vadd.f32 %v534, %v1927
        %v2445 = vadd.f32 %v535, %v2265
        %v2446 = vadd.f32 %v536, %v1592
        %v2447 = vadd.f32 %v537, %v1930
        %v2448 = vadd.f32 %v538, %v2268
        %v2449 = vadd.f32 %v539, %v1594
        %v2450 = vadd.f32 %v540, %v1932
        %v2451 = vadd.f32 %v541, %v2270
        %v2452 = vadd.f32 %v542, %v1597
        %v2453 = vadd.f32 %v543, %v1935
        %v2454 = vadd.f32 %v544, %v2273
        %v2455 = vadd.f32 %v545, %v1599
        %v2456 = vadd.f32 %v546, %v1937
        %v2457 = vadd.f32 %v547, %v2275
        %v2458 = vadd.f32 %v548, %v1602
        %v2459 = vadd.f32 %v549, %v1940
        %v2460 = vadd.f32 %v550, %v2278
        %v2461 = vadd.f32 %v551, %v1604
        %v2462 = vadd.f32 %v552, %v1942
        %v2463 = vadd.f32 %v553, %v2280
        %v2464 = vadd.f32 %v554, %v1607
        %v2465 = vadd.f32 %v555, %v1945
        %v2466 = vadd.f32 %v556, %v2283
        %v2467 = vadd.f32 %v557, %v1609
        %v2468 = vadd.f32 %v558, %v1947
        %v2469 = vadd.f32 %v559, %v2285
        %v2470 = vadd.f32 %v560, %v1612
        %v2471 = vadd.f32 %v561, %v1950
        %v2472 = vadd.f32 %v562, %v2288
        %v2473 = vadd.f32 %v563, %v1614
        %v2474 = vadd.f32 %v564, %v1952
        %v2475 = vadd.f32 %v565, %v2290
        %v2476 = vadd.f32 %v566, %v1617
        %v2477 = vadd.f32 %v567, %v1955
        %v2478 = vadd.f32 %v568, %v2293
        %v2479 = vadd.f32 %v569, %v1619
        %v2480 = vadd.f32 %v570, %v1957
        %v2481 = vadd.f32 %v571, %v2295
        %v2482 = vadd.f32 %v572, %v1622
        %v2483 = vadd.f32 %v573, %v1960
        %v2484 = vadd.f32 %v574, %v2298
        %v2485 = vadd.f32 %v575, %v1624
        %v2486 = vadd.f32 %v576, %v1962
        %v2487 = vadd.f32 %v577, %v2300
        %v2488 = vadd.f32 %v578, %v1627
        %v2489 = vadd.f32 %v579, %v1965
        %v2490 = vadd.f32 %v580, %v2303
        %v2491 = vadd.f32 %v581, %v1629
        %v2492 = vadd.f32 %v582, %v1967
        %v2493 = vadd.f32 %v583, %v2305
        %v2494 = vadd.f32 %v584, %v1632
        %v2495 = vadd.f32 %v585, %v1970
        %v2496 = vadd.f32 %v586, %v2308
        %v2497 = vadd.f32 %v587, %v1634
        %v2498 = vadd.f32 %v588, %v1972
        %v2499 = vadd.f32 %v589, %v2310
        %v2500 = vadd.f32 %v590, %v1637
        %v2501 = vadd.f32 %v591, %v1975
        %v2502 = vadd.f32 %v592, %v2313
        %v2503 = vadd.f32 %v593, %v1639
        %v2504 = vadd.f32 %v594, %v1977
        %v2505 = vadd.f32 %v595, %v2315
        %v2506 = vadd.f32 %v596, %v1642
        %v2507 = vadd.f32 %v597, %v1980
        %v2508 = vadd.f32 %v598, %v2318
        %v2509 = vadd.f32 %v599, %v1644
        %v2510 = vadd.f32 %v600, %v1982
        %v2511 = vadd.f32 %v601, %v2320
        %v2512 = vadd.f32 %v602, %v1647
        %v2513 = vadd.f32 %v603, %v1985
        %v2514 = vadd.f32 %v604, %v2323
        %v2515 = vadd.f32 %v605, %v1649
        %v2516 = vadd.f32 %v606, %v1987
        %v2517 = vadd.f32 %v607, %v2325
        %v2518 = vadd.f32 %v608, %v1652
        %v2519 = vadd.f32 %v609, %v1990
        %v2520 = vadd.f32 %v610, %v2328
        %v2521 = vadd.f32 %v611, %v1654
        %v2522 = vadd.f32 %v612, %v1992
        %v2523 = vadd.f32 %v613, %v2330
        %2524 = vst [vmem:[#allocation2] sm:$0xff] %v2332
        %2525 = vst [vmem:[#allocation2 + $0x8] sm:$0xff] %v2333
        %2526 = vst [vmem:[#allocation2 + $0x10] sm:$0xff] %v2334
        %2527 = vst [vmem:[#allocation2 + $0x18] sm:$0xff] %v2335
        %2528 = vst [vmem:[#allocation2 + $0x20] sm:$0xff] %v2336
        %2529 = vst [vmem:[#allocation2 + $0x28] sm:$0xff] %v2337
        %2530 = vst [vmem:[#allocation2 + $0x30] sm:$0xff] %v2338
        %2531 = vst [vmem:[#allocation2 + $0x38] sm:$0xff] %v2339
        %2532 = vst [vmem:[#allocation2 + $0x40] sm:$0xff] %v2340
        %2533 = vst [vmem:[#allocation2 + $0x48] sm:$0xff] %v2341
        %2534 = vst [vmem:[#allocation2 + $0x50] sm:$0xff] %v2342
        %2535 = vst [vmem:[#allocation2 + $0x58] sm:$0xff] %v2343
        %2536 = vst [vmem:[#allocation2 + $0x60] sm:$0xff] %v2344
        %2537 = vst [vmem:[#allocation2 + $0x68] sm:$0xff] %v2345
        %2538 = vst [vmem:[#allocation2 + $0x70] sm:$0xff] %v2346
        %2539 = vst [vmem:[#allocation2 + $0x78] sm:$0xff] %v2347
        %2540 = vst [vmem:[#allocation2 + $0x80] sm:$0xff] %v2348
        %2541 = vst [vmem:[#allocation2 + $0x88] sm:$0xff] %v2349
        %2542 = vst [vmem:[#allocation2 + $0x90] sm:$0xff] %v2350
        %2543 = vst [vmem:[#allocation2 + $0x98] sm:$0xff] %v2351
        %2544 = vst [vmem:[#allocation2 + $0xa0] sm:$0xff] %v2352
        %2545 = vst [vmem:[#allocation2 + $0xa8] sm:$0xff] %v2353
        %2546 = vst [vmem:[#allocation2 + $0xb0] sm:$0xff] %v2354
        %2547 = vst [vmem:[#allocation2 + $0xb8] sm:$0xff] %v2355
        %2548 = vst [vmem:[#allocation2 + $0xc0] sm:$0xff] %v2356
        %2549 = vst [vmem:[#allocation2 + $0xc8] sm:$0xff] %v2357
        %2550 = vst [vmem:[#allocation2 + $0xd0] sm:$0xff] %v2358
        %2551 = vst [vmem:[#allocation2 + $0xd8] sm:$0xff] %v2359
        %2552 = vst [vmem:[#allocation2 + $0xe0] sm:$0xff] %v2360
        %2553 = vst [vmem:[#allocation2 + $0xe8] sm:$0xff] %v2361
        %2554 = vst [vmem:[#allocation2 + $0xf0] sm:$0xff] %v2362
        %2555 = vst [vmem:[#allocation2 + $0xf8] sm:$0xff] %v2363
        %2556 = vst [vmem:[#allocation2 + $0x100] sm:$0xff] %v2364
        %2557 = vst [vmem:[#allocation2 + $0x108] sm:$0xff] %v2365
        %2558 = vst [vmem:[#allocation2 + $0x110] sm:$0xff] %v2366
        %2559 = vst [vmem:[#allocation2 + $0x118] sm:$0xff] %v2367
        %2560 = vst [vmem:[#allocation2 + $0x120] sm:$0xff] %v2368
        %2561 = vst [vmem:[#allocation2 + $0x128] sm:$0xff] %v2369
        %2562 = vst [vmem:[#allocation2 + $0x130] sm:$0xff] %v2370
        %2563 = vst [vmem:[#allocation2 + $0x138] sm:$0xff] %v2371
        %2564 = vst [vmem:[#allocation2 + $0x140] sm:$0xff] %v2372
        %2565 = vst [vmem:[#allocation2 + $0x148] sm:$0xff] %v2373
        %2566 = vst [vmem:[#allocation2 + $0x150] sm:$0xff] %v2374
        %2567 = vst [vmem:[#allocation2 + $0x158] sm:$0xff] %v2375
        %2568 = vst [vmem:[#allocation2 + $0x160] sm:$0xff] %v2376
        %2569 = vst [vmem:[#allocation2 + $0x168] sm:$0xff] %v2377
        %2570 = vst [vmem:[#allocation2 + $0x170] sm:$0xff] %v2378
        %2571 = vst [vmem:[#allocation2 + $0x178] sm:$0xff] %v2379
        %2572 = vst [vmem:[#allocation2 + $0x180] sm:$0xff] %v2380
        %2573 = vst [vmem:[#allocation2 + $0x188] sm:$0xff] %v2381
        %2574 = vst [vmem:[#allocation2 + $0x190] sm:$0xff] %v2382
        %2575 = vst [vmem:[#allocation2 + $0x198] sm:$0xff] %v2383
        %2576 = vst [vmem:[#allocation2 + $0x1a0] sm:$0xff] %v2384
        %2577 = vst [vmem:[#allocation2 + $0x1a8] sm:$0xff] %v2385
        %2578 = vst [vmem:[#allocation2 + $0x1b0] sm:$0xff] %v2386
        %2579 = vst [vmem:[#allocation2 + $0x1b8] sm:$0xff] %v2387
        %2580 = vst [vmem:[#allocation2 + $0x1c0] sm:$0xff] %v2388
        %2581 = vst [vmem:[#allocation2 + $0x1c8] sm:$0xff] %v2389
        %2582 = vst [vmem:[#allocation2 + $0x1d0] sm:$0xff] %v2390
        %2583 = vst [vmem:[#allocation2 + $0x1d8] sm:$0xff] %v2391
        %2584 = vst [vmem:[#allocation2 + $0x1e0] sm:$0xff] %v2392
        %2585 = vst [vmem:[#allocation2 + $0x1e8] sm:$0xff] %v2393
        %2586 = vst [vmem:[#allocation2 + $0x1f0] sm:$0xff] %v2394
        %2587 = vst [vmem:[#allocation2 + $0x1f8] sm:$0xff] %v2395
        %2588 = vst [vmem:[#allocation2 + $0x200] sm:$0xff] %v2396
        %2589 = vst [vmem:[#allocation2 + $0x208] sm:$0xff] %v2397
        %2590 = vst [vmem:[#allocation2 + $0x210] sm:$0xff] %v2398
        %2591 = vst [vmem:[#allocation2 + $0x218] sm:$0xff] %v2399
        %2592 = vst [vmem:[#allocation2 + $0x220] sm:$0xff] %v2400
        %2593 = vst [vmem:[#allocation2 + $0x228] sm:$0xff] %v2401
        %2594 = vst [vmem:[#allocation2 + $0x230] sm:$0xff] %v2402
        %2595 = vst [vmem:[#allocation2 + $0x238] sm:$0xff] %v2403
        %2596 = vst [vmem:[#allocation2 + $0x240] sm:$0xff] %v2404
        %2597 = vst [vmem:[#allocation2 + $0x248] sm:$0xff] %v2405
        %2598 = vst [vmem:[#allocation2 + $0x250] sm:$0xff] %v2406
        %2599 = vst [vmem:[#allocation2 + $0x258] sm:$0xff] %v2407
        %2600 = vst [vmem:[#allocation2 + $0x260] sm:$0xff] %v2408
        %2601 = vst [vmem:[#allocation2 + $0x268] sm:$0xff] %v2409
        %2602 = vst [vmem:[#allocation2 + $0x270] sm:$0xff] %v2410
        %2603 = vst [vmem:[#allocation2 + $0x278] sm:$0xff] %v2411
        %2604 = vst [vmem:[#allocation2 + $0x280] sm:$0xff] %v2412
        %2605 = vst [vmem:[#allocation2 + $0x288] sm:$0xff] %v2413
        %2606 = vst [vmem:[#allocation2 + $0x290] sm:$0xff] %v2414
        %2607 = vst [vmem:[#allocation2 + $0x298] sm:$0xff] %v2415
        %2608 = vst [vmem:[#allocation2 + $0x2a0] sm:$0xff] %v2416
        %2609 = vst [vmem:[#allocation2 + $0x2a8] sm:$0xff] %v2417
        %2610 = vst [vmem:[#allocation2 + $0x2b0] sm:$0xff] %v2418
        %2611 = vst [vmem:[#allocation2 + $0x2b8] sm:$0xff] %v2419
        %2612 = vst [vmem:[#allocation2 + $0x2c0] sm:$0xff] %v2420
        %2613 = vst [vmem:[#allocation2 + $0x2c8] sm:$0xff] %v2421
        %2614 = vst [vmem:[#allocation2 + $0x2d0] sm:$0xff] %v2422
        %2615 = vst [vmem:[#allocation2 + $0x2d8] sm:$0xff] %v2423
        %2616 = vst [vmem:[#allocation2 + $0x2e0] sm:$0xff] %v2424
        %2617 = vst [vmem:[#allocation2 + $0x2e8] sm:$0xff] %v2425
        %2618 = vst [vmem:[#allocation2 + $0x2f0] sm:$0xff] %v2426
        %2619 = vst [vmem:[#allocation2 + $0x2f8] sm:$0xff] %v2427
        %2620 = vst [vmem:[#allocation2 + $0x300] sm:$0xff] %v2428
        %2621 = vst [vmem:[#allocation2 + $0x308] sm:$0xff] %v2429
        %2622 = vst [vmem:[#allocation2 + $0x310] sm:$0xff] %v2430
        %2623 = vst [vmem:[#allocation2 + $0x318] sm:$0xff] %v2431
        %2624 = vst [vmem:[#allocation2 + $0x320] sm:$0xff] %v2432
        %2625 = vst [vmem:[#allocation2 + $0x328] sm:$0xff] %v2433
        %2626 = vst [vmem:[#allocation2 + $0x330] sm:$0xff] %v2434
        %2627 = vst [vmem:[#allocation2 + $0x338] sm:$0xff] %v2435
        %2628 = vst [vmem:[#allocation2 + $0x340] sm:$0xff] %v2436
        %2629 = vst [vmem:[#allocation2 + $0x348] sm:$0xff] %v2437
        %2630 = vst [vmem:[#allocation2 + $0x350] sm:$0xff] %v2438
        %2631 = vst [vmem:[#allocation2 + $0x358] sm:$0xff] %v2439
        %2632 = vst [vmem:[#allocation2 + $0x360] sm:$0xff] %v2440
        %2633 = vst [vmem:[#allocation2 + $0x368] sm:$0xff] %v2441
        %2634 = vst [vmem:[#allocation2 + $0x370] sm:$0xff] %v2442
        %2635 = vst [vmem:[#allocation2 + $0x378] sm:$0xff] %v2443
        %2636 = vst [vmem:[#allocation2 + $0x380] sm:$0xff] %v2444
        %2637 = vst [vmem:[#allocation2 + $0x388] sm:$0xff] %v2445
        %2638 = vst [vmem:[#allocation2 + $0x390] sm:$0xff] %v2446
        %2639 = vst [vmem:[#allocation2 + $0x398] sm:$0xff] %v2447
        %2640 = vst [vmem:[#allocation2 + $0x3a0] sm:$0xff] %v2448
        %2641 = vst [vmem:[#allocation2 + $0x3a8] sm:$0xff] %v2449
        %2642 = vst [vmem:[#allocation2 + $0x3b0] sm:$0xff] %v2450
        %2643 = vst [vmem:[#allocation2 + $0x3b8] sm:$0xff] %v2451
        %2644 = vst [vmem:[#allocation2 + $0x3c0] sm:$0xff] %v2452
        %2645 = vst [vmem:[#allocation2 + $0x3c8] sm:$0xff] %v2453
        %2646 = vst [vmem:[#allocation2 + $0x3d0] sm:$0xff] %v2454
        %2647 = vst [vmem:[#allocation2 + $0x3d8] sm:$0xff] %v2455
        %2648 = vst [vmem:[#allocation2 + $0x3e0] sm:$0xff] %v2456
        %2649 = vst [vmem:[#allocation2 + $0x3e8] sm:$0xff] %v2457
        %2650 = vst [vmem:[#allocation2 + $0x3f0] sm:$0xff] %v2458
        %2651 = vst [vmem:[#allocation2 + $0x3f8] sm:$0xff] %v2459
        %2652 = vst [vmem:[#allocation2 + $0x400] sm:$0xff] %v2460
        %2653 = vst [vmem:[#allocation2 + $0x408] sm:$0xff] %v2461
        %2654 = vst [vmem:[#allocation2 + $0x410] sm:$0xff] %v2462
        %2655 = vst [vmem:[#allocation2 + $0x418] sm:$0xff] %v2463
        %2656 = vst [vmem:[#allocation2 + $0x420] sm:$0xff] %v2464
        %2657 = vst [vmem:[#allocation2 + $0x428] sm:$0xff] %v2465
        %2658 = vst [vmem:[#allocation2 + $0x430] sm:$0xff] %v2466
        %2659 = vst [vmem:[#allocation2 + $0x438] sm:$0xff] %v2467
        %2660 = vst [vmem:[#allocation2 + $0x440] sm:$0xff] %v2468
        %2661 = vst [vmem:[#allocation2 + $0x448] sm:$0xff] %v2469
        %2662 = vst [vmem:[#allocation2 + $0x450] sm:$0xff] %v2470
        %2663 = vst [vmem:[#allocation2 + $0x458] sm:$0xff] %v2471
        %2664 = vst [vmem:[#allocation2 + $0x460] sm:$0xff] %v2472
        %2665 = vst [vmem:[#allocation2 + $0x468] sm:$0xff] %v2473
        %2666 = vst [vmem:[#allocation2 + $0x470] sm:$0xff] %v2474
        %2667 = vst [vmem:[#allocation2 + $0x478] sm:$0xff] %v2475
        %2668 = vst [vmem:[#allocation2 + $0x480] sm:$0xff] %v2476
        %2669 = vst [vmem:[#allocation2 + $0x488] sm:$0xff] %v2477
        %2670 = vst [vmem:[#allocation2 + $0x490] sm:$0xff] %v2478
        %2671 = vst [vmem:[#allocation2 + $0x498] sm:$0xff] %v2479
        %2672 = vst [vmem:[#allocation2 + $0x4a0] sm:$0xff] %v2480
        %2673 = vst [vmem:[#allocation2 + $0x4a8] sm:$0xff] %v2481
        %2674 = vst [vmem:[#allocation2 + $0x4b0] sm:$0xff] %v2482
        %2675 = vst [vmem:[#allocation2 + $0x4b8] sm:$0xff] %v2483
        %2676 = vst [vmem:[#allocation2 + $0x4c0] sm:$0xff] %v2484
        %2677 = vst [vmem:[#allocation2 + $0x4c8] sm:$0xff] %v2485
        %2678 = vst [vmem:[#allocation2 + $0x4d0] sm:$0xff] %v2486
        %2679 = vst [vmem:[#allocation2 + $0x4d8] sm:$0xff] %v2487
        %2680 = vst [vmem:[#allocation2 + $0x4e0] sm:$0xff] %v2488
        %2681 = vst [vmem:[#allocation2 + $0x4e8] sm:$0xff] %v2489
        %2682 = vst [vmem:[#allocation2 + $0x4f0] sm:$0xff] %v2490
        %2683 = vst [vmem:[#allocation2 + $0x4f8] sm:$0xff] %v2491
        %2684 = vst [vmem:[#allocation2 + $0x500] sm:$0xff] %v2492
        %2685 = vst [vmem:[#allocation2 + $0x508] sm:$0xff] %v2493
        %2686 = vst [vmem:[#allocation2 + $0x510] sm:$0xff] %v2494
        %2687 = vst [vmem:[#allocation2 + $0x518] sm:$0xff] %v2495
        %2688 = vst [vmem:[#allocation2 + $0x520] sm:$0xff] %v2496
        %2689 = vst [vmem:[#allocation2 + $0x528] sm:$0xff] %v2497
        %2690 = vst [vmem:[#allocation2 + $0x530] sm:$0xff] %v2498
        %2691 = vst [vmem:[#allocation2 + $0x538] sm:$0xff] %v2499
        %2692 = vst [vmem:[#allocation2 + $0x540] sm:$0xff] %v2500
        %2693 = vst [vmem:[#allocation2 + $0x548] sm:$0xff] %v2501
        %2694 = vst [vmem:[#allocation2 + $0x550] sm:$0xff] %v2502
        %2695 = vst [vmem:[#allocation2 + $0x558] sm:$0xff] %v2503
        %2696 = vst [vmem:[#allocation2 + $0x560] sm:$0xff] %v2504
        %2697 = vst [vmem:[#allocation2 + $0x568] sm:$0xff] %v2505
        %2698 = vst [vmem:[#allocation2 + $0x570] sm:$0xff] %v2506
        %2699 = vst [vmem:[#allocation2 + $0x578] sm:$0xff] %v2507
        %2700 = vst [vmem:[#allocation2 + $0x580] sm:$0xff] %v2508
        %2701 = vst [vmem:[#allocation2 + $0x588] sm:$0xff] %v2509
        %2702 = vst [vmem:[#allocation2 + $0x590] sm:$0xff] %v2510
        %2703 = vst [vmem:[#allocation2 + $0x598] sm:$0xff] %v2511
        %2704 = vst [vmem:[#allocation2 + $0x5a0] sm:$0xff] %v2512
        %2705 = vst [vmem:[#allocation2 + $0x5a8] sm:$0xff] %v2513
        %2706 = vst [vmem:[#allocation2 + $0x5b0] sm:$0xff] %v2514
        %2707 = vst [vmem:[#allocation2 + $0x5b8] sm:$0xff] %v2515
        %2708 = vst [vmem:[#allocation2 + $0x5c0] sm:$0xff] %v2516
        %2709 = vst [vmem:[#allocation2 + $0x5c8] sm:$0xff] %v2517
        %2710 = vst [vmem:[#allocation2 + $0x5d0] sm:$0xff] %v2518
        %2711 = vst [vmem:[#allocation2 + $0x5d8] sm:$0xff] %v2519
        %2712 = vst [vmem:[#allocation2 + $0x5e0] sm:$0xff] %v2520
        %2713 = vst [vmem:[#allocation2 + $0x5e8] sm:$0xff] %v2521
        %2714 = vst [vmem:[#allocation2 + $0x5f0] sm:$0xff] %v2522
        %2715 = vst [vmem:[#allocation2 + $0x5f8] sm:$0xff] %v2523
        // Predicated region
        $region41: #{tpu_custom_call.1} parent=27 // pred_check
          %p2716 = pneg %p226
        $region42: #{tpu_custom_call.1} parent=27 // pred_check_branch
          %2718 = sbr.rel (%p2716) target = $region44
        $region43: #{tpu_custom_call.1} parent=27 // pred_region
          %v2719 = vld [vmem:[#allocation2] sm:$0xff]
          %v2720 = vld [vmem:[#allocation2 + $0x8] sm:$0xff]
          %v2721 = vld [vmem:[#allocation2 + $0x10] sm:$0xff]
          %v2722 = vld [vmem:[#allocation2 + $0x18] sm:$0xff]
          %v2723 = vld [vmem:[#allocation2 + $0x20] sm:$0xff]
          %v2724 = vld [vmem:[#allocation2 + $0x28] sm:$0xff]
          %v2725 = vld [vmem:[#allocation2 + $0x30] sm:$0xff]
          %v2726 = vld [vmem:[#allocation2 + $0x38] sm:$0xff]
          %v2727 = vld [vmem:[#allocation2 + $0x40] sm:$0xff]
          %v2728 = vld [vmem:[#allocation2 + $0x48] sm:$0xff]
          %v2729 = vld [vmem:[#allocation2 + $0x50] sm:$0xff]
          %v2730 = vld [vmem:[#allocation2 + $0x58] sm:$0xff]
          %v2731 = vld [vmem:[#allocation2 + $0x60] sm:$0xff]
          %v2732 = vld [vmem:[#allocation2 + $0x68] sm:$0xff]
          %v2733 = vld [vmem:[#allocation2 + $0x70] sm:$0xff]
          %v2734 = vld [vmem:[#allocation2 + $0x78] sm:$0xff]
          %v2735 = vld [vmem:[#allocation2 + $0x80] sm:$0xff]
          %v2736 = vld [vmem:[#allocation2 + $0x88] sm:$0xff]
          %v2737 = vld [vmem:[#allocation2 + $0x90] sm:$0xff]
          %v2738 = vld [vmem:[#allocation2 + $0x98] sm:$0xff]
          %v2739 = vld [vmem:[#allocation2 + $0xa0] sm:$0xff]
          %v2740 = vld [vmem:[#allocation2 + $0xa8] sm:$0xff]
          %v2741 = vld [vmem:[#allocation2 + $0xb0] sm:$0xff]
          %v2742 = vld [vmem:[#allocation2 + $0xb8] sm:$0xff]
          %v2743 = vld [vmem:[#allocation2 + $0xc0] sm:$0xff]
          %v2744 = vld [vmem:[#allocation2 + $0xc8] sm:$0xff]
          %v2745 = vld [vmem:[#allocation2 + $0xd0] sm:$0xff]
          %v2746 = vld [vmem:[#allocation2 + $0xd8] sm:$0xff]
          %v2747 = vld [vmem:[#allocation2 + $0xe0] sm:$0xff]
          %v2748 = vld [vmem:[#allocation2 + $0xe8] sm:$0xff]
          %v2749 = vld [vmem:[#allocation2 + $0xf0] sm:$0xff]
          %v2750 = vld [vmem:[#allocation2 + $0xf8] sm:$0xff]
          %v2751 = vld [vmem:[#allocation2 + $0x100] sm:$0xff]
          %v2752 = vld [vmem:[#allocation2 + $0x108] sm:$0xff]
          %v2753 = vld [vmem:[#allocation2 + $0x110] sm:$0xff]
          %v2754 = vld [vmem:[#allocation2 + $0x118] sm:$0xff]
          %v2755 = vld [vmem:[#allocation2 + $0x120] sm:$0xff]
          %v2756 = vld [vmem:[#allocation2 + $0x128] sm:$0xff]
          %v2757 = vld [vmem:[#allocation2 + $0x130] sm:$0xff]
          %v2758 = vld [vmem:[#allocation2 + $0x138] sm:$0xff]
          %v2759 = vld [vmem:[#allocation2 + $0x140] sm:$0xff]
          %v2760 = vld [vmem:[#allocation2 + $0x148] sm:$0xff]
          %v2761 = vld [vmem:[#allocation2 + $0x150] sm:$0xff]
          %v2762 = vld [vmem:[#allocation2 + $0x158] sm:$0xff]
          %v2763 = vld [vmem:[#allocation2 + $0x160] sm:$0xff]
          %v2764 = vld [vmem:[#allocation2 + $0x168] sm:$0xff]
          %v2765 = vld [vmem:[#allocation2 + $0x170] sm:$0xff]
          %v2766 = vld [vmem:[#allocation2 + $0x178] sm:$0xff]
          %v2767 = vld [vmem:[#allocation2 + $0x180] sm:$0xff]
          %v2768 = vld [vmem:[#allocation2 + $0x188] sm:$0xff]
          %v2769 = vld [vmem:[#allocation2 + $0x190] sm:$0xff]
          %v2770 = vld [vmem:[#allocation2 + $0x198] sm:$0xff]
          %v2771 = vld [vmem:[#allocation2 + $0x1a0] sm:$0xff]
          %v2772 = vld [vmem:[#allocation2 + $0x1a8] sm:$0xff]
          %v2773 = vld [vmem:[#allocation2 + $0x1b0] sm:$0xff]
          %v2774 = vld [vmem:[#allocation2 + $0x1b8] sm:$0xff]
          %v2775 = vld [vmem:[#allocation2 + $0x1c0] sm:$0xff]
          %v2776 = vld [vmem:[#allocation2 + $0x1c8] sm:$0xff]
          %v2777 = vld [vmem:[#allocation2 + $0x1d0] sm:$0xff]
          %v2778 = vld [vmem:[#allocation2 + $0x1d8] sm:$0xff]
          %v2779 = vld [vmem:[#allocation2 + $0x1e0] sm:$0xff]
          %v2780 = vld [vmem:[#allocation2 + $0x1e8] sm:$0xff]
          %v2781 = vld [vmem:[#allocation2 + $0x1f0] sm:$0xff]
          %v2782 = vld [vmem:[#allocation2 + $0x1f8] sm:$0xff]
          %v2783 = vld [vmem:[#allocation2 + $0x200] sm:$0xff]
          %v2784 = vld [vmem:[#allocation2 + $0x208] sm:$0xff]
          %v2785 = vld [vmem:[#allocation2 + $0x210] sm:$0xff]
          %v2786 = vld [vmem:[#allocation2 + $0x218] sm:$0xff]
          %v2787 = vld [vmem:[#allocation2 + $0x220] sm:$0xff]
          %v2788 = vld [vmem:[#allocation2 + $0x228] sm:$0xff]
          %v2789 = vld [vmem:[#allocation2 + $0x230] sm:$0xff]
          %v2790 = vld [vmem:[#allocation2 + $0x238] sm:$0xff]
          %v2791 = vld [vmem:[#allocation2 + $0x240] sm:$0xff]
          %v2792 = vld [vmem:[#allocation2 + $0x248] sm:$0xff]
          %v2793 = vld [vmem:[#allocation2 + $0x250] sm:$0xff]
          %v2794 = vld [vmem:[#allocation2 + $0x258] sm:$0xff]
          %v2795 = vld [vmem:[#allocation2 + $0x260] sm:$0xff]
          %v2796 = vld [vmem:[#allocation2 + $0x268] sm:$0xff]
          %v2797 = vld [vmem:[#allocation2 + $0x270] sm:$0xff]
          %v2798 = vld [vmem:[#allocation2 + $0x278] sm:$0xff]
          %v2799 = vld [vmem:[#allocation2 + $0x280] sm:$0xff]
          %v2800 = vld [vmem:[#allocation2 + $0x288] sm:$0xff]
          %v2801 = vld [vmem:[#allocation2 + $0x290] sm:$0xff]
          %v2802 = vld [vmem:[#allocation2 + $0x298] sm:$0xff]
          %v2803 = vld [vmem:[#allocation2 + $0x2a0] sm:$0xff]
          %v2804 = vld [vmem:[#allocation2 + $0x2a8] sm:$0xff]
          %v2805 = vld [vmem:[#allocation2 + $0x2b0] sm:$0xff]
          %v2806 = vld [vmem:[#allocation2 + $0x2b8] sm:$0xff]
          %v2807 = vld [vmem:[#allocation2 + $0x2c0] sm:$0xff]
          %v2808 = vld [vmem:[#allocation2 + $0x2c8] sm:$0xff]
          %v2809 = vld [vmem:[#allocation2 + $0x2d0] sm:$0xff]
          %v2810 = vld [vmem:[#allocation2 + $0x2d8] sm:$0xff]
          %v2811 = vld [vmem:[#allocation2 + $0x2e0] sm:$0xff]
          %v2812 = vld [vmem:[#allocation2 + $0x2e8] sm:$0xff]
          %v2813 = vld [vmem:[#allocation2 + $0x2f0] sm:$0xff]
          %v2814 = vld [vmem:[#allocation2 + $0x2f8] sm:$0xff]
          %v2815 = vld [vmem:[#allocation2 + $0x300] sm:$0xff]
          %v2816 = vld [vmem:[#allocation2 + $0x308] sm:$0xff]
          %v2817 = vld [vmem:[#allocation2 + $0x310] sm:$0xff]
          %v2818 = vld [vmem:[#allocation2 + $0x318] sm:$0xff]
          %v2819 = vld [vmem:[#allocation2 + $0x320] sm:$0xff]
          %v2820 = vld [vmem:[#allocation2 + $0x328] sm:$0xff]
          %v2821 = vld [vmem:[#allocation2 + $0x330] sm:$0xff]
          %v2822 = vld [vmem:[#allocation2 + $0x338] sm:$0xff]
          %v2823 = vld [vmem:[#allocation2 + $0x340] sm:$0xff]
          %v2824 = vld [vmem:[#allocation2 + $0x348] sm:$0xff]
          %v2825 = vld [vmem:[#allocation2 + $0x350] sm:$0xff]
          %v2826 = vld [vmem:[#allocation2 + $0x358] sm:$0xff]
          %v2827 = vld [vmem:[#allocation2 + $0x360] sm:$0xff]
          %v2828 = vld [vmem:[#allocation2 + $0x368] sm:$0xff]
          %v2829 = vld [vmem:[#allocation2 + $0x370] sm:$0xff]
          %v2830 = vld [vmem:[#allocation2 + $0x378] sm:$0xff]
          %v2831 = vld [vmem:[#allocation2 + $0x380] sm:$0xff]
          %v2832 = vld [vmem:[#allocation2 + $0x388] sm:$0xff]
          %v2833 = vld [vmem:[#allocation2 + $0x390] sm:$0xff]
          %v2834 = vld [vmem:[#allocation2 + $0x398] sm:$0xff]
          %v2835 = vld [vmem:[#allocation2 + $0x3a0] sm:$0xff]
          %v2836 = vld [vmem:[#allocation2 + $0x3a8] sm:$0xff]
          %v2837 = vld [vmem:[#allocation2 + $0x3b0] sm:$0xff]
          %v2838 = vld [vmem:[#allocation2 + $0x3b8] sm:$0xff]
          %v2839 = vld [vmem:[#allocation2 + $0x3c0] sm:$0xff]
          %v2840 = vld [vmem:[#allocation2 + $0x3c8] sm:$0xff]
          %v2841 = vld [vmem:[#allocation2 + $0x3d0] sm:$0xff]
          %v2842 = vld [vmem:[#allocation2 + $0x3d8] sm:$0xff]
          %v2843 = vld [vmem:[#allocation2 + $0x3e0] sm:$0xff]
          %v2844 = vld [vmem:[#allocation2 + $0x3e8] sm:$0xff]
          %v2845 = vld [vmem:[#allocation2 + $0x3f0] sm:$0xff]
          %v2846 = vld [vmem:[#allocation2 + $0x3f8] sm:$0xff]
          %v2847 = vld [vmem:[#allocation2 + $0x400] sm:$0xff]
          %v2848 = vld [vmem:[#allocation2 + $0x408] sm:$0xff]
          %v2849 = vld [vmem:[#allocation2 + $0x410] sm:$0xff]
          %v2850 = vld [vmem:[#allocation2 + $0x418] sm:$0xff]
          %v2851 = vld [vmem:[#allocation2 + $0x420] sm:$0xff]
          %v2852 = vld [vmem:[#allocation2 + $0x428] sm:$0xff]
          %v2853 = vld [vmem:[#allocation2 + $0x430] sm:$0xff]
          %v2854 = vld [vmem:[#allocation2 + $0x438] sm:$0xff]
          %v2855 = vld [vmem:[#allocation2 + $0x440] sm:$0xff]
          %v2856 = vld [vmem:[#allocation2 + $0x448] sm:$0xff]
          %v2857 = vld [vmem:[#allocation2 + $0x450] sm:$0xff]
          %v2858 = vld [vmem:[#allocation2 + $0x458] sm:$0xff]
          %v2859 = vld [vmem:[#allocation2 + $0x460] sm:$0xff]
          %v2860 = vld [vmem:[#allocation2 + $0x468] sm:$0xff]
          %v2861 = vld [vmem:[#allocation2 + $0x470] sm:$0xff]
          %v2862 = vld [vmem:[#allocation2 + $0x478] sm:$0xff]
          %v2863 = vld [vmem:[#allocation2 + $0x480] sm:$0xff]
          %v2864 = vld [vmem:[#allocation2 + $0x488] sm:$0xff]
          %v2865 = vld [vmem:[#allocation2 + $0x490] sm:$0xff]
          %v2866 = vld [vmem:[#allocation2 + $0x498] sm:$0xff]
          %v2867 = vld [vmem:[#allocation2 + $0x4a0] sm:$0xff]
          %v2868 = vld [vmem:[#allocation2 + $0x4a8] sm:$0xff]
          %v2869 = vld [vmem:[#allocation2 + $0x4b0] sm:$0xff]
          %v2870 = vld [vmem:[#allocation2 + $0x4b8] sm:$0xff]
          %v2871 = vld [vmem:[#allocation2 + $0x4c0] sm:$0xff]
          %v2872 = vld [vmem:[#allocation2 + $0x4c8] sm:$0xff]
          %v2873 = vld [vmem:[#allocation2 + $0x4d0] sm:$0xff]
          %v2874 = vld [vmem:[#allocation2 + $0x4d8] sm:$0xff]
          %v2875 = vld [vmem:[#allocation2 + $0x4e0] sm:$0xff]
          %v2876 = vld [vmem:[#allocation2 + $0x4e8] sm:$0xff]
          %v2877 = vld [vmem:[#allocation2 + $0x4f0] sm:$0xff]
          %v2878 = vld [vmem:[#allocation2 + $0x4f8] sm:$0xff]
          %v2879 = vld [vmem:[#allocation2 + $0x500] sm:$0xff]
          %v2880 = vld [vmem:[#allocation2 + $0x508] sm:$0xff]
          %v2881 = vld [vmem:[#allocation2 + $0x510] sm:$0xff]
          %v2882 = vld [vmem:[#allocation2 + $0x518] sm:$0xff]
          %v2883 = vld [vmem:[#allocation2 + $0x520] sm:$0xff]
          %v2884 = vld [vmem:[#allocation2 + $0x528] sm:$0xff]
          %v2885 = vld [vmem:[#allocation2 + $0x530] sm:$0xff]
          %v2886 = vld [vmem:[#allocation2 + $0x538] sm:$0xff]
          %v2887 = vld [vmem:[#allocation2 + $0x540] sm:$0xff]
          %v2888 = vld [vmem:[#allocation2 + $0x548] sm:$0xff]
          %v2889 = vld [vmem:[#allocation2 + $0x550] sm:$0xff]
          %v2890 = vld [vmem:[#allocation2 + $0x558] sm:$0xff]
          %v2891 = vld [vmem:[#allocation2 + $0x560] sm:$0xff]
          %v2892 = vld [vmem:[#allocation2 + $0x568] sm:$0xff]
          %v2893 = vld [vmem:[#allocation2 + $0x570] sm:$0xff]
          %v2894 = vld [vmem:[#allocation2 + $0x578] sm:$0xff]
          %v2895 = vld [vmem:[#allocation2 + $0x580] sm:$0xff]
          %v2896 = vld [vmem:[#allocation2 + $0x588] sm:$0xff]
          %v2897 = vld [vmem:[#allocation2 + $0x590] sm:$0xff]
          %v2898 = vld [vmem:[#allocation2 + $0x598] sm:$0xff]
          %v2899 = vld [vmem:[#allocation2 + $0x5a0] sm:$0xff]
          %v2900 = vld [vmem:[#allocation2 + $0x5a8] sm:$0xff]
          %v2901 = vld [vmem:[#allocation2 + $0x5b0] sm:$0xff]
          %v2902 = vld [vmem:[#allocation2 + $0x5b8] sm:$0xff]
          %v2903 = vld [vmem:[#allocation2 + $0x5c0] sm:$0xff]
          %v2904 = vld [vmem:[#allocation2 + $0x5c8] sm:$0xff]
          %v2905 = vld [vmem:[#allocation2 + $0x5d0] sm:$0xff]
          %v2906 = vld [vmem:[#allocation2 + $0x5d8] sm:$0xff]
          %v2907 = vld [vmem:[#allocation2 + $0x5e0] sm:$0xff]
          %v2908 = vld [vmem:[#allocation2 + $0x5e8] sm:$0xff]
          %v2909 = vld [vmem:[#allocation2 + $0x5f0] sm:$0xff]
          %v2910 = vld [vmem:[#allocation2 + $0x5f8] sm:$0xff]
          %v2911 = vpack.c.bf16 %v2720, %v2719
          %v2912 = vpack.c.bf16 %v2721, %v2721
          %v2913 = vpack.c.bf16 %v2723, %v2722
          %v2914 = vpack.c.bf16 %v2724, %v2724
          %v2915 = vpack.c.bf16 %v2726, %v2725
          %v2916 = vpack.c.bf16 %v2727, %v2727
          %v2917 = vpack.c.bf16 %v2729, %v2728
          %v2918 = vpack.c.bf16 %v2730, %v2730
          %v2919 = vpack.c.bf16 %v2732, %v2731
          %v2920 = vpack.c.bf16 %v2733, %v2733
          %v2921 = vpack.c.bf16 %v2735, %v2734
          %v2922 = vpack.c.bf16 %v2736, %v2736
          %v2923 = vpack.c.bf16 %v2738, %v2737
          %v2924 = vpack.c.bf16 %v2739, %v2739
          %v2925 = vpack.c.bf16 %v2741, %v2740
          %v2926 = vpack.c.bf16 %v2742, %v2742
          %v2927 = vpack.c.bf16 %v2744, %v2743
          %v2928 = vpack.c.bf16 %v2745, %v2745
          %v2929 = vpack.c.bf16 %v2747, %v2746
          %v2930 = vpack.c.bf16 %v2748, %v2748
          %v2931 = vpack.c.bf16 %v2750, %v2749
          %v2932 = vpack.c.bf16 %v2751, %v2751
          %v2933 = vpack.c.bf16 %v2753, %v2752
          %v2934 = vpack.c.bf16 %v2754, %v2754
          %v2935 = vpack.c.bf16 %v2756, %v2755
          %v2936 = vpack.c.bf16 %v2757, %v2757
          %v2937 = vpack.c.bf16 %v2759, %v2758
          %v2938 = vpack.c.bf16 %v2760, %v2760
          %v2939 = vpack.c.bf16 %v2762, %v2761
          %v2940 = vpack.c.bf16 %v2763, %v2763
          %v2941 = vpack.c.bf16 %v2765, %v2764
          %v2942 = vpack.c.bf16 %v2766, %v2766
          %v2943 = vpack.c.bf16 %v2768, %v2767
          %v2944 = vpack.c.bf16 %v2769, %v2769
          %v2945 = vpack.c.bf16 %v2771, %v2770
          %v2946 = vpack.c.bf16 %v2772, %v2772
          %v2947 = vpack.c.bf16 %v2774, %v2773
          %v2948 = vpack.c.bf16 %v2775, %v2775
          %v2949 = vpack.c.bf16 %v2777, %v2776
          %v2950 = vpack.c.bf16 %v2778, %v2778
          %v2951 = vpack.c.bf16 %v2780, %v2779
          %v2952 = vpack.c.bf16 %v2781, %v2781
          %v2953 = vpack.c.bf16 %v2783, %v2782
          %v2954 = vpack.c.bf16 %v2784, %v2784
          %v2955 = vpack.c.bf16 %v2786, %v2785
          %v2956 = vpack.c.bf16 %v2787, %v2787
          %v2957 = vpack.c.bf16 %v2789, %v2788
          %v2958 = vpack.c.bf16 %v2790, %v2790
          %v2959 = vpack.c.bf16 %v2792, %v2791
          %v2960 = vpack.c.bf16 %v2793, %v2793
          %v2961 = vpack.c.bf16 %v2795, %v2794
          %v2962 = vpack.c.bf16 %v2796, %v2796
          %v2963 = vpack.c.bf16 %v2798, %v2797
          %v2964 = vpack.c.bf16 %v2799, %v2799
          %v2965 = vpack.c.bf16 %v2801, %v2800
          %v2966 = vpack.c.bf16 %v2802, %v2802
          %v2967 = vpack.c.bf16 %v2804, %v2803
          %v2968 = vpack.c.bf16 %v2805, %v2805
          %v2969 = vpack.c.bf16 %v2807, %v2806
          %v2970 = vpack.c.bf16 %v2808, %v2808
          %v2971 = vpack.c.bf16 %v2810, %v2809
          %v2972 = vpack.c.bf16 %v2811, %v2811
          %v2973 = vpack.c.bf16 %v2813, %v2812
          %v2974 = vpack.c.bf16 %v2814, %v2814
          %v2975 = vpack.c.bf16 %v2816, %v2815
          %v2976 = vpack.c.bf16 %v2817, %v2817
          %v2977 = vpack.c.bf16 %v2819, %v2818
          %v2978 = vpack.c.bf16 %v2820, %v2820
          %v2979 = vpack.c.bf16 %v2822, %v2821
          %v2980 = vpack.c.bf16 %v2823, %v2823
          %v2981 = vpack.c.bf16 %v2825, %v2824
          %v2982 = vpack.c.bf16 %v2826, %v2826
          %v2983 = vpack.c.bf16 %v2828, %v2827
          %v2984 = vpack.c.bf16 %v2829, %v2829
          %v2985 = vpack.c.bf16 %v2831, %v2830
          %v2986 = vpack.c.bf16 %v2832, %v2832
          %v2987 = vpack.c.bf16 %v2834, %v2833
          %v2988 = vpack.c.bf16 %v2835, %v2835
          %v2989 = vpack.c.bf16 %v2837, %v2836
          %v2990 = vpack.c.bf16 %v2838, %v2838
          %v2991 = vpack.c.bf16 %v2840, %v2839
          %v2992 = vpack.c.bf16 %v2841, %v2841
          %v2993 = vpack.c.bf16 %v2843, %v2842
          %v2994 = vpack.c.bf16 %v2844, %v2844
          %v2995 = vpack.c.bf16 %v2846, %v2845
          %v2996 = vpack.c.bf16 %v2847, %v2847
          %v2997 = vpack.c.bf16 %v2849, %v2848
          %v2998 = vpack.c.bf16 %v2850, %v2850
          %v2999 = vpack.c.bf16 %v2852, %v2851
          %v3000 = vpack.c.bf16 %v2853, %v2853
          %v3001 = vpack.c.bf16 %v2855, %v2854
          %v3002 = vpack.c.bf16 %v2856, %v2856
          %v3003 = vpack.c.bf16 %v2858, %v2857
          %v3004 = vpack.c.bf16 %v2859, %v2859
          %v3005 = vpack.c.bf16 %v2861, %v2860
          %v3006 = vpack.c.bf16 %v2862, %v2862
          %v3007 = vpack.c.bf16 %v2864, %v2863
          %v3008 = vpack.c.bf16 %v2865, %v2865
          %v3009 = vpack.c.bf16 %v2867, %v2866
          %v3010 = vpack.c.bf16 %v2868, %v2868
          %v3011 = vpack.c.bf16 %v2870, %v2869
          %v3012 = vpack.c.bf16 %v2871, %v2871
          %v3013 = vpack.c.bf16 %v2873, %v2872
          %v3014 = vpack.c.bf16 %v2874, %v2874
          %v3015 = vpack.c.bf16 %v2876, %v2875
          %v3016 = vpack.c.bf16 %v2877, %v2877
          %v3017 = vpack.c.bf16 %v2879, %v2878
          %v3018 = vpack.c.bf16 %v2880, %v2880
          %v3019 = vpack.c.bf16 %v2882, %v2881
          %v3020 = vpack.c.bf16 %v2883, %v2883
          %v3021 = vpack.c.bf16 %v2885, %v2884
          %v3022 = vpack.c.bf16 %v2886, %v2886
          %v3023 = vpack.c.bf16 %v2888, %v2887
          %v3024 = vpack.c.bf16 %v2889, %v2889
          %v3025 = vpack.c.bf16 %v2891, %v2890
          %v3026 = vpack.c.bf16 %v2892, %v2892
          %v3027 = vpack.c.bf16 %v2894, %v2893
          %v3028 = vpack.c.bf16 %v2895, %v2895
          %v3029 = vpack.c.bf16 %v2897, %v2896
          %v3030 = vpack.c.bf16 %v2898, %v2898
          %v3031 = vpack.c.bf16 %v2900, %v2899
          %v3032 = vpack.c.bf16 %v2901, %v2901
          %v3033 = vpack.c.bf16 %v2903, %v2902
          %v3034 = vpack.c.bf16 %v2904, %v2904
          %v3035 = vpack.c.bf16 %v2906, %v2905
          %v3036 = vpack.c.bf16 %v2907, %v2907
          %v3037 = vpack.c.bf16 %v2909, %v2908
          %v3038 = vpack.c.bf16 %v2910, %v2910
          %3039 = vst [vmem:[%s219] sm:$0xff] %v2911
          %3040 = vst [vmem:[%s219 + $0x8] sm:$0xf] %v2912
          %3041 = vst [vmem:[%s219 + $0xc] sm:$0xff] %v2913
          %3042 = vst [vmem:[%s219 + $0x14] sm:$0xf] %v2914
          %3043 = vst [vmem:[%s219 + $0x18] sm:$0xff] %v2915
          %3044 = vst [vmem:[%s219 + $0x20] sm:$0xf] %v2916
          %3045 = vst [vmem:[%s219 + $0x24] sm:$0xff] %v2917
          %3046 = vst [vmem:[%s219 + $0x2c] sm:$0xf] %v2918
          %3047 = vst [vmem:[%s219 + $0x30] sm:$0xff] %v2919
          %3048 = vst [vmem:[%s219 + $0x38] sm:$0xf] %v2920
          %3049 = vst [vmem:[%s219 + $0x3c] sm:$0xff] %v2921
          %3050 = vst [vmem:[%s219 + $0x44] sm:$0xf] %v2922
          %3051 = vst [vmem:[%s219 + $0x48] sm:$0xff] %v2923
          %3052 = vst [vmem:[%s219 + $0x50] sm:$0xf] %v2924
          %3053 = vst [vmem:[%s219 + $0x54] sm:$0xff] %v2925
          %3054 = vst [vmem:[%s219 + $0x5c] sm:$0xf] %v2926
          %3055 = vst [vmem:[%s219 + $0x60] sm:$0xff] %v2927
          %3056 = vst [vmem:[%s219 + $0x68] sm:$0xf] %v2928
          %3057 = vst [vmem:[%s219 + $0x6c] sm:$0xff] %v2929
          %3058 = vst [vmem:[%s219 + $0x74] sm:$0xf] %v2930
          %3059 = vst [vmem:[%s219 + $0x78] sm:$0xff] %v2931
          %3060 = vst [vmem:[%s219 + $0x80] sm:$0xf] %v2932
          %3061 = vst [vmem:[%s219 + $0x84] sm:$0xff] %v2933
          %3062 = vst [vmem:[%s219 + $0x8c] sm:$0xf] %v2934
          %3063 = vst [vmem:[%s219 + $0x90] sm:$0xff] %v2935
          %3064 = vst [vmem:[%s219 + $0x98] sm:$0xf] %v2936
          %3065 = vst [vmem:[%s219 + $0x9c] sm:$0xff] %v2937
          %3066 = vst [vmem:[%s219 + $0xa4] sm:$0xf] %v2938
          %3067 = vst [vmem:[%s219 + $0xa8] sm:$0xff] %v2939
          %3068 = vst [vmem:[%s219 + $0xb0] sm:$0xf] %v2940
          %3069 = vst [vmem:[%s219 + $0xb4] sm:$0xff] %v2941
          %3070 = vst [vmem:[%s219 + $0xbc] sm:$0xf] %v2942
          %3071 = vst [vmem:[%s219 + $0xc0] sm:$0xff] %v2943
          %3072 = vst [vmem:[%s219 + $0xc8] sm:$0xf] %v2944
          %3073 = vst [vmem:[%s219 + $0xcc] sm:$0xff] %v2945
          %3074 = vst [vmem:[%s219 + $0xd4] sm:$0xf] %v2946
          %3075 = vst [vmem:[%s219 + $0xd8] sm:$0xff] %v2947
          %3076 = vst [vmem:[%s219 + $0xe0] sm:$0xf] %v2948
          %3077 = vst [vmem:[%s219 + $0xe4] sm:$0xff] %v2949
          %3078 = vst [vmem:[%s219 + $0xec] sm:$0xf] %v2950
          %3079 = vst [vmem:[%s219 + $0xf0] sm:$0xff] %v2951
          %3080 = vst [vmem:[%s219 + $0xf8] sm:$0xf] %v2952
          %3081 = vst [vmem:[%s219 + $0xfc] sm:$0xff] %v2953
          %3082 = vst [vmem:[%s219 + $0x104] sm:$0xf] %v2954
          %3083 = vst [vmem:[%s219 + $0x108] sm:$0xff] %v2955
          %3084 = vst [vmem:[%s219 + $0x110] sm:$0xf] %v2956
          %3085 = vst [vmem:[%s219 + $0x114] sm:$0xff] %v2957
          %3086 = vst [vmem:[%s219 + $0x11c] sm:$0xf] %v2958
          %3087 = vst [vmem:[%s219 + $0x120] sm:$0xff] %v2959
          %3088 = vst [vmem:[%s219 + $0x128] sm:$0xf] %v2960
          %3089 = vst [vmem:[%s219 + $0x12c] sm:$0xff] %v2961
          %3090 = vst [vmem:[%s219 + $0x134] sm:$0xf] %v2962
          %3091 = vst [vmem:[%s219 + $0x138] sm:$0xff] %v2963
          %3092 = vst [vmem:[%s219 + $0x140] sm:$0xf] %v2964
          %3093 = vst [vmem:[%s219 + $0x144] sm:$0xff] %v2965
          %3094 = vst [vmem:[%s219 + $0x14c] sm:$0xf] %v2966
          %3095 = vst [vmem:[%s219 + $0x150] sm:$0xff] %v2967
          %3096 = vst [vmem:[%s219 + $0x158] sm:$0xf] %v2968
          %3097 = vst [vmem:[%s219 + $0x15c] sm:$0xff] %v2969
          %3098 = vst [vmem:[%s219 + $0x164] sm:$0xf] %v2970
          %3099 = vst [vmem:[%s219 + $0x168] sm:$0xff] %v2971
          %3100 = vst [vmem:[%s219 + $0x170] sm:$0xf] %v2972
          %3101 = vst [vmem:[%s219 + $0x174] sm:$0xff] %v2973
          %3102 = vst [vmem:[%s219 + $0x17c] sm:$0xf] %v2974
          %3103 = vst [vmem:[%s219 + $0x180] sm:$0xff] %v2975
          %3104 = vst [vmem:[%s219 + $0x188] sm:$0xf] %v2976
          %3105 = vst [vmem:[%s219 + $0x18c] sm:$0xff] %v2977
          %3106 = vst [vmem:[%s219 + $0x194] sm:$0xf] %v2978
          %3107 = vst [vmem:[%s219 + $0x198] sm:$0xff] %v2979
          %3108 = vst [vmem:[%s219 + $0x1a0] sm:$0xf] %v2980
          %3109 = vst [vmem:[%s219 + $0x1a4] sm:$0xff] %v2981
          %3110 = vst [vmem:[%s219 + $0x1ac] sm:$0xf] %v2982
          %3111 = vst [vmem:[%s219 + $0x1b0] sm:$0xff] %v2983
          %3112 = vst [vmem:[%s219 + $0x1b8] sm:$0xf] %v2984
          %3113 = vst [vmem:[%s219 + $0x1bc] sm:$0xff] %v2985
          %3114 = vst [vmem:[%s219 + $0x1c4] sm:$0xf] %v2986
          %3115 = vst [vmem:[%s219 + $0x1c8] sm:$0xff] %v2987
          %3116 = vst [vmem:[%s219 + $0x1d0] sm:$0xf] %v2988
          %3117 = vst [vmem:[%s219 + $0x1d4] sm:$0xff] %v2989
          %3118 = vst [vmem:[%s219 + $0x1dc] sm:$0xf] %v2990
          %3119 = vst [vmem:[%s219 + $0x1e0] sm:$0xff] %v2991
          %3120 = vst [vmem:[%s219 + $0x1e8] sm:$0xf] %v2992
          %3121 = vst [vmem:[%s219 + $0x1ec] sm:$0xff] %v2993
          %3122 = vst [vmem:[%s219 + $0x1f4] sm:$0xf] %v2994
          %3123 = vst [vmem:[%s219 + $0x1f8] sm:$0xff] %v2995
          %3124 = vst [vmem:[%s219 + $0x200] sm:$0xf] %v2996
          %3125 = vst [vmem:[%s219 + $0x204] sm:$0xff] %v2997
          %3126 = vst [vmem:[%s219 + $0x20c] sm:$0xf] %v2998
          %3127 = vst [vmem:[%s219 + $0x210] sm:$0xff] %v2999
          %3128 = vst [vmem:[%s219 + $0x218] sm:$0xf] %v3000
          %3129 = vst [vmem:[%s219 + $0x21c] sm:$0xff] %v3001
          %3130 = vst [vmem:[%s219 + $0x224] sm:$0xf] %v3002
          %3131 = vst [vmem:[%s219 + $0x228] sm:$0xff] %v3003
          %3132 = vst [vmem:[%s219 + $0x230] sm:$0xf] %v3004
          %3133 = vst [vmem:[%s219 + $0x234] sm:$0xff] %v3005
          %3134 = vst [vmem:[%s219 + $0x23c] sm:$0xf] %v3006
          %3135 = vst [vmem:[%s219 + $0x240] sm:$0xff] %v3007
          %3136 = vst [vmem:[%s219 + $0x248] sm:$0xf] %v3008
          %3137 = vst [vmem:[%s219 + $0x24c] sm:$0xff] %v3009
          %3138 = vst [vmem:[%s219 + $0x254] sm:$0xf] %v3010
          %3139 = vst [vmem:[%s219 + $0x258] sm:$0xff] %v3011
          %3140 = vst [vmem:[%s219 + $0x260] sm:$0xf] %v3012
          %3141 = vst [vmem:[%s219 + $0x264] sm:$0xff] %v3013
          %3142 = vst [vmem:[%s219 + $0x26c] sm:$0xf] %v3014
          %3143 = vst [vmem:[%s219 + $0x270] sm:$0xff] %v3015
          %3144 = vst [vmem:[%s219 + $0x278] sm:$0xf] %v3016
          %3145 = vst [vmem:[%s219 + $0x27c] sm:$0xff] %v3017
          %3146 = vst [vmem:[%s219 + $0x284] sm:$0xf] %v3018
          %3147 = vst [vmem:[%s219 + $0x288] sm:$0xff] %v3019
          %3148 = vst [vmem:[%s219 + $0x290] sm:$0xf] %v3020
          %3149 = vst [vmem:[%s219 + $0x294] sm:$0xff] %v3021
          %3150 = vst [vmem:[%s219 + $0x29c] sm:$0xf] %v3022
          %3151 = vst [vmem:[%s219 + $0x2a0] sm:$0xff] %v3023
          %3152 = vst [vmem:[%s219 + $0x2a8] sm:$0xf] %v3024
          %3153 = vst [vmem:[%s219 + $0x2ac] sm:$0xff] %v3025
          %3154 = vst [vmem:[%s219 + $0x2b4] sm:$0xf] %v3026
          %3155 = vst [vmem:[%s219 + $0x2b8] sm:$0xff] %v3027
          %3156 = vst [vmem:[%s219 + $0x2c0] sm:$0xf] %v3028
          %3157 = vst [vmem:[%s219 + $0x2c4] sm:$0xff] %v3029
          %3158 = vst [vmem:[%s219 + $0x2cc] sm:$0xf] %v3030
          %3159 = vst [vmem:[%s219 + $0x2d0] sm:$0xff] %v3031
          %3160 = vst [vmem:[%s219 + $0x2d8] sm:$0xf] %v3032
          %3161 = vst [vmem:[%s219 + $0x2dc] sm:$0xff] %v3033
          %3162 = vst [vmem:[%s219 + $0x2e4] sm:$0xf] %v3034
          %3163 = vst [vmem:[%s219 + $0x2e8] sm:$0xff] %v3035
          %3164 = vst [vmem:[%s219 + $0x2f0] sm:$0xf] %v3036
          %3165 = vst [vmem:[%s219 + $0x2f4] sm:$0xff] %v3037
          %3166 = vst [vmem:[%s219 + $0x2fc] sm:$0xf] %v3038
        $region44: #{tpu_custom_call.1} parent=27 // pred_fallthru
          _
        %s3167 = sand.u32 %s105, 1
        %s3168 = scalar_lea.sflag [#allocation5], %s3167
        %s3169 = sand.u32 %s105, 1
        %s3170 = smul.addr %s3169, 768
        %s3171 = scalar_lea.vmem [#allocation8], %s3170
        // Predicated region
        $region45: #{tpu_custom_call.1} parent=27 // pred_check
          %p3172 = pneg %p115
        $region46: #{tpu_custom_call.1} parent=27 // pred_check_branch
          %3174 = sbr.rel (%p3172) target = $region48
        $region47: #{tpu_custom_call.1} parent=27 // pred_region
          %s3175 = smul.u32 64, %s25
          %s3176 = smul.u32 3, %s26
          %3178 = vsyncadd %s3168, 0
          %s3179 = smul.addr %s3175, 6
          %s3180 = sadd.s32 %s3176, %s3179
          %s3181 = smul.addr %s3180, 4
          %s3182 = scalar_lea.hbm %s2, %s3181
          %s3183 = sshll.u32 %s3171, 4
          %s3184 = int_to_ptr.vmem [resolvable:$true] %s3183
          %s3185 = sshll.u32 %s3182, 4
          %s3186 = int_to_ptr.hbm [resolvable:$true] %s3185
          %3191 = dma.vmem_to_hbm [thread:$0]  %s3184, 12288, %s3186, %s3168, 192, 384, 12
        $region48: #{tpu_custom_call.1} parent=27 // pred_fallthru
          _
      $region28: #{tpu_custom_call.1} parent=5 // pred_fallthru
        _
      %p3192 = scmp.le.s32.totalorder 2, %s15
      // Predicated region
      $region49: #{tpu_custom_call.1} parent=5 // pred_check
        %p3193 = pneg %p3192
      $region50: #{tpu_custom_call.1} parent=5 // pred_check_branch
        %3195 = sbr.rel (%p3193) target = $region52
      $region51: #{tpu_custom_call.1} parent=5 // pred_region
        %s3196 = ssub.s32 %s15, 2
        // Predicated region
        $region53: #{tpu_custom_call.1} parent=51 // pred_check
          %p3197 = pneg %p121
        $region54: #{tpu_custom_call.1} parent=51 // pred_check_branch
          %3199 = sbr.rel (%p3197) target = $region56
        $region55: #{tpu_custom_call.1} parent=51 // pred_region
          %s3200 = sand.u32 %s106, 1
          %s3201 = scalar_lea.sflag [#allocation5], %s3200
          %s3202 = sand.u32 %s106, 1
          %s3203 = smul.addr %s3202, 768
          %s3204 = scalar_lea.vmem [#allocation8], %s3203
          %3206 = dma.done %s3201, 12288
        $region56: #{tpu_custom_call.1} parent=51 // pred_fallthru
          _
      $region52: #{tpu_custom_call.1} parent=5 // pred_fallthru
        _
    $region6: #{tpu_custom_call.1} parent=1 // loop_footer
      %s19 = sadd.s32 1, %s15
    $region7: #{tpu_custom_call.1} parent=1 // loop_footer_branch
      %14 = sbr.rel target = $region3
    $region8: #{tpu_custom_call.1} parent=1 // loop_exit
      _
    %3207 = vsyncpa [#allocation4], 1
    %s3208 = scalar_lea.sflag [#allocation4], 1
    %3209 = vsyncpa %s3208, 1
    %3210 = vsyncpa [#allocation7], 1
    %s3211 = scalar_lea.sflag [#allocation7], 1
    %3212 = vsyncpa %s3211, 1
    %3213 = vsyncpa [#allocation5], 1
    %s3214 = scalar_lea.sflag [#allocation5], 1
    %3215 = vsyncpa %s3214, 1

</llo_original>
